<compile_context>
chip_gen: v7x
topology: tpu7x:2x2x1
jax: 0.10.0
libtpu: 0.0.40
codegen_flags: <defaults>
</compile_context>

<pallas_src>
import jax
import jax.numpy as jnp
from jax import lax
from jax.experimental import pallas as pl
from jax.experimental.pallas import tpu as pltpu


def repvggdw_kernel(xp_ref, w_ref, b_ref, o_ref):
    """One grid step = (batch n, channel tile c, row band h).

    xp_ref : (1, H+6, W+6, CT)  zero-padded input (pad=3) for image n, tile c
    w_ref  : (7, 7, CT)         BN-folded, 3x3-merged depthwise 7x7 weights
    b_ref  : (1, CT)            merged bias (b7 + b3)
    o_ref  : (1, Hb, W, CT)     output row band
    """
    Hb = o_ref.shape[1]
    W = o_ref.shape[2]

    band = pl.program_id(2)
    h0 = pl.multiple_of(band * Hb, Hb)

    acc = None
    for dy in range(7):
        # Load the (Hb, W+6, CT) input row band once per dy; reuse it for all
        # 7 dx taps (dx shifts are cheap static slices of the loaded value).
        rows = xp_ref[:, pl.ds(h0 + dy, Hb), :, :].astype(jnp.float32)
        for dx in range(7):
            tap = rows[:, :, dx:dx + W, :] * w_ref[dy, dx, :].astype(jnp.float32)
            acc = tap if acc is None else acc + tap

    acc = acc + b_ref[0, :].astype(jnp.float32)
    # SiLU: x * sigmoid(x)
    o_ref[...] = (acc * (1.0 / (1.0 + jnp.exp(-acc)))).astype(o_ref.dtype)


def repvggdw_forward(x_nchw, w7, b7, w3, b3):
    """x_nchw: (N, C, H, W); w7: (7,7,C); w3: (3,3,C); b7,b3: (C,). Returns NCHW."""
    N, C, H, W = x_nchw.shape
    dtype = x_nchw.dtype

    # --- RepVGG re-parameterization (zero runtime cost, done on weights) ---
    w = w7.astype(jnp.float32)
    w = w.at[2:5, 2:5, :].add(w3.astype(jnp.float32))
    b = (b7 + b3).astype(jnp.float32)

    # --- lane-dense channel tiling ---
    CT = 128
    Cpad = ((C + CT - 1) // CT) * CT

    # row-band height (output written band-by-band; input block index does not
    # depend on the band axis so the padded frame stays resident across it)
    Hb = 8 if H % 8 == 0 else H

    # NCHW -> NHWC, spatial pad 3, channel pad to Cpad.
    # TODO(synk): in production keep activations in NHWC and have the producer
    # emit the halo / channel padding so these extra HBM round trips disappear.
    x_nhwc = jnp.transpose(x_nchw, (0, 2, 3, 1))
    xp = jnp.pad(x_nhwc, ((0, 0), (3, 3), (3, 3), (0, Cpad - C)))
    wp = jnp.pad(w, ((0, 0), (0, 0), (0, Cpad - C)))
    bp = jnp.pad(b, (0, Cpad - C)).reshape(1, Cpad)

    grid = (N, Cpad // CT, H // Hb)

    out_nhwc = pl.pallas_call(
        repvggdw_kernel,
        out_shape=jax.ShapeDtypeStruct((N, H, W, Cpad), dtype),
        grid_spec=pltpu.PrefetchScalarGridSpec(
            num_scalar_prefetch=0,
            grid=grid,
            in_specs=[
                pl.BlockSpec((1, H + 6, W + 6, CT), lambda n, c, h: (n, 0, 0, c)),
                pl.BlockSpec((7, 7, CT), lambda n, c, h: (0, 0, c)),
                pl.BlockSpec((1, CT), lambda n, c, h: (0, c)),
            ],
            out_specs=pl.BlockSpec((1, Hb, W, CT), lambda n, c, h: (n, h, 0, c)),
        ),
        compiler_params=pltpu.CompilerParams(
            dimension_semantics=("parallel", "parallel", "arbitrary"),
            vmem_limit_bytes=48 * 1024 * 1024,
        ),
    )(xp, wp, bp)

    out_nhwc = out_nhwc[..., :C]
    return jnp.transpose(out_nhwc, (0, 3, 1, 2)).astype(dtype)


def _fold_bn(w_oihw, gamma, beta, mean, var, eps=1e-3):
    """Fold BatchNorm2d (eval mode) into a depthwise conv: returns (w_eff, b_eff)."""
    scale = gamma / jnp.sqrt(var + eps)
    w_eff = w_oihw * scale[:, None, None, None]
    b_eff = beta - mean * scale
    return w_eff, b_eff


def _reference_nchw(x, w7_oihw, b7, w3_oihw, b3):
    """Pure-JAX reference (two grouped convs + SiLU) for a correctness check."""
    C = x.shape[1]
    dn = ("NCHW", "OIHW", "NCHW")
    y7 = lax.conv_general_dilated(
        x, w7_oihw, window_strides=(1, 1), padding=((3, 3), (3, 3)),
        dimension_numbers=dn, feature_group_count=C)
    y3 = lax.conv_general_dilated(
        x, w3_oihw, window_strides=(1, 1), padding=((1, 1), (1, 1)),
        dimension_numbers=dn, feature_group_count=C)
    y = y7 + b7[None, :, None, None] + y3 + b3[None, :, None, None]
    return jax.nn.silu(y)


if __name__ == "__main__":
    N, C, H, W = 2, 4, 16, 16
    key = jax.random.PRNGKey(0)
    ks = jax.random.split(key, 11)

    # input (NCHW, like PyTorch)
    x = jax.random.normal(ks[0], (N, C, H, W), dtype=jnp.float32)

    # Conv(ed, ed, 7, 1, 3, g=ed) -> depthwise weight (C, 1, 7, 7), no bias, + BN
    w7_oihw = jax.random.normal(ks[1], (C, 1, 7, 7), dtype=jnp.float32) * 0.1
    g7 = 1.0 + 0.1 * jax.random.normal(ks[2], (C,), dtype=jnp.float32)
    bta7 = 0.1 * jax.random.normal(ks[3], (C,), dtype=jnp.float32)
    mu7 = 0.1 * jax.random.normal(ks[4], (C,), dtype=jnp.float32)
    var7 = jnp.abs(jax.random.normal(ks[5], (C,), dtype=jnp.float32)) + 0.5

    # Conv(ed, ed, 3, 1, 1, g=ed) -> depthwise weight (C, 1, 3, 3), no bias, + BN
    w3_oihw = jax.random.normal(ks[6], (C, 1, 3, 3), dtype=jnp.float32) * 0.1
    g3 = 1.0 + 0.1 * jax.random.normal(ks[7], (C,), dtype=jnp.float32)
    bta3 = 0.1 * jax.random.normal(ks[8], (C,), dtype=jnp.float32)
    mu3 = 0.1 * jax.random.normal(ks[9], (C,), dtype=jnp.float32)
    var3 = jnp.abs(jax.random.normal(ks[10], (C,), dtype=jnp.float32)) + 0.5

    # fold BN (inference-mode running stats) into effective conv weight + bias
    w7_eff, b7_eff = _fold_bn(w7_oihw, g7, bta7, mu7, var7)
    w3_eff, b3_eff = _fold_bn(w3_oihw, g3, bta3, mu3, var3)

    # kernel-layout weights: (kh, kw, C)
    w7_khwc = jnp.transpose(w7_eff[:, 0, :, :], (1, 2, 0))
    w3_khwc = jnp.transpose(w3_eff[:, 0, :, :], (1, 2, 0))

    fwd = jax.jit(repvggdw_forward)
    out = fwd(x, w7_khwc, b7_eff, w3_khwc, b3_eff)
    out = jax.block_until_ready(out)

    ref = _reference_nchw(x, w7_eff, b7_eff, w3_eff, b3_eff)
    assert out.shape == (N, C, H, W)
    assert jnp.allclose(out, ref, atol=1e-5, rtol=1e-5)

    print("KERNEL_OK")
</pallas_src>

<mosaic_0001>
module attributes {stable_mosaic.version = 11 : i64} {
  func.func @repvggdw_kernel(%arg0: i32, %arg1: i32, %arg2: i32, %arg3: memref<1x22x22x128xf32, #tpu.memory_space<vmem>>, %arg4: memref<7x7x128xf32, #tpu.memory_space<vmem>>, %arg5: memref<1x128xf32, #tpu.memory_space<vmem>>, %arg6: memref<1x8x16x128xf32, #tpu.memory_space<vmem>>) attributes {dimension_semantics = [#tpu.dimension_semantics<parallel>, #tpu.dimension_semantics<parallel>, #tpu.dimension_semantics<arbitrary>], iteration_bounds = array<i64: 2, 1, 2>, scalar_prefetch = 0 : i64, scratch_operands = 0 : i64, tpu.core_type = #tpu.core_type<tc>, window_params = [{transform_indices = @transform_0, window_bounds = array<i64: 1, 22, 22, 128>}, {transform_indices = @transform_1, window_bounds = array<i64: 7, 7, 128>}, {transform_indices = @transform_2, window_bounds = array<i64: 1, 128>}, {transform_indices = @transform_3, window_bounds = array<i64: 1, 8, 16, 128>}]} {
    %c8_i32 = arith.constant 8 : i32
    %0 = arith.muli %arg2, %c8_i32 : i32
    %1 = tpu.assume_multiple %0, 8 : i32
    %c0_i32 = arith.constant 0 : i32
    %2 = arith.addi %1, %c0_i32 : i32
    %c0 = arith.constant 0 : index
    %3 = arith.index_cast %2 : i32 to index
    %c0_0 = arith.constant 0 : index
    %c0_1 = arith.constant 0 : index
    %4 = vector.load %arg3[%c0, %3, %c0_0, %c0_1] : memref<1x22x22x128xf32, #tpu.memory_space<vmem>>, vector<1x8x22x128xf32>
    %5 = vector.extract_strided_slice %4 {offsets = [0, 0, 0, 0], sizes = [1, 8, 16, 128], strides = [1, 1, 1, 1]} : vector<1x8x22x128xf32> to vector<1x8x16x128xf32>
    %c0_2 = arith.constant 0 : index
    %c0_3 = arith.constant 0 : index
    %c0_4 = arith.constant 0 : index
    %6 = vector.load %arg4[%c0_2, %c0_3, %c0_4] : memref<7x7x128xf32, #tpu.memory_space<vmem>>, vector<1x1x128xf32>
    %7 = vector.shape_cast %6 : vector<1x1x128xf32> to vector<128xf32>
    %8 = vector.shape_cast %7 : vector<128xf32> to vector<1x1x1x128xf32>
    %9 = vector.broadcast %8 : vector<1x1x1x128xf32> to vector<1x8x16x128xf32>
    %10 = arith.mulf %5, %9 : vector<1x8x16x128xf32>
    %11 = vector.extract_strided_slice %4 {offsets = [0, 0, 1, 0], sizes = [1, 8, 16, 128], strides = [1, 1, 1, 1]} : vector<1x8x22x128xf32> to vector<1x8x16x128xf32>
    %c0_5 = arith.constant 0 : index
    %c1 = arith.constant 1 : index
    %c0_6 = arith.constant 0 : index
    %12 = vector.load %arg4[%c0_5, %c1, %c0_6] : memref<7x7x128xf32, #tpu.memory_space<vmem>>, vector<1x1x128xf32>
    %13 = vector.shape_cast %12 : vector<1x1x128xf32> to vector<128xf32>
    %14 = vector.shape_cast %13 : vector<128xf32> to vector<1x1x1x128xf32>
    %15 = vector.broadcast %14 : vector<1x1x1x128xf32> to vector<1x8x16x128xf32>
    %16 = arith.mulf %11, %15 : vector<1x8x16x128xf32>
    %17 = arith.addf %10, %16 : vector<1x8x16x128xf32>
    %18 = vector.extract_strided_slice %4 {offsets = [0, 0, 2, 0], sizes = [1, 8, 16, 128], strides = [1, 1, 1, 1]} : vector<1x8x22x128xf32> to vector<1x8x16x128xf32>
    %c0_7 = arith.constant 0 : index
    %c2 = arith.constant 2 : index
    %c0_8 = arith.constant 0 : index
    %19 = vector.load %arg4[%c0_7, %c2, %c0_8] : memref<7x7x128xf32, #tpu.memory_space<vmem>>, vector<1x1x128xf32>
    %20 = vector.shape_cast %19 : vector<1x1x128xf32> to vector<128xf32>
    %21 = vector.shape_cast %20 : vector<128xf32> to vector<1x1x1x128xf32>
    %22 = vector.broadcast %21 : vector<1x1x1x128xf32> to vector<1x8x16x128xf32>
    %23 = arith.mulf %18, %22 : vector<1x8x16x128xf32>
    %24 = arith.addf %17, %23 : vector<1x8x16x128xf32>
    %25 = vector.extract_strided_slice %4 {offsets = [0, 0, 3, 0], sizes = [1, 8, 16, 128], strides = [1, 1, 1, 1]} : vector<1x8x22x128xf32> to vector<1x8x16x128xf32>
    %c0_9 = arith.constant 0 : index
    %c3 = arith.constant 3 : index
    %c0_10 = arith.constant 0 : index
    %26 = vector.load %arg4[%c0_9, %c3, %c0_10] : memref<7x7x128xf32, #tpu.memory_space<vmem>>, vector<1x1x128xf32>
    %27 = vector.shape_cast %26 : vector<1x1x128xf32> to vector<128xf32>
    %28 = vector.shape_cast %27 : vector<128xf32> to vector<1x1x1x128xf32>
    %29 = vector.broadcast %28 : vector<1x1x1x128xf32> to vector<1x8x16x128xf32>
    %30 = arith.mulf %25, %29 : vector<1x8x16x128xf32>
    %31 = arith.addf %24, %30 : vector<1x8x16x128xf32>
    %32 = vector.extract_strided_slice %4 {offsets = [0, 0, 4, 0], sizes = [1, 8, 16, 128], strides = [1, 1, 1, 1]} : vector<1x8x22x128xf32> to vector<1x8x16x128xf32>
    %c0_11 = arith.constant 0 : index
    %c4 = arith.constant 4 : index
    %c0_12 = arith.constant 0 : index
    %33 = vector.load %arg4[%c0_11, %c4, %c0_12] : memref<7x7x128xf32, #tpu.memory_space<vmem>>, vector<1x1x128xf32>
    %34 = vector.shape_cast %33 : vector<1x1x128xf32> to vector<128xf32>
    %35 = vector.shape_cast %34 : vector<128xf32> to vector<1x1x1x128xf32>
    %36 = vector.broadcast %35 : vector<1x1x1x128xf32> to vector<1x8x16x128xf32>
    %37 = arith.mulf %32, %36 : vector<1x8x16x128xf32>
    %38 = arith.addf %31, %37 : vector<1x8x16x128xf32>
    %39 = vector.extract_strided_slice %4 {offsets = [0, 0, 5, 0], sizes = [1, 8, 16, 128], strides = [1, 1, 1, 1]} : vector<1x8x22x128xf32> to vector<1x8x16x128xf32>
    %c0_13 = arith.constant 0 : index
    %c5 = arith.constant 5 : index
    %c0_14 = arith.constant 0 : index
    %40 = vector.load %arg4[%c0_13, %c5, %c0_14] : memref<7x7x128xf32, #tpu.memory_space<vmem>>, vector<1x1x128xf32>
    %41 = vector.shape_cast %40 : vector<1x1x128xf32> to vector<128xf32>
    %42 = vector.shape_cast %41 : vector<128xf32> to vector<1x1x1x128xf32>
    %43 = vector.broadcast %42 : vector<1x1x1x128xf32> to vector<1x8x16x128xf32>
    %44 = arith.mulf %39, %43 : vector<1x8x16x128xf32>
    %45 = arith.addf %38, %44 : vector<1x8x16x128xf32>
    %46 = vector.extract_strided_slice %4 {offsets = [0, 0, 6, 0], sizes = [1, 8, 16, 128], strides = [1, 1, 1, 1]} : vector<1x8x22x128xf32> to vector<1x8x16x128xf32>
    %c0_15 = arith.constant 0 : index
    %c6 = arith.constant 6 : index
    %c0_16 = arith.constant 0 : index
    %47 = vector.load %arg4[%c0_15, %c6, %c0_16] : memref<7x7x128xf32, #tpu.memory_space<vmem>>, vector<1x1x128xf32>
    %48 = vector.shape_cast %47 : vector<1x1x128xf32> to vector<128xf32>
    %49 = vector.shape_cast %48 : vector<128xf32> to vector<1x1x1x128xf32>
    %50 = vector.broadcast %49 : vector<1x1x1x128xf32> to vector<1x8x16x128xf32>
    %51 = arith.mulf %46, %50 : vector<1x8x16x128xf32>
    %52 = arith.addf %45, %51 : vector<1x8x16x128xf32>
    %c1_i32 = arith.constant 1 : i32
    %53 = arith.addi %1, %c1_i32 : i32
    %c0_17 = arith.constant 0 : index
    %54 = arith.index_cast %53 : i32 to index
    %c0_18 = arith.constant 0 : index
    %c0_19 = arith.constant 0 : index
    %55 = vector.load %arg3[%c0_17, %54, %c0_18, %c0_19] : memref<1x22x22x128xf32, #tpu.memory_space<vmem>>, vector<1x8x22x128xf32>
    %56 = vector.extract_strided_slice %55 {offsets = [0, 0, 0, 0], sizes = [1, 8, 16, 128], strides = [1, 1, 1, 1]} : vector<1x8x22x128xf32> to vector<1x8x16x128xf32>
    %c1_20 = arith.constant 1 : index
    %c0_21 = arith.constant 0 : index
    %c0_22 = arith.constant 0 : index
    %57 = vector.load %arg4[%c1_20, %c0_21, %c0_22] : memref<7x7x128xf32, #tpu.memory_space<vmem>>, vector<1x1x128xf32>
    %58 = vector.shape_cast %57 : vector<1x1x128xf32> to vector<128xf32>
    %59 = vector.shape_cast %58 : vector<128xf32> to vector<1x1x1x128xf32>
    %60 = vector.broadcast %59 : vector<1x1x1x128xf32> to vector<1x8x16x128xf32>
    %61 = arith.mulf %56, %60 : vector<1x8x16x128xf32>
    %62 = arith.addf %52, %61 : vector<1x8x16x128xf32>
    %63 = vector.extract_strided_slice %55 {offsets = [0, 0, 1, 0], sizes = [1, 8, 16, 128], strides = [1, 1, 1, 1]} : vector<1x8x22x128xf32> to vector<1x8x16x128xf32>
    %c1_23 = arith.constant 1 : index
    %c1_24 = arith.constant 1 : index
    %c0_25 = arith.constant 0 : index
    %64 = vector.load %arg4[%c1_23, %c1_24, %c0_25] : memref<7x7x128xf32, #tpu.memory_space<vmem>>, vector<1x1x128xf32>
    %65 = vector.shape_cast %64 : vector<1x1x128xf32> to vector<128xf32>
    %66 = vector.shape_cast %65 : vector<128xf32> to vector<1x1x1x128xf32>
    %67 = vector.broadcast %66 : vector<1x1x1x128xf32> to vector<1x8x16x128xf32>
    %68 = arith.mulf %63, %67 : vector<1x8x16x128xf32>
    %69 = arith.addf %62, %68 : vector<1x8x16x128xf32>
    %70 = vector.extract_strided_slice %55 {offsets = [0, 0, 2, 0], sizes = [1, 8, 16, 128], strides = [1, 1, 1, 1]} : vector<1x8x22x128xf32> to vector<1x8x16x128xf32>
    %c1_26 = arith.constant 1 : index
    %c2_27 = arith.constant 2 : index
    %c0_28 = arith.constant 0 : index
    %71 = vector.load %arg4[%c1_26, %c2_27, %c0_28] : memref<7x7x128xf32, #tpu.memory_space<vmem>>, vector<1x1x128xf32>
    %72 = vector.shape_cast %71 : vector<1x1x128xf32> to vector<128xf32>
    %73 = vector.shape_cast %72 : vector<128xf32> to vector<1x1x1x128xf32>
    %74 = vector.broadcast %73 : vector<1x1x1x128xf32> to vector<1x8x16x128xf32>
    %75 = arith.mulf %70, %74 : vector<1x8x16x128xf32>
    %76 = arith.addf %69, %75 : vector<1x8x16x128xf32>
    %77 = vector.extract_strided_slice %55 {offsets = [0, 0, 3, 0], sizes = [1, 8, 16, 128], strides = [1, 1, 1, 1]} : vector<1x8x22x128xf32> to vector<1x8x16x128xf32>
    %c1_29 = arith.constant 1 : index
    %c3_30 = arith.constant 3 : index
    %c0_31 = arith.constant 0 : index
    %78 = vector.load %arg4[%c1_29, %c3_30, %c0_31] : memref<7x7x128xf32, #tpu.memory_space<vmem>>, vector<1x1x128xf32>
    %79 = vector.shape_cast %78 : vector<1x1x128xf32> to vector<128xf32>
    %80 = vector.shape_cast %79 : vector<128xf32> to vector<1x1x1x128xf32>
    %81 = vector.broadcast %80 : vector<1x1x1x128xf32> to vector<1x8x16x128xf32>
    %82 = arith.mulf %77, %81 : vector<1x8x16x128xf32>
    %83 = arith.addf %76, %82 : vector<1x8x16x128xf32>
    %84 = vector.extract_strided_slice %55 {offsets = [0, 0, 4, 0], sizes = [1, 8, 16, 128], strides = [1, 1, 1, 1]} : vector<1x8x22x128xf32> to vector<1x8x16x128xf32>
    %c1_32 = arith.constant 1 : index
    %c4_33 = arith.constant 4 : index
    %c0_34 = arith.constant 0 : index
    %85 = vector.load %arg4[%c1_32, %c4_33, %c0_34] : memref<7x7x128xf32, #tpu.memory_space<vmem>>, vector<1x1x128xf32>
    %86 = vector.shape_cast %85 : vector<1x1x128xf32> to vector<128xf32>
    %87 = vector.shape_cast %86 : vector<128xf32> to vector<1x1x1x128xf32>
    %88 = vector.broadcast %87 : vector<1x1x1x128xf32> to vector<1x8x16x128xf32>
    %89 = arith.mulf %84, %88 : vector<1x8x16x128xf32>
    %90 = arith.addf %83, %89 : vector<1x8x16x128xf32>
    %91 = vector.extract_strided_slice %55 {offsets = [0, 0, 5, 0], sizes = [1, 8, 16, 128], strides = [1, 1, 1, 1]} : vector<1x8x22x128xf32> to vector<1x8x16x128xf32>
    %c1_35 = arith.constant 1 : index
    %c5_36 = arith.constant 5 : index
    %c0_37 = arith.constant 0 : index
    %92 = vector.load %arg4[%c1_35, %c5_36, %c0_37] : memref<7x7x128xf32, #tpu.memory_space<vmem>>, vector<1x1x128xf32>
    %93 = vector.shape_cast %92 : vector<1x1x128xf32> to vector<128xf32>
    %94 = vector.shape_cast %93 : vector<128xf32> to vector<1x1x1x128xf32>
    %95 = vector.broadcast %94 : vector<1x1x1x128xf32> to vector<1x8x16x128xf32>
    %96 = arith.mulf %91, %95 : vector<1x8x16x128xf32>
    %97 = arith.addf %90, %96 : vector<1x8x16x128xf32>
    %98 = vector.extract_strided_slice %55 {offsets = [0, 0, 6, 0], sizes = [1, 8, 16, 128], strides = [1, 1, 1, 1]} : vector<1x8x22x128xf32> to vector<1x8x16x128xf32>
    %c1_38 = arith.constant 1 : index
    %c6_39 = arith.constant 6 : index
    %c0_40 = arith.constant 0 : index
    %99 = vector.load %arg4[%c1_38, %c6_39, %c0_40] : memref<7x7x128xf32, #tpu.memory_space<vmem>>, vector<1x1x128xf32>
    %100 = vector.shape_cast %99 : vector<1x1x128xf32> to vector<128xf32>
    %101 = vector.shape_cast %100 : vector<128xf32> to vector<1x1x1x128xf32>
    %102 = vector.broadcast %101 : vector<1x1x1x128xf32> to vector<1x8x16x128xf32>
    %103 = arith.mulf %98, %102 : vector<1x8x16x128xf32>
    %104 = arith.addf %97, %103 : vector<1x8x16x128xf32>
    %c2_i32 = arith.constant 2 : i32
    %105 = arith.addi %1, %c2_i32 : i32
    %c0_41 = arith.constant 0 : index
    %106 = arith.index_cast %105 : i32 to index
    %c0_42 = arith.constant 0 : index
    %c0_43 = arith.constant 0 : index
    %107 = vector.load %arg3[%c0_41, %106, %c0_42, %c0_43] : memref<1x22x22x128xf32, #tpu.memory_space<vmem>>, vector<1x8x22x128xf32>
    %108 = vector.extract_strided_slice %107 {offsets = [0, 0, 0, 0], sizes = [1, 8, 16, 128], strides = [1, 1, 1, 1]} : vector<1x8x22x128xf32> to vector<1x8x16x128xf32>
    %c2_44 = arith.constant 2 : index
    %c0_45 = arith.constant 0 : index
    %c0_46 = arith.constant 0 : index
    %109 = vector.load %arg4[%c2_44, %c0_45, %c0_46] : memref<7x7x128xf32, #tpu.memory_space<vmem>>, vector<1x1x128xf32>
    %110 = vector.shape_cast %109 : vector<1x1x128xf32> to vector<128xf32>
    %111 = vector.shape_cast %110 : vector<128xf32> to vector<1x1x1x128xf32>
    %112 = vector.broadcast %111 : vector<1x1x1x128xf32> to vector<1x8x16x128xf32>
    %113 = arith.mulf %108, %112 : vector<1x8x16x128xf32>
    %114 = arith.addf %104, %113 : vector<1x8x16x128xf32>
    %115 = vector.extract_strided_slice %107 {offsets = [0, 0, 1, 0], sizes = [1, 8, 16, 128], strides = [1, 1, 1, 1]} : vector<1x8x22x128xf32> to vector<1x8x16x128xf32>
    %c2_47 = arith.constant 2 : index
    %c1_48 = arith.constant 1 : index
    %c0_49 = arith.constant 0 : index
    %116 = vector.load %arg4[%c2_47, %c1_48, %c0_49] : memref<7x7x128xf32, #tpu.memory_space<vmem>>, vector<1x1x128xf32>
    %117 = vector.shape_cast %116 : vector<1x1x128xf32> to vector<128xf32>
    %118 = vector.shape_cast %117 : vector<128xf32> to vector<1x1x1x128xf32>
    %119 = vector.broadcast %118 : vector<1x1x1x128xf32> to vector<1x8x16x128xf32>
    %120 = arith.mulf %115, %119 : vector<1x8x16x128xf32>
    %121 = arith.addf %114, %120 : vector<1x8x16x128xf32>
    %122 = vector.extract_strided_slice %107 {offsets = [0, 0, 2, 0], sizes = [1, 8, 16, 128], strides = [1, 1, 1, 1]} : vector<1x8x22x128xf32> to vector<1x8x16x128xf32>
    %c2_50 = arith.constant 2 : index
    %c2_51 = arith.constant 2 : index
    %c0_52 = arith.constant 0 : index
    %123 = vector.load %arg4[%c2_50, %c2_51, %c0_52] : memref<7x7x128xf32, #tpu.memory_space<vmem>>, vector<1x1x128xf32>
    %124 = vector.shape_cast %123 : vector<1x1x128xf32> to vector<128xf32>
    %125 = vector.shape_cast %124 : vector<128xf32> to vector<1x1x1x128xf32>
    %126 = vector.broadcast %125 : vector<1x1x1x128xf32> to vector<1x8x16x128xf32>
    %127 = arith.mulf %122, %126 : vector<1x8x16x128xf32>
    %128 = arith.addf %121, %127 : vector<1x8x16x128xf32>
    %129 = vector.extract_strided_slice %107 {offsets = [0, 0, 3, 0], sizes = [1, 8, 16, 128], strides = [1, 1, 1, 1]} : vector<1x8x22x128xf32> to vector<1x8x16x128xf32>
    %c2_53 = arith.constant 2 : index
    %c3_54 = arith.constant 3 : index
    %c0_55 = arith.constant 0 : index
    %130 = vector.load %arg4[%c2_53, %c3_54, %c0_55] : memref<7x7x128xf32, #tpu.memory_space<vmem>>, vector<1x1x128xf32>
    %131 = vector.shape_cast %130 : vector<1x1x128xf32> to vector<128xf32>
    %132 = vector.shape_cast %131 : vector<128xf32> to vector<1x1x1x128xf32>
    %133 = vector.broadcast %132 : vector<1x1x1x128xf32> to vector<1x8x16x128xf32>
    %134 = arith.mulf %129, %133 : vector<1x8x16x128xf32>
    %135 = arith.addf %128, %134 : vector<1x8x16x128xf32>
    %136 = vector.extract_strided_slice %107 {offsets = [0, 0, 4, 0], sizes = [1, 8, 16, 128], strides = [1, 1, 1, 1]} : vector<1x8x22x128xf32> to vector<1x8x16x128xf32>
    %c2_56 = arith.constant 2 : index
    %c4_57 = arith.constant 4 : index
    %c0_58 = arith.constant 0 : index
    %137 = vector.load %arg4[%c2_56, %c4_57, %c0_58] : memref<7x7x128xf32, #tpu.memory_space<vmem>>, vector<1x1x128xf32>
    %138 = vector.shape_cast %137 : vector<1x1x128xf32> to vector<128xf32>
    %139 = vector.shape_cast %138 : vector<128xf32> to vector<1x1x1x128xf32>
    %140 = vector.broadcast %139 : vector<1x1x1x128xf32> to vector<1x8x16x128xf32>
    %141 = arith.mulf %136, %140 : vector<1x8x16x128xf32>
    %142 = arith.addf %135, %141 : vector<1x8x16x128xf32>
    %143 = vector.extract_strided_slice %107 {offsets = [0, 0, 5, 0], sizes = [1, 8, 16, 128], strides = [1, 1, 1, 1]} : vector<1x8x22x128xf32> to vector<1x8x16x128xf32>
    %c2_59 = arith.constant 2 : index
    %c5_60 = arith.constant 5 : index
    %c0_61 = arith.constant 0 : index
    %144 = vector.load %arg4[%c2_59, %c5_60, %c0_61] : memref<7x7x128xf32, #tpu.memory_space<vmem>>, vector<1x1x128xf32>
    %145 = vector.shape_cast %144 : vector<1x1x128xf32> to vector<128xf32>
    %146 = vector.shape_cast %145 : vector<128xf32> to vector<1x1x1x128xf32>
    %147 = vector.broadcast %146 : vector<1x1x1x128xf32> to vector<1x8x16x128xf32>
    %148 = arith.mulf %143, %147 : vector<1x8x16x128xf32>
    %149 = arith.addf %142, %148 : vector<1x8x16x128xf32>
    %150 = vector.extract_strided_slice %107 {offsets = [0, 0, 6, 0], sizes = [1, 8, 16, 128], strides = [1, 1, 1, 1]} : vector<1x8x22x128xf32> to vector<1x8x16x128xf32>
    %c2_62 = arith.constant 2 : index
    %c6_63 = arith.constant 6 : index
    %c0_64 = arith.constant 0 : index
    %151 = vector.load %arg4[%c2_62, %c6_63, %c0_64] : memref<7x7x128xf32, #tpu.memory_space<vmem>>, vector<1x1x128xf32>
    %152 = vector.shape_cast %151 : vector<1x1x128xf32> to vector<128xf32>
    %153 = vector.shape_cast %152 : vector<128xf32> to vector<1x1x1x128xf32>
    %154 = vector.broadcast %153 : vector<1x1x1x128xf32> to vector<1x8x16x128xf32>
    %155 = arith.mulf %150, %154 : vector<1x8x16x128xf32>
    %156 = arith.addf %149, %155 : vector<1x8x16x128xf32>
    %c3_i32 = arith.constant 3 : i32
    %157 = arith.addi %1, %c3_i32 : i32
    %c0_65 = arith.constant 0 : index
    %158 = arith.index_cast %157 : i32 to index
    %c0_66 = arith.constant 0 : index
    %c0_67 = arith.constant 0 : index
    %159 = vector.load %arg3[%c0_65, %158, %c0_66, %c0_67] : memref<1x22x22x128xf32, #tpu.memory_space<vmem>>, vector<1x8x22x128xf32>
    %160 = vector.extract_strided_slice %159 {offsets = [0, 0, 0, 0], sizes = [1, 8, 16, 128], strides = [1, 1, 1, 1]} : vector<1x8x22x128xf32> to vector<1x8x16x128xf32>
    %c3_68 = arith.constant 3 : index
    %c0_69 = arith.constant 0 : index
    %c0_70 = arith.constant 0 : index
    %161 = vector.load %arg4[%c3_68, %c0_69, %c0_70] : memref<7x7x128xf32, #tpu.memory_space<vmem>>, vector<1x1x128xf32>
    %162 = vector.shape_cast %161 : vector<1x1x128xf32> to vector<128xf32>
    %163 = vector.shape_cast %162 : vector<128xf32> to vector<1x1x1x128xf32>
    %164 = vector.broadcast %163 : vector<1x1x1x128xf32> to vector<1x8x16x128xf32>
    %165 = arith.mulf %160, %164 : vector<1x8x16x128xf32>
    %166 = arith.addf %156, %165 : vector<1x8x16x128xf32>
    %167 = vector.extract_strided_slice %159 {offsets = [0, 0, 1, 0], sizes = [1, 8, 16, 128], strides = [1, 1, 1, 1]} : vector<1x8x22x128xf32> to vector<1x8x16x128xf32>
    %c3_71 = arith.constant 3 : index
    %c1_72 = arith.constant 1 : index
    %c0_73 = arith.constant 0 : index
    %168 = vector.load %arg4[%c3_71, %c1_72, %c0_73] : memref<7x7x128xf32, #tpu.memory_space<vmem>>, vector<1x1x128xf32>
    %169 = vector.shape_cast %168 : vector<1x1x128xf32> to vector<128xf32>
    %170 = vector.shape_cast %169 : vector<128xf32> to vector<1x1x1x128xf32>
    %171 = vector.broadcast %170 : vector<1x1x1x128xf32> to vector<1x8x16x128xf32>
    %172 = arith.mulf %167, %171 : vector<1x8x16x128xf32>
    %173 = arith.addf %166, %172 : vector<1x8x16x128xf32>
    %174 = vector.extract_strided_slice %159 {offsets = [0, 0, 2, 0], sizes = [1, 8, 16, 128], strides = [1, 1, 1, 1]} : vector<1x8x22x128xf32> to vector<1x8x16x128xf32>
    %c3_74 = arith.constant 3 : index
    %c2_75 = arith.constant 2 : index
    %c0_76 = arith.constant 0 : index
    %175 = vector.load %arg4[%c3_74, %c2_75, %c0_76] : memref<7x7x128xf32, #tpu.memory_space<vmem>>, vector<1x1x128xf32>
    %176 = vector.shape_cast %175 : vector<1x1x128xf32> to vector<128xf32>
    %177 = vector.shape_cast %176 : vector<128xf32> to vector<1x1x1x128xf32>
    %178 = vector.broadcast %177 : vector<1x1x1x128xf32> to vector<1x8x16x128xf32>
    %179 = arith.mulf %174, %178 : vector<1x8x16x128xf32>
    %180 = arith.addf %173, %179 : vector<1x8x16x128xf32>
    %181 = vector.extract_strided_slice %159 {offsets = [0, 0, 3, 0], sizes = [1, 8, 16, 128], strides = [1, 1, 1, 1]} : vector<1x8x22x128xf32> to vector<1x8x16x128xf32>
    %c3_77 = arith.constant 3 : index
    %c3_78 = arith.constant 3 : index
    %c0_79 = arith.constant 0 : index
    %182 = vector.load %arg4[%c3_77, %c3_78, %c0_79] : memref<7x7x128xf32, #tpu.memory_space<vmem>>, vector<1x1x128xf32>
    %183 = vector.shape_cast %182 : vector<1x1x128xf32> to vector<128xf32>
    %184 = vector.shape_cast %183 : vector<128xf32> to vector<1x1x1x128xf32>
    %185 = vector.broadcast %184 : vector<1x1x1x128xf32> to vector<1x8x16x128xf32>
    %186 = arith.mulf %181, %185 : vector<1x8x16x128xf32>
    %187 = arith.addf %180, %186 : vector<1x8x16x128xf32>
    %188 = vector.extract_strided_slice %159 {offsets = [0, 0, 4, 0], sizes = [1, 8, 16, 128], strides = [1, 1, 1, 1]} : vector<1x8x22x128xf32> to vector<1x8x16x128xf32>
    %c3_80 = arith.constant 3 : index
    %c4_81 = arith.constant 4 : index
    %c0_82 = arith.constant 0 : index
    %189 = vector.load %arg4[%c3_80, %c4_81, %c0_82] : memref<7x7x128xf32, #tpu.memory_space<vmem>>, vector<1x1x128xf32>
    %190 = vector.shape_cast %189 : vector<1x1x128xf32> to vector<128xf32>
    %191 = vector.shape_cast %190 : vector<128xf32> to vector<1x1x1x128xf32>
    %192 = vector.broadcast %191 : vector<1x1x1x128xf32> to vector<1x8x16x128xf32>
    %193 = arith.mulf %188, %192 : vector<1x8x16x128xf32>
    %194 = arith.addf %187, %193 : vector<1x8x16x128xf32>
    %195 = vector.extract_strided_slice %159 {offsets = [0, 0, 5, 0], sizes = [1, 8, 16, 128], strides = [1, 1, 1, 1]} : vector<1x8x22x128xf32> to vector<1x8x16x128xf32>
    %c3_83 = arith.constant 3 : index
    %c5_84 = arith.constant 5 : index
    %c0_85 = arith.constant 0 : index
    %196 = vector.load %arg4[%c3_83, %c5_84, %c0_85] : memref<7x7x128xf32, #tpu.memory_space<vmem>>, vector<1x1x128xf32>
    %197 = vector.shape_cast %196 : vector<1x1x128xf32> to vector<128xf32>
    %198 = vector.shape_cast %197 : vector<128xf32> to vector<1x1x1x128xf32>
    %199 = vector.broadcast %198 : vector<1x1x1x128xf32> to vector<1x8x16x128xf32>
    %200 = arith.mulf %195, %199 : vector<1x8x16x128xf32>
    %201 = arith.addf %194, %200 : vector<1x8x16x128xf32>
    %202 = vector.extract_strided_slice %159 {offsets = [0, 0, 6, 0], sizes = [1, 8, 16, 128], strides = [1, 1, 1, 1]} : vector<1x8x22x128xf32> to vector<1x8x16x128xf32>
    %c3_86 = arith.constant 3 : index
    %c6_87 = arith.constant 6 : index
    %c0_88 = arith.constant 0 : index
    %203 = vector.load %arg4[%c3_86, %c6_87, %c0_88] : memref<7x7x128xf32, #tpu.memory_space<vmem>>, vector<1x1x128xf32>
    %204 = vector.shape_cast %203 : vector<1x1x128xf32> to vector<128xf32>
    %205 = vector.shape_cast %204 : vector<128xf32> to vector<1x1x1x128xf32>
    %206 = vector.broadcast %205 : vector<1x1x1x128xf32> to vector<1x8x16x128xf32>
    %207 = arith.mulf %202, %206 : vector<1x8x16x128xf32>
    %208 = arith.addf %201, %207 : vector<1x8x16x128xf32>
    %c4_i32 = arith.constant 4 : i32
    %209 = arith.addi %1, %c4_i32 : i32
    %c0_89 = arith.constant 0 : index
    %210 = arith.index_cast %209 : i32 to index
    %c0_90 = arith.constant 0 : index
    %c0_91 = arith.constant 0 : index
    %211 = vector.load %arg3[%c0_89, %210, %c0_90, %c0_91] : memref<1x22x22x128xf32, #tpu.memory_space<vmem>>, vector<1x8x22x128xf32>
    %212 = vector.extract_strided_slice %211 {offsets = [0, 0, 0, 0], sizes = [1, 8, 16, 128], strides = [1, 1, 1, 1]} : vector<1x8x22x128xf32> to vector<1x8x16x128xf32>
    %c4_92 = arith.constant 4 : index
    %c0_93 = arith.constant 0 : index
    %c0_94 = arith.constant 0 : index
    %213 = vector.load %arg4[%c4_92, %c0_93, %c0_94] : memref<7x7x128xf32, #tpu.memory_space<vmem>>, vector<1x1x128xf32>
    %214 = vector.shape_cast %213 : vector<1x1x128xf32> to vector<128xf32>
    %215 = vector.shape_cast %214 : vector<128xf32> to vector<1x1x1x128xf32>
    %216 = vector.broadcast %215 : vector<1x1x1x128xf32> to vector<1x8x16x128xf32>
    %217 = arith.mulf %212, %216 : vector<1x8x16x128xf32>
    %218 = arith.addf %208, %217 : vector<1x8x16x128xf32>
    %219 = vector.extract_strided_slice %211 {offsets = [0, 0, 1, 0], sizes = [1, 8, 16, 128], strides = [1, 1, 1, 1]} : vector<1x8x22x128xf32> to vector<1x8x16x128xf32>
    %c4_95 = arith.constant 4 : index
    %c1_96 = arith.constant 1 : index
    %c0_97 = arith.constant 0 : index
    %220 = vector.load %arg4[%c4_95, %c1_96, %c0_97] : memref<7x7x128xf32, #tpu.memory_space<vmem>>, vector<1x1x128xf32>
    %221 = vector.shape_cast %220 : vector<1x1x128xf32> to vector<128xf32>
    %222 = vector.shape_cast %221 : vector<128xf32> to vector<1x1x1x128xf32>
    %223 = vector.broadcast %222 : vector<1x1x1x128xf32> to vector<1x8x16x128xf32>
    %224 = arith.mulf %219, %223 : vector<1x8x16x128xf32>
    %225 = arith.addf %218, %224 : vector<1x8x16x128xf32>
    %226 = vector.extract_strided_slice %211 {offsets = [0, 0, 2, 0], sizes = [1, 8, 16, 128], strides = [1, 1, 1, 1]} : vector<1x8x22x128xf32> to vector<1x8x16x128xf32>
    %c4_98 = arith.constant 4 : index
    %c2_99 = arith.constant 2 : index
    %c0_100 = arith.constant 0 : index
    %227 = vector.load %arg4[%c4_98, %c2_99, %c0_100] : memref<7x7x128xf32, #tpu.memory_space<vmem>>, vector<1x1x128xf32>
    %228 = vector.shape_cast %227 : vector<1x1x128xf32> to vector<128xf32>
    %229 = vector.shape_cast %228 : vector<128xf32> to vector<1x1x1x128xf32>
    %230 = vector.broadcast %229 : vector<1x1x1x128xf32> to vector<1x8x16x128xf32>
    %231 = arith.mulf %226, %230 : vector<1x8x16x128xf32>
    %232 = arith.addf %225, %231 : vector<1x8x16x128xf32>
    %233 = vector.extract_strided_slice %211 {offsets = [0, 0, 3, 0], sizes = [1, 8, 16, 128], strides = [1, 1, 1, 1]} : vector<1x8x22x128xf32> to vector<1x8x16x128xf32>
    %c4_101 = arith.constant 4 : index
    %c3_102 = arith.constant 3 : index
    %c0_103 = arith.constant 0 : index
    %234 = vector.load %arg4[%c4_101, %c3_102, %c0_103] : memref<7x7x128xf32, #tpu.memory_space<vmem>>, vector<1x1x128xf32>
    %235 = vector.shape_cast %234 : vector<1x1x128xf32> to vector<128xf32>
    %236 = vector.shape_cast %235 : vector<128xf32> to vector<1x1x1x128xf32>
    %237 = vector.broadcast %236 : vector<1x1x1x128xf32> to vector<1x8x16x128xf32>
    %238 = arith.mulf %233, %237 : vector<1x8x16x128xf32>
    %239 = arith.addf %232, %238 : vector<1x8x16x128xf32>
    %240 = vector.extract_strided_slice %211 {offsets = [0, 0, 4, 0], sizes = [1, 8, 16, 128], strides = [1, 1, 1, 1]} : vector<1x8x22x128xf32> to vector<1x8x16x128xf32>
    %c4_104 = arith.constant 4 : index
    %c4_105 = arith.constant 4 : index
    %c0_106 = arith.constant 0 : index
    %241 = vector.load %arg4[%c4_104, %c4_105, %c0_106] : memref<7x7x128xf32, #tpu.memory_space<vmem>>, vector<1x1x128xf32>
    %242 = vector.shape_cast %241 : vector<1x1x128xf32> to vector<128xf32>
    %243 = vector.shape_cast %242 : vector<128xf32> to vector<1x1x1x128xf32>
    %244 = vector.broadcast %243 : vector<1x1x1x128xf32> to vector<1x8x16x128xf32>
    %245 = arith.mulf %240, %244 : vector<1x8x16x128xf32>
    %246 = arith.addf %239, %245 : vector<1x8x16x128xf32>
    %247 = vector.extract_strided_slice %211 {offsets = [0, 0, 5, 0], sizes = [1, 8, 16, 128], strides = [1, 1, 1, 1]} : vector<1x8x22x128xf32> to vector<1x8x16x128xf32>
    %c4_107 = arith.constant 4 : index
    %c5_108 = arith.constant 5 : index
    %c0_109 = arith.constant 0 : index
    %248 = vector.load %arg4[%c4_107, %c5_108, %c0_109] : memref<7x7x128xf32, #tpu.memory_space<vmem>>, vector<1x1x128xf32>
    %249 = vector.shape_cast %248 : vector<1x1x128xf32> to vector<128xf32>
    %250 = vector.shape_cast %249 : vector<128xf32> to vector<1x1x1x128xf32>
    %251 = vector.broadcast %250 : vector<1x1x1x128xf32> to vector<1x8x16x128xf32>
    %252 = arith.mulf %247, %251 : vector<1x8x16x128xf32>
    %253 = arith.addf %246, %252 : vector<1x8x16x128xf32>
    %254 = vector.extract_strided_slice %211 {offsets = [0, 0, 6, 0], sizes = [1, 8, 16, 128], strides = [1, 1, 1, 1]} : vector<1x8x22x128xf32> to vector<1x8x16x128xf32>
    %c4_110 = arith.constant 4 : index
    %c6_111 = arith.constant 6 : index
    %c0_112 = arith.constant 0 : index
    %255 = vector.load %arg4[%c4_110, %c6_111, %c0_112] : memref<7x7x128xf32, #tpu.memory_space<vmem>>, vector<1x1x128xf32>
    %256 = vector.shape_cast %255 : vector<1x1x128xf32> to vector<128xf32>
    %257 = vector.shape_cast %256 : vector<128xf32> to vector<1x1x1x128xf32>
    %258 = vector.broadcast %257 : vector<1x1x1x128xf32> to vector<1x8x16x128xf32>
    %259 = arith.mulf %254, %258 : vector<1x8x16x128xf32>
    %260 = arith.addf %253, %259 : vector<1x8x16x128xf32>
    %c5_i32 = arith.constant 5 : i32
    %261 = arith.addi %1, %c5_i32 : i32
    %c0_113 = arith.constant 0 : index
    %262 = arith.index_cast %261 : i32 to index
    %c0_114 = arith.constant 0 : index
    %c0_115 = arith.constant 0 : index
    %263 = vector.load %arg3[%c0_113, %262, %c0_114, %c0_115] : memref<1x22x22x128xf32, #tpu.memory_space<vmem>>, vector<1x8x22x128xf32>
    %264 = vector.extract_strided_slice %263 {offsets = [0, 0, 0, 0], sizes = [1, 8, 16, 128], strides = [1, 1, 1, 1]} : vector<1x8x22x128xf32> to vector<1x8x16x128xf32>
    %c5_116 = arith.constant 5 : index
    %c0_117 = arith.constant 0 : index
    %c0_118 = arith.constant 0 : index
    %265 = vector.load %arg4[%c5_116, %c0_117, %c0_118] : memref<7x7x128xf32, #tpu.memory_space<vmem>>, vector<1x1x128xf32>
    %266 = vector.shape_cast %265 : vector<1x1x128xf32> to vector<128xf32>
    %267 = vector.shape_cast %266 : vector<128xf32> to vector<1x1x1x128xf32>
    %268 = vector.broadcast %267 : vector<1x1x1x128xf32> to vector<1x8x16x128xf32>
    %269 = arith.mulf %264, %268 : vector<1x8x16x128xf32>
    %270 = arith.addf %260, %269 : vector<1x8x16x128xf32>
    %271 = vector.extract_strided_slice %263 {offsets = [0, 0, 1, 0], sizes = [1, 8, 16, 128], strides = [1, 1, 1, 1]} : vector<1x8x22x128xf32> to vector<1x8x16x128xf32>
    %c5_119 = arith.constant 5 : index
    %c1_120 = arith.constant 1 : index
    %c0_121 = arith.constant 0 : index
    %272 = vector.load %arg4[%c5_119, %c1_120, %c0_121] : memref<7x7x128xf32, #tpu.memory_space<vmem>>, vector<1x1x128xf32>
    %273 = vector.shape_cast %272 : vector<1x1x128xf32> to vector<128xf32>
    %274 = vector.shape_cast %273 : vector<128xf32> to vector<1x1x1x128xf32>
    %275 = vector.broadcast %274 : vector<1x1x1x128xf32> to vector<1x8x16x128xf32>
    %276 = arith.mulf %271, %275 : vector<1x8x16x128xf32>
    %277 = arith.addf %270, %276 : vector<1x8x16x128xf32>
    %278 = vector.extract_strided_slice %263 {offsets = [0, 0, 2, 0], sizes = [1, 8, 16, 128], strides = [1, 1, 1, 1]} : vector<1x8x22x128xf32> to vector<1x8x16x128xf32>
    %c5_122 = arith.constant 5 : index
    %c2_123 = arith.constant 2 : index
    %c0_124 = arith.constant 0 : index
    %279 = vector.load %arg4[%c5_122, %c2_123, %c0_124] : memref<7x7x128xf32, #tpu.memory_space<vmem>>, vector<1x1x128xf32>
    %280 = vector.shape_cast %279 : vector<1x1x128xf32> to vector<128xf32>
    %281 = vector.shape_cast %280 : vector<128xf32> to vector<1x1x1x128xf32>
    %282 = vector.broadcast %281 : vector<1x1x1x128xf32> to vector<1x8x16x128xf32>
    %283 = arith.mulf %278, %282 : vector<1x8x16x128xf32>
    %284 = arith.addf %277, %283 : vector<1x8x16x128xf32>
    %285 = vector.extract_strided_slice %263 {offsets = [0, 0, 3, 0], sizes = [1, 8, 16, 128], strides = [1, 1, 1, 1]} : vector<1x8x22x128xf32> to vector<1x8x16x128xf32>
    %c5_125 = arith.constant 5 : index
    %c3_126 = arith.constant 3 : index
    %c0_127 = arith.constant 0 : index
    %286 = vector.load %arg4[%c5_125, %c3_126, %c0_127] : memref<7x7x128xf32, #tpu.memory_space<vmem>>, vector<1x1x128xf32>
    %287 = vector.shape_cast %286 : vector<1x1x128xf32> to vector<128xf32>
    %288 = vector.shape_cast %287 : vector<128xf32> to vector<1x1x1x128xf32>
    %289 = vector.broadcast %288 : vector<1x1x1x128xf32> to vector<1x8x16x128xf32>
    %290 = arith.mulf %285, %289 : vector<1x8x16x128xf32>
    %291 = arith.addf %284, %290 : vector<1x8x16x128xf32>
    %292 = vector.extract_strided_slice %263 {offsets = [0, 0, 4, 0], sizes = [1, 8, 16, 128], strides = [1, 1, 1, 1]} : vector<1x8x22x128xf32> to vector<1x8x16x128xf32>
    %c5_128 = arith.constant 5 : index
    %c4_129 = arith.constant 4 : index
    %c0_130 = arith.constant 0 : index
    %293 = vector.load %arg4[%c5_128, %c4_129, %c0_130] : memref<7x7x128xf32, #tpu.memory_space<vmem>>, vector<1x1x128xf32>
    %294 = vector.shape_cast %293 : vector<1x1x128xf32> to vector<128xf32>
    %295 = vector.shape_cast %294 : vector<128xf32> to vector<1x1x1x128xf32>
    %296 = vector.broadcast %295 : vector<1x1x1x128xf32> to vector<1x8x16x128xf32>
    %297 = arith.mulf %292, %296 : vector<1x8x16x128xf32>
    %298 = arith.addf %291, %297 : vector<1x8x16x128xf32>
    %299 = vector.extract_strided_slice %263 {offsets = [0, 0, 5, 0], sizes = [1, 8, 16, 128], strides = [1, 1, 1, 1]} : vector<1x8x22x128xf32> to vector<1x8x16x128xf32>
    %c5_131 = arith.constant 5 : index
    %c5_132 = arith.constant 5 : index
    %c0_133 = arith.constant 0 : index
    %300 = vector.load %arg4[%c5_131, %c5_132, %c0_133] : memref<7x7x128xf32, #tpu.memory_space<vmem>>, vector<1x1x128xf32>
    %301 = vector.shape_cast %300 : vector<1x1x128xf32> to vector<128xf32>
    %302 = vector.shape_cast %301 : vector<128xf32> to vector<1x1x1x128xf32>
    %303 = vector.broadcast %302 : vector<1x1x1x128xf32> to vector<1x8x16x128xf32>
    %304 = arith.mulf %299, %303 : vector<1x8x16x128xf32>
    %305 = arith.addf %298, %304 : vector<1x8x16x128xf32>
    %306 = vector.extract_strided_slice %263 {offsets = [0, 0, 6, 0], sizes = [1, 8, 16, 128], strides = [1, 1, 1, 1]} : vector<1x8x22x128xf32> to vector<1x8x16x128xf32>
    %c5_134 = arith.constant 5 : index
    %c6_135 = arith.constant 6 : index
    %c0_136 = arith.constant 0 : index
    %307 = vector.load %arg4[%c5_134, %c6_135, %c0_136] : memref<7x7x128xf32, #tpu.memory_space<vmem>>, vector<1x1x128xf32>
    %308 = vector.shape_cast %307 : vector<1x1x128xf32> to vector<128xf32>
    %309 = vector.shape_cast %308 : vector<128xf32> to vector<1x1x1x128xf32>
    %310 = vector.broadcast %309 : vector<1x1x1x128xf32> to vector<1x8x16x128xf32>
    %311 = arith.mulf %306, %310 : vector<1x8x16x128xf32>
    %312 = arith.addf %305, %311 : vector<1x8x16x128xf32>
    %c6_i32 = arith.constant 6 : i32
    %313 = arith.addi %1, %c6_i32 : i32
    %c0_137 = arith.constant 0 : index
    %314 = arith.index_cast %313 : i32 to index
    %c0_138 = arith.constant 0 : index
    %c0_139 = arith.constant 0 : index
    %315 = vector.load %arg3[%c0_137, %314, %c0_138, %c0_139] : memref<1x22x22x128xf32, #tpu.memory_space<vmem>>, vector<1x8x22x128xf32>
    %316 = vector.extract_strided_slice %315 {offsets = [0, 0, 0, 0], sizes = [1, 8, 16, 128], strides = [1, 1, 1, 1]} : vector<1x8x22x128xf32> to vector<1x8x16x128xf32>
    %c6_140 = arith.constant 6 : index
    %c0_141 = arith.constant 0 : index
    %c0_142 = arith.constant 0 : index
    %317 = vector.load %arg4[%c6_140, %c0_141, %c0_142] : memref<7x7x128xf32, #tpu.memory_space<vmem>>, vector<1x1x128xf32>
    %318 = vector.shape_cast %317 : vector<1x1x128xf32> to vector<128xf32>
    %319 = vector.shape_cast %318 : vector<128xf32> to vector<1x1x1x128xf32>
    %320 = vector.broadcast %319 : vector<1x1x1x128xf32> to vector<1x8x16x128xf32>
    %321 = arith.mulf %316, %320 : vector<1x8x16x128xf32>
    %322 = arith.addf %312, %321 : vector<1x8x16x128xf32>
    %323 = vector.extract_strided_slice %315 {offsets = [0, 0, 1, 0], sizes = [1, 8, 16, 128], strides = [1, 1, 1, 1]} : vector<1x8x22x128xf32> to vector<1x8x16x128xf32>
    %c6_143 = arith.constant 6 : index
    %c1_144 = arith.constant 1 : index
    %c0_145 = arith.constant 0 : index
    %324 = vector.load %arg4[%c6_143, %c1_144, %c0_145] : memref<7x7x128xf32, #tpu.memory_space<vmem>>, vector<1x1x128xf32>
    %325 = vector.shape_cast %324 : vector<1x1x128xf32> to vector<128xf32>
    %326 = vector.shape_cast %325 : vector<128xf32> to vector<1x1x1x128xf32>
    %327 = vector.broadcast %326 : vector<1x1x1x128xf32> to vector<1x8x16x128xf32>
    %328 = arith.mulf %323, %327 : vector<1x8x16x128xf32>
    %329 = arith.addf %322, %328 : vector<1x8x16x128xf32>
    %330 = vector.extract_strided_slice %315 {offsets = [0, 0, 2, 0], sizes = [1, 8, 16, 128], strides = [1, 1, 1, 1]} : vector<1x8x22x128xf32> to vector<1x8x16x128xf32>
    %c6_146 = arith.constant 6 : index
    %c2_147 = arith.constant 2 : index
    %c0_148 = arith.constant 0 : index
    %331 = vector.load %arg4[%c6_146, %c2_147, %c0_148] : memref<7x7x128xf32, #tpu.memory_space<vmem>>, vector<1x1x128xf32>
    %332 = vector.shape_cast %331 : vector<1x1x128xf32> to vector<128xf32>
    %333 = vector.shape_cast %332 : vector<128xf32> to vector<1x1x1x128xf32>
    %334 = vector.broadcast %333 : vector<1x1x1x128xf32> to vector<1x8x16x128xf32>
    %335 = arith.mulf %330, %334 : vector<1x8x16x128xf32>
    %336 = arith.addf %329, %335 : vector<1x8x16x128xf32>
    %337 = vector.extract_strided_slice %315 {offsets = [0, 0, 3, 0], sizes = [1, 8, 16, 128], strides = [1, 1, 1, 1]} : vector<1x8x22x128xf32> to vector<1x8x16x128xf32>
    %c6_149 = arith.constant 6 : index
    %c3_150 = arith.constant 3 : index
    %c0_151 = arith.constant 0 : index
    %338 = vector.load %arg4[%c6_149, %c3_150, %c0_151] : memref<7x7x128xf32, #tpu.memory_space<vmem>>, vector<1x1x128xf32>
    %339 = vector.shape_cast %338 : vector<1x1x128xf32> to vector<128xf32>
    %340 = vector.shape_cast %339 : vector<128xf32> to vector<1x1x1x128xf32>
    %341 = vector.broadcast %340 : vector<1x1x1x128xf32> to vector<1x8x16x128xf32>
    %342 = arith.mulf %337, %341 : vector<1x8x16x128xf32>
    %343 = arith.addf %336, %342 : vector<1x8x16x128xf32>
    %344 = vector.extract_strided_slice %315 {offsets = [0, 0, 4, 0], sizes = [1, 8, 16, 128], strides = [1, 1, 1, 1]} : vector<1x8x22x128xf32> to vector<1x8x16x128xf32>
    %c6_152 = arith.constant 6 : index
    %c4_153 = arith.constant 4 : index
    %c0_154 = arith.constant 0 : index
    %345 = vector.load %arg4[%c6_152, %c4_153, %c0_154] : memref<7x7x128xf32, #tpu.memory_space<vmem>>, vector<1x1x128xf32>
    %346 = vector.shape_cast %345 : vector<1x1x128xf32> to vector<128xf32>
    %347 = vector.shape_cast %346 : vector<128xf32> to vector<1x1x1x128xf32>
    %348 = vector.broadcast %347 : vector<1x1x1x128xf32> to vector<1x8x16x128xf32>
    %349 = arith.mulf %344, %348 : vector<1x8x16x128xf32>
    %350 = arith.addf %343, %349 : vector<1x8x16x128xf32>
    %351 = vector.extract_strided_slice %315 {offsets = [0, 0, 5, 0], sizes = [1, 8, 16, 128], strides = [1, 1, 1, 1]} : vector<1x8x22x128xf32> to vector<1x8x16x128xf32>
    %c6_155 = arith.constant 6 : index
    %c5_156 = arith.constant 5 : index
    %c0_157 = arith.constant 0 : index
    %352 = vector.load %arg4[%c6_155, %c5_156, %c0_157] : memref<7x7x128xf32, #tpu.memory_space<vmem>>, vector<1x1x128xf32>
    %353 = vector.shape_cast %352 : vector<1x1x128xf32> to vector<128xf32>
    %354 = vector.shape_cast %353 : vector<128xf32> to vector<1x1x1x128xf32>
    %355 = vector.broadcast %354 : vector<1x1x1x128xf32> to vector<1x8x16x128xf32>
    %356 = arith.mulf %351, %355 : vector<1x8x16x128xf32>
    %357 = arith.addf %350, %356 : vector<1x8x16x128xf32>
    %358 = vector.extract_strided_slice %315 {offsets = [0, 0, 6, 0], sizes = [1, 8, 16, 128], strides = [1, 1, 1, 1]} : vector<1x8x22x128xf32> to vector<1x8x16x128xf32>
    %c6_158 = arith.constant 6 : index
    %c6_159 = arith.constant 6 : index
    %c0_160 = arith.constant 0 : index
    %359 = vector.load %arg4[%c6_158, %c6_159, %c0_160] : memref<7x7x128xf32, #tpu.memory_space<vmem>>, vector<1x1x128xf32>
    %360 = vector.shape_cast %359 : vector<1x1x128xf32> to vector<128xf32>
    %361 = vector.shape_cast %360 : vector<128xf32> to vector<1x1x1x128xf32>
    %362 = vector.broadcast %361 : vector<1x1x1x128xf32> to vector<1x8x16x128xf32>
    %363 = arith.mulf %358, %362 : vector<1x8x16x128xf32>
    %364 = arith.addf %357, %363 : vector<1x8x16x128xf32>
    %c0_161 = arith.constant 0 : index
    %c0_162 = arith.constant 0 : index
    %365 = vector.load %arg5[%c0_161, %c0_162] : memref<1x128xf32, #tpu.memory_space<vmem>>, vector<1x128xf32>
    %366 = vector.shape_cast %365 : vector<1x128xf32> to vector<128xf32>
    %367 = vector.shape_cast %366 : vector<128xf32> to vector<1x1x1x128xf32>
    %368 = vector.broadcast %367 : vector<1x1x1x128xf32> to vector<1x8x16x128xf32>
    %369 = arith.addf %364, %368 : vector<1x8x16x128xf32>
    %cst = arith.constant 0.000000e+00 : f32
    %370 = vector.broadcast %cst : f32 to vector<1x8x16x128xf32>
    %371 = arith.subf %370, %369 : vector<1x8x16x128xf32>
    %372 = math.exp %371 : vector<1x8x16x128xf32>
    %cst_163 = arith.constant 1.000000e+00 : f32
    %373 = vector.broadcast %cst_163 : f32 to vector<1x8x16x128xf32>
    %374 = arith.addf %373, %372 : vector<1x8x16x128xf32>
    %cst_164 = arith.constant 1.000000e+00 : f32
    %375 = vector.broadcast %cst_164 : f32 to vector<1x8x16x128xf32>
    %376 = arith.divf %375, %374 : vector<1x8x16x128xf32>
    %377 = arith.mulf %369, %376 : vector<1x8x16x128xf32>
    %c0_165 = arith.constant 0 : index
    %c0_166 = arith.constant 0 : index
    %c0_167 = arith.constant 0 : index
    %c0_168 = arith.constant 0 : index
    %378 = vector.load %arg6[%c0_165, %c0_166, %c0_167, %c0_168] : memref<1x8x16x128xf32, #tpu.memory_space<vmem>>, vector<1x8x16x128xf32>
    tpu.vector_store %arg6[%c0_165, %c0_166, %c0_167, %c0_168], %377 {strides = array<i32>} : memref<1x8x16x128xf32, #tpu.memory_space<vmem>>, vector<1x8x16x128xf32>,
    return
  }
  func.func @transform_0(%arg0: i32, %arg1: i32, %arg2: i32) -> (i32, i32, i32, i32) {
    %c0_i32 = arith.constant 0 : i32
    %c0_i32_0 = arith.constant 0 : i32
    %c0_i32_1 = arith.constant 0 : i32
    return %arg0, %c0_i32, %c0_i32_0, %arg1 : i32, i32, i32, i32
  }
  func.func @transform_1(%arg0: i32, %arg1: i32, %arg2: i32) -> (i32, i32, i32) {
    %c0_i32 = arith.constant 0 : i32
    %c0_i32_0 = arith.constant 0 : i32
    %c0_i32_1 = arith.constant 0 : i32
    return %c0_i32, %c0_i32_0, %arg1 : i32, i32, i32
  }
  func.func @transform_2(%arg0: i32, %arg1: i32, %arg2: i32) -> (i32, i32) {
    %c0_i32 = arith.constant 0 : i32
    %c0_i32_0 = arith.constant 0 : i32
    return %c0_i32, %arg1 : i32, i32
  }
  func.func @transform_3(%arg0: i32, %arg1: i32, %arg2: i32) -> (i32, i32, i32, i32) {
    %c0_i32 = arith.constant 0 : i32
    %c0_i32_0 = arith.constant 0 : i32
    return %arg0, %arg2, %c0_i32, %arg1 : i32, i32, i32, i32
  }
}

</mosaic_0001>

<llo_original>
// kernel: repvggdw_forward.1
$region0: #{repvggdw_forward.1}
  #allocation0 [shape = 'u32[]', space=smem, size = 0x4, offset = 0x4, fixed_abs, tag = 'smem constant byte address 0x4 - core index']
  #allocation1 [shape = 'u32[144,128]{1,0:T(1,128)}', space=vmem, size = 0x12000, scoped, tag = 'internal scratch']
  %s0 = inlined_call_operand.vmem [shape: f32[2,22,22,128], index: 0, kind: input, shape index: {}]
  %s1 = inlined_call_operand.vmem [shape: f32[7,7,128], index: 1, kind: input, shape index: {}]
  %s2 = inlined_call_operand.vmem [shape: f32[1,128], index: 2, kind: input, shape index: {}]
  %s3 = inlined_call_operand.vmem [shape: f32[2,16,16,128], index: 3, kind: output, shape index: {}]
  %s4 = sld [smem:[#allocation0]]
  $region45: #{repvggdw_forward.1} parent=0
    _
  %s6 = ssub.s32 1, %s4
  %s7 = scalar_select 0, %s6, %s4
  loop: start=0, step=1, limit=6
  $region2: #{repvggdw_forward.1} parent=0 // loop_pre_header
    _
  $region3: #{repvggdw_forward.1} parent=0 // loop_header
    %s9 = sphi 0, %s13
    %p10 = scmp.ge.s32.totalorder %s9, 6
    %s16 = sphi 0, %s35
    %s17 = sphi 0, %s31
    %s18 = sphi 0, %s27
    %s19 = sphi 0, %s16
    %s20 = sphi 0, %s17
    %s21 = sphi 0, %s18
    %s22 = sphi 0, %s19
    %s23 = sphi 0, %s20
    %s24 = sphi 0, %s21
    %s40 = sphi 0, %s42
    %s43 = sphi 0, %s40
    %s44 = sphi 0, %s43
    %s60 = sphi 0, %s44
    %s66 = sphi 0, %s68
    %s69 = sphi 0, %s66
    %s70 = sphi 0, %s69
    %s86 = sphi 0, %s70
    %s92 = sphi 0, %s94
    %s95 = sphi 0, %s92
    %s96 = sphi 0, %s95
    %s112 = sphi 0, %s96
    %s122 = sphi 0, %s124
    %s125 = sphi 0, %s122
    %s126 = sphi 0, %s125
    %s142 = sphi 0, %s126
  $region4: #{repvggdw_forward.1} parent=0 // loop_header_branch
    %12 = sbr.rel (%p10) target = $region8
  $region5: #{repvggdw_forward.1} parent=0 // loop_body
    %s14 = ssub.s32 %s9, 1
    %s15 = ssub.s32 %s9, 2
    %s25 = sadd.s32 1, %s18
    %p26 = scmp.ge.s32.totalorder %s25, 2
    %s27 = scalar_select %p26, 0, %s25
    %s28 = sadd.s32 1, %s17
    %s29 = scalar_select %p26, %s28, %s17
    %p30 = scmp.ge.s32.totalorder %s29, 1
    %s31 = scalar_select %p30, 0, %s29
    %s32 = sadd.s32 1, %s16
    %s33 = scalar_select %p30, %s32, %s16
    %p34 = scmp.ge.s32.totalorder %s33, 2
    %s35 = scalar_select %p34, 0, %s33
    %s36 = ssub.s32 %s16, %s35
    %s37 = ssub.s32 %s17, %s31
    %s38 = sor.u32 %s36, %s37
    %p39 = scmp.eq.s32.totalorder %s38, 0
    %s41 = sadd.s32 %s40, 1
    %s42 = scalar_select %p39, %s40, %s41
    %p45 = pneg %p39
    %p46 = scmp.eq.s32.totalorder %s9, 3
    %p47 = por %p45, %p46
    %p48 = scmp.ne.s32.totalorder %s40, %s43
    %p49 = scmp.eq.s32.totalorder %s9, 0
    %p50 = por %p48, %p49
    %p51 = scmp.ne.s32.totalorder %s40, %s43
    %p52 = scmp.eq.s32.totalorder %s14, 3
    %p53 = por %p51, %p52
    %p54 = scmp.ne.s32.totalorder %s43, %s44
    %p55 = scmp.eq.s32.totalorder %s14, 0
    %p56 = por %p54, %p55
    %p57 = scmp.ne.s32.totalorder %s43, %s44
    %p58 = scmp.eq.s32.totalorder %s15, 3
    %p59 = por %p57, %p58
    %p61 = scmp.ne.s32.totalorder %s44, %s60
    %p62 = scmp.eq.s32.totalorder %s15, 0
    %p63 = por %p61, %p62
    %s64 = ssub.s32 %s17, %s31
    %p65 = scmp.eq.s32.totalorder %s64, 0
    %s67 = sadd.s32 %s66, 1
    %s68 = scalar_select %p65, %s66, %s67
    %p71 = pneg %p65
    %p72 = scmp.eq.s32.totalorder %s9, 3
    %p73 = por %p71, %p72
    %p74 = scmp.ne.s32.totalorder %s66, %s69
    %p75 = scmp.eq.s32.totalorder %s9, 0
    %p76 = por %p74, %p75
    %p77 = scmp.ne.s32.totalorder %s66, %s69
    %p78 = scmp.eq.s32.totalorder %s14, 3
    %p79 = por %p77, %p78
    %p80 = scmp.ne.s32.totalorder %s69, %s70
    %p81 = scmp.eq.s32.totalorder %s14, 0
    %p82 = por %p80, %p81
    %p83 = scmp.ne.s32.totalorder %s69, %s70
    %p84 = scmp.eq.s32.totalorder %s15, 3
    %p85 = por %p83, %p84
    %p87 = scmp.ne.s32.totalorder %s70, %s86
    %p88 = scmp.eq.s32.totalorder %s15, 0
    %p89 = por %p87, %p88
    %s90 = ssub.s32 %s17, %s31
    %p91 = scmp.eq.s32.totalorder %s90, 0
    %s93 = sadd.s32 %s92, 1
    %s94 = scalar_select %p91, %s92, %s93
    %p97 = pneg %p91
    %p98 = scmp.eq.s32.totalorder %s9, 3
    %p99 = por %p97, %p98
    %p100 = scmp.ne.s32.totalorder %s92, %s95
    %p101 = scmp.eq.s32.totalorder %s9, 0
    %p102 = por %p100, %p101
    %p103 = scmp.ne.s32.totalorder %s92, %s95
    %p104 = scmp.eq.s32.totalorder %s14, 3
    %p105 = por %p103, %p104
    %p106 = scmp.ne.s32.totalorder %s95, %s96
    %p107 = scmp.eq.s32.totalorder %s14, 0
    %p108 = por %p106, %p107
    %p109 = scmp.ne.s32.totalorder %s95, %s96
    %p110 = scmp.eq.s32.totalorder %s15, 3
    %p111 = por %p109, %p110
    %p113 = scmp.ne.s32.totalorder %s96, %s112
    %p114 = scmp.eq.s32.totalorder %s15, 0
    %p115 = por %p113, %p114
    %s116 = ssub.s32 %s16, %s35
    %s117 = ssub.s32 %s18, %s27
    %s118 = sor.u32 %s116, %s117
    %s119 = ssub.s32 %s17, %s31
    %s120 = sor.u32 %s118, %s119
    %p121 = scmp.eq.s32.totalorder %s120, 0
    %s123 = sadd.s32 %s122, 1
    %s124 = scalar_select %p121, %s122, %s123
    %p127 = pneg %p121
    %p128 = scmp.eq.s32.totalorder %s9, 3
    %p129 = por %p127, %p128
    %p130 = scmp.ne.s32.totalorder %s122, %s125
    %p131 = scmp.eq.s32.totalorder %s9, 0
    %p132 = por %p130, %p131
    %p133 = scmp.ne.s32.totalorder %s122, %s125
    %p134 = scmp.eq.s32.totalorder %s14, 3
    %p135 = por %p133, %p134
    %p136 = scmp.ne.s32.totalorder %s125, %s126
    %p137 = scmp.eq.s32.totalorder %s14, 0
    %p138 = por %p136, %p137
    %p139 = scmp.ne.s32.totalorder %s125, %s126
    %p140 = scmp.eq.s32.totalorder %s15, 3
    %p141 = por %p139, %p140
    %p143 = scmp.ne.s32.totalorder %s126, %s142
    %p144 = scmp.eq.s32.totalorder %s15, 0
    %p145 = por %p143, %p144
    %p146 = scmp.le.s32.totalorder 1, %s9
    %p147 = scmp.lt.s32.totalorder %s9, 5
    %p148 = pnand %p146, %p147
    %p149 = pneg %p148
    // Predicated region
    $region9: #{repvggdw_forward.1} parent=5 // pred_check
      _
    $region10: #{repvggdw_forward.1} parent=5 // pred_check_branch
      %151 = sbr.rel (%p148) target = $region12
    $region11: #{repvggdw_forward.1} parent=5 // pred_region
      %s152 = ssub.s32 %s9, 1
      // Predicated region
      $region13: #{repvggdw_forward.1} parent=11 // pred_check
        %p153 = pneg %p82
      $region14: #{repvggdw_forward.1} parent=11 // pred_check_branch
        %155 = sbr.rel (%p153) target = $region16
      $region15: #{repvggdw_forward.1} parent=11 // pred_region
        %p156 = scmp.lt.s32.totalorder %s20, 0
        %s157 = scalar_select %p156, %s20, 0
        %s158 = smul.addr %s157, 8
        %s159 = scalar_lea.vmem %s1, %s158
      $region16: #{repvggdw_forward.1} parent=11 // pred_fallthru
        _
      // Predicated region
      $region17: #{repvggdw_forward.1} parent=11 // pred_check
        %p160 = pneg %p108
      $region18: #{repvggdw_forward.1} parent=11 // pred_check_branch
        %162 = sbr.rel (%p160) target = $region20
      $region19: #{repvggdw_forward.1} parent=11 // pred_region
        %p163 = scmp.lt.s32.totalorder %s20, 0
        %s164 = scalar_select %p163, %s20, 0
        %s165 = scalar_lea.vmem %s2, %s164
      $region20: #{repvggdw_forward.1} parent=11 // pred_fallthru
        _
    $region12: #{repvggdw_forward.1} parent=5 // pred_fallthru
      _
    %p166 = scmp.lt.s32.totalorder %s9, 4
    // Predicated region
    $region21: #{repvggdw_forward.1} parent=5 // pred_check
      %p167 = pneg %p166
    $region22: #{repvggdw_forward.1} parent=5 // pred_check_branch
      %169 = sbr.rel (%p167) target = $region24
    $region23: #{repvggdw_forward.1} parent=5 // pred_region
      // Predicated region
      $region25: #{repvggdw_forward.1} parent=23 // pred_check
        %p170 = pneg %p50
      $region26: #{repvggdw_forward.1} parent=23 // pred_check_branch
        %172 = sbr.rel (%p170) target = $region28
      $region27: #{repvggdw_forward.1} parent=23 // pred_region
        %p173 = scmp.lt.s32.totalorder %s16, 1
        %s174 = scalar_select %p173, %s16, 1
        %p175 = scmp.lt.s32.totalorder %s17, 0
        %s176 = scalar_select %p175, %s17, 0
        %s177 = smul.addr %s174, 66
        %s178 = sadd.s32 %s176, %s177
        %s179 = smul.addr %s178, 8
        %s180 = scalar_lea.vmem %s0, %s179
      $region28: #{repvggdw_forward.1} parent=23 // pred_fallthru
        _
    $region24: #{repvggdw_forward.1} parent=5 // pred_fallthru
      _
    %p181 = scmp.le.s32.totalorder 1, %s9
    %p182 = scmp.lt.s32.totalorder %s9, 5
    %p183 = pnand %p181, %p182
    %p184 = pneg %p183
    // Predicated region
    $region29: #{repvggdw_forward.1} parent=5 // pred_check
      _
    $region30: #{repvggdw_forward.1} parent=5 // pred_check_branch
      %186 = sbr.rel (%p183) target = $region32
    $region31: #{repvggdw_forward.1} parent=5 // pred_region
      %s187 = ssub.s32 %s9, 1
      %p188 = scmp.lt.s32.totalorder %s19, 1
      %s189 = scalar_select %p188, %s19, 1
      %p190 = scmp.lt.s32.totalorder %s20, 0
      %s191 = scalar_select %p190, %s20, 0
      %s192 = smul.addr %s189, 66
      %s193 = sadd.s32 %s191, %s192
      %s194 = smul.addr %s193, 8
      %s195 = scalar_lea.vmem %s0, %s194
      %p196 = pneg %p56
      %p197 = pneg %p53
      %p198 = scmp.lt.s32.totalorder %s20, 0
      %s199 = scalar_select %p198, %s20, 0
      %s200 = smul.addr %s199, 8
      %s201 = scalar_lea.vmem %s1, %s200
      %p202 = pneg %p82
      %p203 = pneg %p79
      %p204 = scmp.lt.s32.totalorder %s20, 0
      %s205 = scalar_select %p204, %s20, 0
      %s206 = scalar_lea.vmem %s2, %s205
      %p207 = pneg %p108
      %p208 = pneg %p105
      %p209 = pneg %p138
      %p210 = pneg %p135
      %s211 = smul.u32 8, %s21
      %p212 = scmp.lt.s32.totalorder %s19, 1
      %s213 = scalar_select %p212, %s19, 1
      %p214 = scmp.lt.s32.totalorder %s211, 15
      %s215 = scalar_select %p214, %s211, 15
      %p216 = scmp.lt.s32.totalorder %s20, 0
      %s217 = scalar_select %p216, %s20, 0
      %s218 = smul.addr %s215, 2
      %s219 = sadd.s32 %s217, %s218
      %s220 = smul.addr %s213, 32
      %s221 = sadd.s32 %s219, %s220
      %s222 = smul.addr %s221, 8
      %s223 = scalar_lea.vmem %s3, %s222
      %p224 = scmp.lt.s32.totalorder %s19, 1
      %s225 = scalar_select %p224, %s19, 1
      %p226 = scmp.lt.s32.totalorder %s20, 0
      %s227 = scalar_select %p226, %s20, 0
      %s228 = smul.addr %s225, 66
      %s229 = sadd.s32 %s227, %s228
      %s230 = smul.addr %s229, 8
      %s231 = scalar_lea.vmem %s0, %s230
      %p232 = scmp.lt.s32.totalorder %s20, 0
      %s233 = scalar_select %p232, %s20, 0
      %s234 = smul.addr %s233, 8
      %s235 = scalar_lea.vmem %s1, %s234
      %p236 = scmp.lt.s32.totalorder %s20, 0
      %s237 = scalar_select %p236, %s20, 0
      %s238 = scalar_lea.vmem %s2, %s237
      %s239 = smul.u32 8, %s21
      %p240 = scmp.lt.s32.totalorder %s19, 1
      %s241 = scalar_select %p240, %s19, 1
      %p242 = scmp.lt.s32.totalorder %s239, 15
      %s243 = scalar_select %p242, %s239, 15
      %p244 = scmp.lt.s32.totalorder %s20, 0
      %s245 = scalar_select %p244, %s20, 0
      %s246 = smul.addr %s243, 2
      %s247 = sadd.s32 %s245, %s246
      %s248 = smul.addr %s241, 32
      %s249 = sadd.s32 %s247, %s248
      %s250 = smul.addr %s249, 8
      %s251 = scalar_lea.vmem %s3, %s250
      %s252 = smul.u32 8, %s21
      %s253 = smul.u32 %s21, 8
      %s254 = smul.u32 %s253, 24
      %s255 = scalar_lea.vmem %s231, %s254
      %v256 = vld [vmem:[%s255] sm:$0xff]
      %v257 = vld [vmem:[%s255 + $0x8] sm:$0xff]
      %v258 = vld [vmem:[%s255 + $0x10] sm:$0x3f]
      %v259 = vld [vmem:[%s255 + $0x18] sm:$0xff]
      %v260 = vld [vmem:[%s255 + $0x20] sm:$0xff]
      %v261 = vld [vmem:[%s255 + $0x28] sm:$0x3f]
      %v262 = vld [vmem:[%s255 + $0x30] sm:$0xff]
      %v263 = vld [vmem:[%s255 + $0x38] sm:$0xff]
      %v264 = vld [vmem:[%s255 + $0x40] sm:$0x3f]
      %v265 = vld [vmem:[%s255 + $0x48] sm:$0xff]
      %v266 = vld [vmem:[%s255 + $0x50] sm:$0xff]
      %v267 = vld [vmem:[%s255 + $0x58] sm:$0x3f]
      %v268 = vld [vmem:[%s255 + $0x60] sm:$0xff]
      %v269 = vld [vmem:[%s255 + $0x68] sm:$0xff]
      %v270 = vld [vmem:[%s255 + $0x70] sm:$0x3f]
      %v271 = vld [vmem:[%s255 + $0x78] sm:$0xff]
      %v272 = vld [vmem:[%s255 + $0x80] sm:$0xff]
      %v273 = vld [vmem:[%s255 + $0x88] sm:$0x3f]
      %v274 = vld [vmem:[%s255 + $0x90] sm:$0xff]
      %v275 = vld [vmem:[%s255 + $0x98] sm:$0xff]
      %v276 = vld [vmem:[%s255 + $0xa0] sm:$0x3f]
      %v277 = vld [vmem:[%s255 + $0xa8] sm:$0xff]
      %v278 = vld [vmem:[%s255 + $0xb0] sm:$0xff]
      %v279 = vld [vmem:[%s255 + $0xb8] sm:$0x3f]
      %v280 = vld [vmem:[%s235] sm:$0x1]
      %v281 = vlaneseq
      %v282 = vshrl.u32 %v281, 7
      %v283 = vsub.s32 0, %v282
      %v284 = vrot.slane %v280, %v283
      %v285 = vmul.f32 %v256, %v284
      %v286 = vmul.f32 %v257, %v284
      %v287 = vmul.f32 %v259, %v284
      %v288 = vmul.f32 %v260, %v284
      %v289 = vmul.f32 %v262, %v284
      %v290 = vmul.f32 %v263, %v284
      %v291 = vmul.f32 %v265, %v284
      %v292 = vmul.f32 %v266, %v284
      %v293 = vmul.f32 %v268, %v284
      %v294 = vmul.f32 %v269, %v284
      %v295 = vmul.f32 %v271, %v284
      %v296 = vmul.f32 %v272, %v284
      %v297 = vmul.f32 %v274, %v284
      %v298 = vmul.f32 %v275, %v284
      %v299 = vmul.f32 %v277, %v284
      %v300 = vmul.f32 %v278, %v284
      %v301 = vld [vmem:[%s235 + $0x1] sm:$0x1]
      %v302 = vlaneseq
      %v303 = vshrl.u32 %v302, 7
      %v304 = vsub.s32 0, %v303
      %v305 = vrot.slane %v301, %v304
      %v306 = vmul.f32 %v256, %v305
      %v307 = vmul.f32 %v257, %v305
      %v308 = vmul.f32 %v258, %v305
      %v309 = vmul.f32 %v259, %v305
      %v310 = vmul.f32 %v260, %v305
      %v311 = vmul.f32 %v261, %v305
      %v312 = vmul.f32 %v262, %v305
      %v313 = vmul.f32 %v263, %v305
      %v314 = vmul.f32 %v264, %v305
      %v315 = vmul.f32 %v265, %v305
      %v316 = vmul.f32 %v266, %v305
      %v317 = vmul.f32 %v267, %v305
      %v318 = vmul.f32 %v268, %v305
      %v319 = vmul.f32 %v269, %v305
      %v320 = vmul.f32 %v270, %v305
      %v321 = vmul.f32 %v271, %v305
      %v322 = vmul.f32 %v272, %v305
      %v323 = vmul.f32 %v273, %v305
      %v324 = vmul.f32 %v274, %v305
      %v325 = vmul.f32 %v275, %v305
      %v326 = vmul.f32 %v276, %v305
      %v327 = vmul.f32 %v277, %v305
      %v328 = vmul.f32 %v278, %v305
      %v329 = vmul.f32 %v279, %v305
      %vm354 = vcmask 1046528
      %v355 = vrot.slane %v306, 1
      %v356 = vrot.slane %v307, 1
      %v357 = vsel %vm354, %v355, %v356
      %v358 = vrot.slane %v308, 1
      %v359 = vsel %vm354, %v356, %v358
      %v360 = vrot.slane %v309, 1
      %v361 = vrot.slane %v310, 1
      %v362 = vsel %vm354, %v360, %v361
      %v363 = vrot.slane %v311, 1
      %v364 = vsel %vm354, %v361, %v363
      %v365 = vrot.slane %v312, 1
      %v366 = vrot.slane %v313, 1
      %v367 = vsel %vm354, %v365, %v366
      %v368 = vrot.slane %v314, 1
      %v369 = vsel %vm354, %v366, %v368
      %v370 = vrot.slane %v315, 1
      %v371 = vrot.slane %v316, 1
      %v372 = vsel %vm354, %v370, %v371
      %v373 = vrot.slane %v317, 1
      %v374 = vsel %vm354, %v371, %v373
      %v375 = vrot.slane %v318, 1
      %v376 = vrot.slane %v319, 1
      %v377 = vsel %vm354, %v375, %v376
      %v378 = vrot.slane %v320, 1
      %v379 = vsel %vm354, %v376, %v378
      %v380 = vrot.slane %v321, 1
      %v381 = vrot.slane %v322, 1
      %v382 = vsel %vm354, %v380, %v381
      %v383 = vrot.slane %v323, 1
      %v384 = vsel %vm354, %v381, %v383
      %v385 = vrot.slane %v324, 1
      %v386 = vrot.slane %v325, 1
      %v387 = vsel %vm354, %v385, %v386
      %v388 = vrot.slane %v326, 1
      %v389 = vsel %vm354, %v386, %v388
      %v390 = vrot.slane %v327, 1
      %v391 = vrot.slane %v328, 1
      %v392 = vsel %vm354, %v390, %v391
      %v393 = vrot.slane %v329, 1
      %v394 = vsel %vm354, %v391, %v393
      %v411 = vadd.f32 %v285, %v357
      %v412 = vadd.f32 %v286, %v359
      %v413 = vadd.f32 %v287, %v362
      %v414 = vadd.f32 %v288, %v364
      %v415 = vadd.f32 %v289, %v367
      %v416 = vadd.f32 %v290, %v369
      %v417 = vadd.f32 %v291, %v372
      %v418 = vadd.f32 %v292, %v374
      %v419 = vadd.f32 %v293, %v377
      %v420 = vadd.f32 %v294, %v379
      %v421 = vadd.f32 %v295, %v382
      %v422 = vadd.f32 %v296, %v384
      %v423 = vadd.f32 %v297, %v387
      %v424 = vadd.f32 %v298, %v389
      %v425 = vadd.f32 %v299, %v392
      %v426 = vadd.f32 %v300, %v394
      %v427 = vld [vmem:[%s235 + $0x2] sm:$0x1]
      %v428 = vlaneseq
      %v429 = vshrl.u32 %v428, 7
      %v430 = vsub.s32 0, %v429
      %v431 = vrot.slane %v427, %v430
      %v432 = vmul.f32 %v256, %v431
      %v433 = vmul.f32 %v257, %v431
      %v434 = vmul.f32 %v258, %v431
      %v435 = vmul.f32 %v259, %v431
      %v436 = vmul.f32 %v260, %v431
      %v437 = vmul.f32 %v261, %v431
      %v438 = vmul.f32 %v262, %v431
      %v439 = vmul.f32 %v263, %v431
      %v440 = vmul.f32 %v264, %v431
      %v441 = vmul.f32 %v265, %v431
      %v442 = vmul.f32 %v266, %v431
      %v443 = vmul.f32 %v267, %v431
      %v444 = vmul.f32 %v268, %v431
      %v445 = vmul.f32 %v269, %v431
      %v446 = vmul.f32 %v270, %v431
      %v447 = vmul.f32 %v271, %v431
      %v448 = vmul.f32 %v272, %v431
      %v449 = vmul.f32 %v273, %v431
      %v450 = vmul.f32 %v274, %v431
      %v451 = vmul.f32 %v275, %v431
      %v452 = vmul.f32 %v276, %v431
      %v453 = vmul.f32 %v277, %v431
      %v454 = vmul.f32 %v278, %v431
      %v455 = vmul.f32 %v279, %v431
      %vm480 = vcmask 1045504
      %v481 = vrot.slane %v432, 2
      %v482 = vrot.slane %v433, 2
      %v483 = vsel %vm480, %v481, %v482
      %v484 = vrot.slane %v434, 2
      %v485 = vsel %vm480, %v482, %v484
      %v486 = vrot.slane %v435, 2
      %v487 = vrot.slane %v436, 2
      %v488 = vsel %vm480, %v486, %v487
      %v489 = vrot.slane %v437, 2
      %v490 = vsel %vm480, %v487, %v489
      %v491 = vrot.slane %v438, 2
      %v492 = vrot.slane %v439, 2
      %v493 = vsel %vm480, %v491, %v492
      %v494 = vrot.slane %v440, 2
      %v495 = vsel %vm480, %v492, %v494
      %v496 = vrot.slane %v441, 2
      %v497 = vrot.slane %v442, 2
      %v498 = vsel %vm480, %v496, %v497
      %v499 = vrot.slane %v443, 2
      %v500 = vsel %vm480, %v497, %v499
      %v501 = vrot.slane %v444, 2
      %v502 = vrot.slane %v445, 2
      %v503 = vsel %vm480, %v501, %v502
      %v504 = vrot.slane %v446, 2
      %v505 = vsel %vm480, %v502, %v504
      %v506 = vrot.slane %v447, 2
      %v507 = vrot.slane %v448, 2
      %v508 = vsel %vm480, %v506, %v507
      %v509 = vrot.slane %v449, 2
      %v510 = vsel %vm480, %v507, %v509
      %v511 = vrot.slane %v450, 2
      %v512 = vrot.slane %v451, 2
      %v513 = vsel %vm480, %v511, %v512
      %v514 = vrot.slane %v452, 2
      %v515 = vsel %vm480, %v512, %v514
      %v516 = vrot.slane %v453, 2
      %v517 = vrot.slane %v454, 2
      %v518 = vsel %vm480, %v516, %v517
      %v519 = vrot.slane %v455, 2
      %v520 = vsel %vm480, %v517, %v519
      %v537 = vadd.f32 %v411, %v483
      %v538 = vadd.f32 %v412, %v485
      %v539 = vadd.f32 %v413, %v488
      %v540 = vadd.f32 %v414, %v490
      %v541 = vadd.f32 %v415, %v493
      %v542 = vadd.f32 %v416, %v495
      %v543 = vadd.f32 %v417, %v498
      %v544 = vadd.f32 %v418, %v500
      %v545 = vadd.f32 %v419, %v503
      %v546 = vadd.f32 %v420, %v505
      %v547 = vadd.f32 %v421, %v508
      %v548 = vadd.f32 %v422, %v510
      %v549 = vadd.f32 %v423, %v513
      %v550 = vadd.f32 %v424, %v515
      %v551 = vadd.f32 %v425, %v518
      %v552 = vadd.f32 %v426, %v520
      %v553 = vld [vmem:[%s235 + $0x3] sm:$0x1]
      %v554 = vlaneseq
      %v555 = vshrl.u32 %v554, 7
      %v556 = vsub.s32 0, %v555
      %v557 = vrot.slane %v553, %v556
      %v558 = vmul.f32 %v256, %v557
      %v559 = vmul.f32 %v257, %v557
      %v560 = vmul.f32 %v258, %v557
      %v561 = vmul.f32 %v259, %v557
      %v562 = vmul.f32 %v260, %v557
      %v563 = vmul.f32 %v261, %v557
      %v564 = vmul.f32 %v262, %v557
      %v565 = vmul.f32 %v263, %v557
      %v566 = vmul.f32 %v264, %v557
      %v567 = vmul.f32 %v265, %v557
      %v568 = vmul.f32 %v266, %v557
      %v569 = vmul.f32 %v267, %v557
      %v570 = vmul.f32 %v268, %v557
      %v571 = vmul.f32 %v269, %v557
      %v572 = vmul.f32 %v270, %v557
      %v573 = vmul.f32 %v271, %v557
      %v574 = vmul.f32 %v272, %v557
      %v575 = vmul.f32 %v273, %v557
      %v576 = vmul.f32 %v274, %v557
      %v577 = vmul.f32 %v275, %v557
      %v578 = vmul.f32 %v276, %v557
      %v579 = vmul.f32 %v277, %v557
      %v580 = vmul.f32 %v278, %v557
      %v581 = vmul.f32 %v279, %v557
      %vm606 = vcmask 1044480
      %v607 = vrot.slane %v558, 3
      %v608 = vrot.slane %v559, 3
      %v609 = vsel %vm606, %v607, %v608
      %v610 = vrot.slane %v560, 3
      %v611 = vsel %vm606, %v608, %v610
      %v612 = vrot.slane %v561, 3
      %v613 = vrot.slane %v562, 3
      %v614 = vsel %vm606, %v612, %v613
      %v615 = vrot.slane %v563, 3
      %v616 = vsel %vm606, %v613, %v615
      %v617 = vrot.slane %v564, 3
      %v618 = vrot.slane %v565, 3
      %v619 = vsel %vm606, %v617, %v618
      %v620 = vrot.slane %v566, 3
      %v621 = vsel %vm606, %v618, %v620
      %v622 = vrot.slane %v567, 3
      %v623 = vrot.slane %v568, 3
      %v624 = vsel %vm606, %v622, %v623
      %v625 = vrot.slane %v569, 3
      %v626 = vsel %vm606, %v623, %v625
      %v627 = vrot.slane %v570, 3
      %v628 = vrot.slane %v571, 3
      %v629 = vsel %vm606, %v627, %v628
      %v630 = vrot.slane %v572, 3
      %v631 = vsel %vm606, %v628, %v630
      %v632 = vrot.slane %v573, 3
      %v633 = vrot.slane %v574, 3
      %v634 = vsel %vm606, %v632, %v633
      %v635 = vrot.slane %v575, 3
      %v636 = vsel %vm606, %v633, %v635
      %v637 = vrot.slane %v576, 3
      %v638 = vrot.slane %v577, 3
      %v639 = vsel %vm606, %v637, %v638
      %v640 = vrot.slane %v578, 3
      %v641 = vsel %vm606, %v638, %v640
      %v642 = vrot.slane %v579, 3
      %v643 = vrot.slane %v580, 3
      %v644 = vsel %vm606, %v642, %v643
      %v645 = vrot.slane %v581, 3
      %v646 = vsel %vm606, %v643, %v645
      %v663 = vadd.f32 %v537, %v609
      %v664 = vadd.f32 %v538, %v611
      %v665 = vadd.f32 %v539, %v614
      %v666 = vadd.f32 %v540, %v616
      %v667 = vadd.f32 %v541, %v619
      %v668 = vadd.f32 %v542, %v621
      %v669 = vadd.f32 %v543, %v624
      %v670 = vadd.f32 %v544, %v626
      %v671 = vadd.f32 %v545, %v629
      %v672 = vadd.f32 %v546, %v631
      %v673 = vadd.f32 %v547, %v634
      %v674 = vadd.f32 %v548, %v636
      %v675 = vadd.f32 %v549, %v639
      %v676 = vadd.f32 %v550, %v641
      %v677 = vadd.f32 %v551, %v644
      %v678 = vadd.f32 %v552, %v646
      %v679 = vld [vmem:[%s235 + $0x4] sm:$0x1]
      %v680 = vlaneseq
      %v681 = vshrl.u32 %v680, 7
      %v682 = vsub.s32 0, %v681
      %v683 = vrot.slane %v679, %v682
      %v684 = vmul.f32 %v256, %v683
      %v685 = vmul.f32 %v257, %v683
      %v686 = vmul.f32 %v258, %v683
      %v687 = vmul.f32 %v259, %v683
      %v688 = vmul.f32 %v260, %v683
      %v689 = vmul.f32 %v261, %v683
      %v690 = vmul.f32 %v262, %v683
      %v691 = vmul.f32 %v263, %v683
      %v692 = vmul.f32 %v264, %v683
      %v693 = vmul.f32 %v265, %v683
      %v694 = vmul.f32 %v266, %v683
      %v695 = vmul.f32 %v267, %v683
      %v696 = vmul.f32 %v268, %v683
      %v697 = vmul.f32 %v269, %v683
      %v698 = vmul.f32 %v270, %v683
      %v699 = vmul.f32 %v271, %v683
      %v700 = vmul.f32 %v272, %v683
      %v701 = vmul.f32 %v273, %v683
      %v702 = vmul.f32 %v274, %v683
      %v703 = vmul.f32 %v275, %v683
      %v704 = vmul.f32 %v276, %v683
      %v705 = vmul.f32 %v277, %v683
      %v706 = vmul.f32 %v278, %v683
      %v707 = vmul.f32 %v279, %v683
      %vm732 = vcmask 1043456
      %v733 = vrot.slane %v684, 4
      %v734 = vrot.slane %v685, 4
      %v735 = vsel %vm732, %v733, %v734
      %v736 = vrot.slane %v686, 4
      %v737 = vsel %vm732, %v734, %v736
      %v738 = vrot.slane %v687, 4
      %v739 = vrot.slane %v688, 4
      %v740 = vsel %vm732, %v738, %v739
      %v741 = vrot.slane %v689, 4
      %v742 = vsel %vm732, %v739, %v741
      %v743 = vrot.slane %v690, 4
      %v744 = vrot.slane %v691, 4
      %v745 = vsel %vm732, %v743, %v744
      %v746 = vrot.slane %v692, 4
      %v747 = vsel %vm732, %v744, %v746
      %v748 = vrot.slane %v693, 4
      %v749 = vrot.slane %v694, 4
      %v750 = vsel %vm732, %v748, %v749
      %v751 = vrot.slane %v695, 4
      %v752 = vsel %vm732, %v749, %v751
      %v753 = vrot.slane %v696, 4
      %v754 = vrot.slane %v697, 4
      %v755 = vsel %vm732, %v753, %v754
      %v756 = vrot.slane %v698, 4
      %v757 = vsel %vm732, %v754, %v756
      %v758 = vrot.slane %v699, 4
      %v759 = vrot.slane %v700, 4
      %v760 = vsel %vm732, %v758, %v759
      %v761 = vrot.slane %v701, 4
      %v762 = vsel %vm732, %v759, %v761
      %v763 = vrot.slane %v702, 4
      %v764 = vrot.slane %v703, 4
      %v765 = vsel %vm732, %v763, %v764
      %v766 = vrot.slane %v704, 4
      %v767 = vsel %vm732, %v764, %v766
      %v768 = vrot.slane %v705, 4
      %v769 = vrot.slane %v706, 4
      %v770 = vsel %vm732, %v768, %v769
      %v771 = vrot.slane %v707, 4
      %v772 = vsel %vm732, %v769, %v771
      %v789 = vadd.f32 %v663, %v735
      %v790 = vadd.f32 %v664, %v737
      %v791 = vadd.f32 %v665, %v740
      %v792 = vadd.f32 %v666, %v742
      %v793 = vadd.f32 %v667, %v745
      %v794 = vadd.f32 %v668, %v747
      %v795 = vadd.f32 %v669, %v750
      %v796 = vadd.f32 %v670, %v752
      %v797 = vadd.f32 %v671, %v755
      %v798 = vadd.f32 %v672, %v757
      %v799 = vadd.f32 %v673, %v760
      %v800 = vadd.f32 %v674, %v762
      %v801 = vadd.f32 %v675, %v765
      %v802 = vadd.f32 %v676, %v767
      %v803 = vadd.f32 %v677, %v770
      %v804 = vadd.f32 %v678, %v772
      %v805 = vld [vmem:[%s235 + $0x5] sm:$0x1]
      %v806 = vlaneseq
      %v807 = vshrl.u32 %v806, 7
      %v808 = vsub.s32 0, %v807
      %v809 = vrot.slane %v805, %v808
      %v810 = vmul.f32 %v256, %v809
      %v811 = vmul.f32 %v257, %v809
      %v812 = vmul.f32 %v258, %v809
      %v813 = vmul.f32 %v259, %v809
      %v814 = vmul.f32 %v260, %v809
      %v815 = vmul.f32 %v261, %v809
      %v816 = vmul.f32 %v262, %v809
      %v817 = vmul.f32 %v263, %v809
      %v818 = vmul.f32 %v264, %v809
      %v819 = vmul.f32 %v265, %v809
      %v820 = vmul.f32 %v266, %v809
      %v821 = vmul.f32 %v267, %v809
      %v822 = vmul.f32 %v268, %v809
      %v823 = vmul.f32 %v269, %v809
      %v824 = vmul.f32 %v270, %v809
      %v825 = vmul.f32 %v271, %v809
      %v826 = vmul.f32 %v272, %v809
      %v827 = vmul.f32 %v273, %v809
      %v828 = vmul.f32 %v274, %v809
      %v829 = vmul.f32 %v275, %v809
      %v830 = vmul.f32 %v276, %v809
      %v831 = vmul.f32 %v277, %v809
      %v832 = vmul.f32 %v278, %v809
      %v833 = vmul.f32 %v279, %v809
      %vm858 = vcmask 1042432
      %v859 = vrot.slane %v810, 5
      %v860 = vrot.slane %v811, 5
      %v861 = vsel %vm858, %v859, %v860
      %v862 = vrot.slane %v812, 5
      %v863 = vsel %vm858, %v860, %v862
      %v864 = vrot.slane %v813, 5
      %v865 = vrot.slane %v814, 5
      %v866 = vsel %vm858, %v864, %v865
      %v867 = vrot.slane %v815, 5
      %v868 = vsel %vm858, %v865, %v867
      %v869 = vrot.slane %v816, 5
      %v870 = vrot.slane %v817, 5
      %v871 = vsel %vm858, %v869, %v870
      %v872 = vrot.slane %v818, 5
      %v873 = vsel %vm858, %v870, %v872
      %v874 = vrot.slane %v819, 5
      %v875 = vrot.slane %v820, 5
      %v876 = vsel %vm858, %v874, %v875
      %v877 = vrot.slane %v821, 5
      %v878 = vsel %vm858, %v875, %v877
      %v879 = vrot.slane %v822, 5
      %v880 = vrot.slane %v823, 5
      %v881 = vsel %vm858, %v879, %v880
      %v882 = vrot.slane %v824, 5
      %v883 = vsel %vm858, %v880, %v882
      %v884 = vrot.slane %v825, 5
      %v885 = vrot.slane %v826, 5
      %v886 = vsel %vm858, %v884, %v885
      %v887 = vrot.slane %v827, 5
      %v888 = vsel %vm858, %v885, %v887
      %v889 = vrot.slane %v828, 5
      %v890 = vrot.slane %v829, 5
      %v891 = vsel %vm858, %v889, %v890
      %v892 = vrot.slane %v830, 5
      %v893 = vsel %vm858, %v890, %v892
      %v894 = vrot.slane %v831, 5
      %v895 = vrot.slane %v832, 5
      %v896 = vsel %vm858, %v894, %v895
      %v897 = vrot.slane %v833, 5
      %v898 = vsel %vm858, %v895, %v897
      %v915 = vadd.f32 %v789, %v861
      %v916 = vadd.f32 %v790, %v863
      %v917 = vadd.f32 %v791, %v866
      %v918 = vadd.f32 %v792, %v868
      %v919 = vadd.f32 %v793, %v871
      %v920 = vadd.f32 %v794, %v873
      %v921 = vadd.f32 %v795, %v876
      %v922 = vadd.f32 %v796, %v878
      %v923 = vadd.f32 %v797, %v881
      %v924 = vadd.f32 %v798, %v883
      %v925 = vadd.f32 %v799, %v886
      %v926 = vadd.f32 %v800, %v888
      %v927 = vadd.f32 %v801, %v891
      %v928 = vadd.f32 %v802, %v893
      %v929 = vadd.f32 %v803, %v896
      %v930 = vadd.f32 %v804, %v898
      %v931 = vld [vmem:[%s235 + $0x6] sm:$0x1]
      %v932 = vlaneseq
      %v933 = vshrl.u32 %v932, 7
      %v934 = vsub.s32 0, %v933
      %v935 = vrot.slane %v931, %v934
      %v936 = vmul.f32 %v256, %v935
      %v937 = vmul.f32 %v257, %v935
      %v938 = vmul.f32 %v258, %v935
      %v939 = vmul.f32 %v259, %v935
      %v940 = vmul.f32 %v260, %v935
      %v941 = vmul.f32 %v261, %v935
      %v942 = vmul.f32 %v262, %v935
      %v943 = vmul.f32 %v263, %v935
      %v944 = vmul.f32 %v264, %v935
      %v945 = vmul.f32 %v265, %v935
      %v946 = vmul.f32 %v266, %v935
      %v947 = vmul.f32 %v267, %v935
      %v948 = vmul.f32 %v268, %v935
      %v949 = vmul.f32 %v269, %v935
      %v950 = vmul.f32 %v270, %v935
      %v951 = vmul.f32 %v271, %v935
      %v952 = vmul.f32 %v272, %v935
      %v953 = vmul.f32 %v273, %v935
      %v954 = vmul.f32 %v274, %v935
      %v955 = vmul.f32 %v275, %v935
      %v956 = vmul.f32 %v276, %v935
      %v957 = vmul.f32 %v277, %v935
      %v958 = vmul.f32 %v278, %v935
      %v959 = vmul.f32 %v279, %v935
      %vm984 = vcmask 1041408
      %v985 = vrot.slane %v936, 6
      %v986 = vrot.slane %v937, 6
      %v987 = vsel %vm984, %v985, %v986
      %v988 = vrot.slane %v938, 6
      %v989 = vsel %vm984, %v986, %v988
      %v990 = vrot.slane %v939, 6
      %v991 = vrot.slane %v940, 6
      %v992 = vsel %vm984, %v990, %v991
      %v993 = vrot.slane %v941, 6
      %v994 = vsel %vm984, %v991, %v993
      %v995 = vrot.slane %v942, 6
      %v996 = vrot.slane %v943, 6
      %v997 = vsel %vm984, %v995, %v996
      %v998 = vrot.slane %v944, 6
      %v999 = vsel %vm984, %v996, %v998
      %v1000 = vrot.slane %v945, 6
      %v1001 = vrot.slane %v946, 6
      %v1002 = vsel %vm984, %v1000, %v1001
      %v1003 = vrot.slane %v947, 6
      %v1004 = vsel %vm984, %v1001, %v1003
      %v1005 = vrot.slane %v948, 6
      %v1006 = vrot.slane %v949, 6
      %v1007 = vsel %vm984, %v1005, %v1006
      %v1008 = vrot.slane %v950, 6
      %v1009 = vsel %vm984, %v1006, %v1008
      %v1010 = vrot.slane %v951, 6
      %v1011 = vrot.slane %v952, 6
      %v1012 = vsel %vm984, %v1010, %v1011
      %v1013 = vrot.slane %v953, 6
      %v1014 = vsel %vm984, %v1011, %v1013
      %v1015 = vrot.slane %v954, 6
      %v1016 = vrot.slane %v955, 6
      %v1017 = vsel %vm984, %v1015, %v1016
      %v1018 = vrot.slane %v956, 6
      %v1019 = vsel %vm984, %v1016, %v1018
      %v1020 = vrot.slane %v957, 6
      %v1021 = vrot.slane %v958, 6
      %v1022 = vsel %vm984, %v1020, %v1021
      %v1023 = vrot.slane %v959, 6
      %v1024 = vsel %vm984, %v1021, %v1023
      %v1041 = vadd.f32 %v915, %v987
      %v1042 = vadd.f32 %v916, %v989
      %v1043 = vadd.f32 %v917, %v992
      %v1044 = vadd.f32 %v918, %v994
      %v1045 = vadd.f32 %v919, %v997
      %v1046 = vadd.f32 %v920, %v999
      %v1047 = vadd.f32 %v921, %v1002
      %v1048 = vadd.f32 %v922, %v1004
      %v1049 = vadd.f32 %v923, %v1007
      %v1050 = vadd.f32 %v924, %v1009
      %v1051 = vadd.f32 %v925, %v1012
      %v1052 = vadd.f32 %v926, %v1014
      %v1053 = vadd.f32 %v927, %v1017
      %v1054 = vadd.f32 %v928, %v1019
      %v1055 = vadd.f32 %v929, %v1022
      %v1056 = vadd.f32 %v930, %v1024
      %s1057 = sadd.s32 %s253, 1
      %s1058 = smul.u32 %s1057, 24
      %s1059 = scalar_lea.vmem %s231, %s1058
      %v1060 = vld [vmem:[%s1059] sm:$0xff]
      %v1061 = vld [vmem:[%s1059 + $0x8] sm:$0xff]
      %v1062 = vld [vmem:[%s1059 + $0x10] sm:$0x3f]
      %v1063 = vld [vmem:[%s1059 + $0x18] sm:$0xff]
      %v1064 = vld [vmem:[%s1059 + $0x20] sm:$0xff]
      %v1065 = vld [vmem:[%s1059 + $0x28] sm:$0x3f]
      %v1066 = vld [vmem:[%s1059 + $0x30] sm:$0xff]
      %v1067 = vld [vmem:[%s1059 + $0x38] sm:$0xff]
      %v1068 = vld [vmem:[%s1059 + $0x40] sm:$0x3f]
      %v1069 = vld [vmem:[%s1059 + $0x48] sm:$0xff]
      %v1070 = vld [vmem:[%s1059 + $0x50] sm:$0xff]
      %v1071 = vld [vmem:[%s1059 + $0x58] sm:$0x3f]
      %v1072 = vld [vmem:[%s1059 + $0x60] sm:$0xff]
      %v1073 = vld [vmem:[%s1059 + $0x68] sm:$0xff]
      %v1074 = vld [vmem:[%s1059 + $0x70] sm:$0x3f]
      %v1075 = vld [vmem:[%s1059 + $0x78] sm:$0xff]
      %v1076 = vld [vmem:[%s1059 + $0x80] sm:$0xff]
      %v1077 = vld [vmem:[%s1059 + $0x88] sm:$0x3f]
      %v1078 = vld [vmem:[%s1059 + $0x90] sm:$0xff]
      %v1079 = vld [vmem:[%s1059 + $0x98] sm:$0xff]
      %v1080 = vld [vmem:[%s1059 + $0xa0] sm:$0x3f]
      %v1081 = vld [vmem:[%s1059 + $0xa8] sm:$0xff]
      %v1082 = vld [vmem:[%s1059 + $0xb0] sm:$0xff]
      %v1083 = vld [vmem:[%s1059 + $0xb8] sm:$0x3f]
      %s1084 = scalar_lea.vmem %s235, 8
      %v1085 = vld [vmem:[%s1084] sm:$0x1]
      %v1086 = vlaneseq
      %v1087 = vshrl.u32 %v1086, 7
      %v1088 = vsub.s32 0, %v1087
      %v1089 = vrot.slane %v1085, %v1088
      %v1090 = vmul.f32 %v1060, %v1089
      %v1091 = vmul.f32 %v1061, %v1089
      %v1092 = vmul.f32 %v1063, %v1089
      %v1093 = vmul.f32 %v1064, %v1089
      %v1094 = vmul.f32 %v1066, %v1089
      %v1095 = vmul.f32 %v1067, %v1089
      %v1096 = vmul.f32 %v1069, %v1089
      %v1097 = vmul.f32 %v1070, %v1089
      %v1098 = vmul.f32 %v1072, %v1089
      %v1099 = vmul.f32 %v1073, %v1089
      %v1100 = vmul.f32 %v1075, %v1089
      %v1101 = vmul.f32 %v1076, %v1089
      %v1102 = vmul.f32 %v1078, %v1089
      %v1103 = vmul.f32 %v1079, %v1089
      %v1104 = vmul.f32 %v1081, %v1089
      %v1105 = vmul.f32 %v1082, %v1089
      %v1106 = vadd.f32 %v1041, %v1090
      %v1107 = vadd.f32 %v1042, %v1091
      %v1108 = vadd.f32 %v1043, %v1092
      %v1109 = vadd.f32 %v1044, %v1093
      %v1110 = vadd.f32 %v1045, %v1094
      %v1111 = vadd.f32 %v1046, %v1095
      %v1112 = vadd.f32 %v1047, %v1096
      %v1113 = vadd.f32 %v1048, %v1097
      %v1114 = vadd.f32 %v1049, %v1098
      %v1115 = vadd.f32 %v1050, %v1099
      %v1116 = vadd.f32 %v1051, %v1100
      %v1117 = vadd.f32 %v1052, %v1101
      %v1118 = vadd.f32 %v1053, %v1102
      %v1119 = vadd.f32 %v1054, %v1103
      %v1120 = vadd.f32 %v1055, %v1104
      %v1121 = vadd.f32 %v1056, %v1105
      %v1122 = vld [vmem:[%s1084 + $0x1] sm:$0x1]
      %v1123 = vlaneseq
      %v1124 = vshrl.u32 %v1123, 7
      %v1125 = vsub.s32 0, %v1124
      %v1126 = vrot.slane %v1122, %v1125
      %v1127 = vmul.f32 %v1060, %v1126
      %v1128 = vmul.f32 %v1061, %v1126
      %v1129 = vmul.f32 %v1062, %v1126
      %v1130 = vmul.f32 %v1063, %v1126
      %v1131 = vmul.f32 %v1064, %v1126
      %v1132 = vmul.f32 %v1065, %v1126
      %v1133 = vmul.f32 %v1066, %v1126
      %v1134 = vmul.f32 %v1067, %v1126
      %v1135 = vmul.f32 %v1068, %v1126
      %v1136 = vmul.f32 %v1069, %v1126
      %v1137 = vmul.f32 %v1070, %v1126
      %v1138 = vmul.f32 %v1071, %v1126
      %v1139 = vmul.f32 %v1072, %v1126
      %v1140 = vmul.f32 %v1073, %v1126
      %v1141 = vmul.f32 %v1074, %v1126
      %v1142 = vmul.f32 %v1075, %v1126
      %v1143 = vmul.f32 %v1076, %v1126
      %v1144 = vmul.f32 %v1077, %v1126
      %v1145 = vmul.f32 %v1078, %v1126
      %v1146 = vmul.f32 %v1079, %v1126
      %v1147 = vmul.f32 %v1080, %v1126
      %v1148 = vmul.f32 %v1081, %v1126
      %v1149 = vmul.f32 %v1082, %v1126
      %v1150 = vmul.f32 %v1083, %v1126
      %v1175 = vrot.slane %v1127, 1
      %v1176 = vrot.slane %v1128, 1
      %v1177 = vsel %vm354, %v1175, %v1176
      %v1178 = vrot.slane %v1129, 1
      %v1179 = vsel %vm354, %v1176, %v1178
      %v1180 = vrot.slane %v1130, 1
      %v1181 = vrot.slane %v1131, 1
      %v1182 = vsel %vm354, %v1180, %v1181
      %v1183 = vrot.slane %v1132, 1
      %v1184 = vsel %vm354, %v1181, %v1183
      %v1185 = vrot.slane %v1133, 1
      %v1186 = vrot.slane %v1134, 1
      %v1187 = vsel %vm354, %v1185, %v1186
      %v1188 = vrot.slane %v1135, 1
      %v1189 = vsel %vm354, %v1186, %v1188
      %v1190 = vrot.slane %v1136, 1
      %v1191 = vrot.slane %v1137, 1
      %v1192 = vsel %vm354, %v1190, %v1191
      %v1193 = vrot.slane %v1138, 1
      %v1194 = vsel %vm354, %v1191, %v1193
      %v1195 = vrot.slane %v1139, 1
      %v1196 = vrot.slane %v1140, 1
      %v1197 = vsel %vm354, %v1195, %v1196
      %v1198 = vrot.slane %v1141, 1
      %v1199 = vsel %vm354, %v1196, %v1198
      %v1200 = vrot.slane %v1142, 1
      %v1201 = vrot.slane %v1143, 1
      %v1202 = vsel %vm354, %v1200, %v1201
      %v1203 = vrot.slane %v1144, 1
      %v1204 = vsel %vm354, %v1201, %v1203
      %v1205 = vrot.slane %v1145, 1
      %v1206 = vrot.slane %v1146, 1
      %v1207 = vsel %vm354, %v1205, %v1206
      %v1208 = vrot.slane %v1147, 1
      %v1209 = vsel %vm354, %v1206, %v1208
      %v1210 = vrot.slane %v1148, 1
      %v1211 = vrot.slane %v1149, 1
      %v1212 = vsel %vm354, %v1210, %v1211
      %v1213 = vrot.slane %v1150, 1
      %v1214 = vsel %vm354, %v1211, %v1213
      %v1231 = vadd.f32 %v1106, %v1177
      %v1232 = vadd.f32 %v1107, %v1179
      %v1233 = vadd.f32 %v1108, %v1182
      %v1234 = vadd.f32 %v1109, %v1184
      %v1235 = vadd.f32 %v1110, %v1187
      %v1236 = vadd.f32 %v1111, %v1189
      %v1237 = vadd.f32 %v1112, %v1192
      %v1238 = vadd.f32 %v1113, %v1194
      %v1239 = vadd.f32 %v1114, %v1197
      %v1240 = vadd.f32 %v1115, %v1199
      %v1241 = vadd.f32 %v1116, %v1202
      %v1242 = vadd.f32 %v1117, %v1204
      %v1243 = vadd.f32 %v1118, %v1207
      %v1244 = vadd.f32 %v1119, %v1209
      %v1245 = vadd.f32 %v1120, %v1212
      %v1246 = vadd.f32 %v1121, %v1214
      %v1247 = vld [vmem:[%s1084 + $0x2] sm:$0x1]
      %v1248 = vlaneseq
      %v1249 = vshrl.u32 %v1248, 7
      %v1250 = vsub.s32 0, %v1249
      %v1251 = vrot.slane %v1247, %v1250
      %v1252 = vmul.f32 %v1060, %v1251
      %v1253 = vmul.f32 %v1061, %v1251
      %v1254 = vmul.f32 %v1062, %v1251
      %v1255 = vmul.f32 %v1063, %v1251
      %v1256 = vmul.f32 %v1064, %v1251
      %v1257 = vmul.f32 %v1065, %v1251
      %v1258 = vmul.f32 %v1066, %v1251
      %v1259 = vmul.f32 %v1067, %v1251
      %v1260 = vmul.f32 %v1068, %v1251
      %v1261 = vmul.f32 %v1069, %v1251
      %v1262 = vmul.f32 %v1070, %v1251
      %v1263 = vmul.f32 %v1071, %v1251
      %v1264 = vmul.f32 %v1072, %v1251
      %v1265 = vmul.f32 %v1073, %v1251
      %v1266 = vmul.f32 %v1074, %v1251
      %v1267 = vmul.f32 %v1075, %v1251
      %v1268 = vmul.f32 %v1076, %v1251
      %v1269 = vmul.f32 %v1077, %v1251
      %v1270 = vmul.f32 %v1078, %v1251
      %v1271 = vmul.f32 %v1079, %v1251
      %v1272 = vmul.f32 %v1080, %v1251
      %v1273 = vmul.f32 %v1081, %v1251
      %v1274 = vmul.f32 %v1082, %v1251
      %v1275 = vmul.f32 %v1083, %v1251
      %v1300 = vrot.slane %v1252, 2
      %v1301 = vrot.slane %v1253, 2
      %v1302 = vsel %vm480, %v1300, %v1301
      %v1303 = vrot.slane %v1254, 2
      %v1304 = vsel %vm480, %v1301, %v1303
      %v1305 = vrot.slane %v1255, 2
      %v1306 = vrot.slane %v1256, 2
      %v1307 = vsel %vm480, %v1305, %v1306
      %v1308 = vrot.slane %v1257, 2
      %v1309 = vsel %vm480, %v1306, %v1308
      %v1310 = vrot.slane %v1258, 2
      %v1311 = vrot.slane %v1259, 2
      %v1312 = vsel %vm480, %v1310, %v1311
      %v1313 = vrot.slane %v1260, 2
      %v1314 = vsel %vm480, %v1311, %v1313
      %v1315 = vrot.slane %v1261, 2
      %v1316 = vrot.slane %v1262, 2
      %v1317 = vsel %vm480, %v1315, %v1316
      %v1318 = vrot.slane %v1263, 2
      %v1319 = vsel %vm480, %v1316, %v1318
      %v1320 = vrot.slane %v1264, 2
      %v1321 = vrot.slane %v1265, 2
      %v1322 = vsel %vm480, %v1320, %v1321
      %v1323 = vrot.slane %v1266, 2
      %v1324 = vsel %vm480, %v1321, %v1323
      %v1325 = vrot.slane %v1267, 2
      %v1326 = vrot.slane %v1268, 2
      %v1327 = vsel %vm480, %v1325, %v1326
      %v1328 = vrot.slane %v1269, 2
      %v1329 = vsel %vm480, %v1326, %v1328
      %v1330 = vrot.slane %v1270, 2
      %v1331 = vrot.slane %v1271, 2
      %v1332 = vsel %vm480, %v1330, %v1331
      %v1333 = vrot.slane %v1272, 2
      %v1334 = vsel %vm480, %v1331, %v1333
      %v1335 = vrot.slane %v1273, 2
      %v1336 = vrot.slane %v1274, 2
      %v1337 = vsel %vm480, %v1335, %v1336
      %v1338 = vrot.slane %v1275, 2
      %v1339 = vsel %vm480, %v1336, %v1338
      %v1356 = vadd.f32 %v1231, %v1302
      %v1357 = vadd.f32 %v1232, %v1304
      %v1358 = vadd.f32 %v1233, %v1307
      %v1359 = vadd.f32 %v1234, %v1309
      %v1360 = vadd.f32 %v1235, %v1312
      %v1361 = vadd.f32 %v1236, %v1314
      %v1362 = vadd.f32 %v1237, %v1317
      %v1363 = vadd.f32 %v1238, %v1319
      %v1364 = vadd.f32 %v1239, %v1322
      %v1365 = vadd.f32 %v1240, %v1324
      %v1366 = vadd.f32 %v1241, %v1327
      %v1367 = vadd.f32 %v1242, %v1329
      %v1368 = vadd.f32 %v1243, %v1332
      %v1369 = vadd.f32 %v1244, %v1334
      %v1370 = vadd.f32 %v1245, %v1337
      %v1371 = vadd.f32 %v1246, %v1339
      %v1372 = vld [vmem:[%s1084 + $0x3] sm:$0x1]
      %v1373 = vlaneseq
      %v1374 = vshrl.u32 %v1373, 7
      %v1375 = vsub.s32 0, %v1374
      %v1376 = vrot.slane %v1372, %v1375
      %v1377 = vmul.f32 %v1060, %v1376
      %v1378 = vmul.f32 %v1061, %v1376
      %v1379 = vmul.f32 %v1062, %v1376
      %v1380 = vmul.f32 %v1063, %v1376
      %v1381 = vmul.f32 %v1064, %v1376
      %v1382 = vmul.f32 %v1065, %v1376
      %v1383 = vmul.f32 %v1066, %v1376
      %v1384 = vmul.f32 %v1067, %v1376
      %v1385 = vmul.f32 %v1068, %v1376
      %v1386 = vmul.f32 %v1069, %v1376
      %v1387 = vmul.f32 %v1070, %v1376
      %v1388 = vmul.f32 %v1071, %v1376
      %v1389 = vmul.f32 %v1072, %v1376
      %v1390 = vmul.f32 %v1073, %v1376
      %v1391 = vmul.f32 %v1074, %v1376
      %v1392 = vmul.f32 %v1075, %v1376
      %v1393 = vmul.f32 %v1076, %v1376
      %v1394 = vmul.f32 %v1077, %v1376
      %v1395 = vmul.f32 %v1078, %v1376
      %v1396 = vmul.f32 %v1079, %v1376
      %v1397 = vmul.f32 %v1080, %v1376
      %v1398 = vmul.f32 %v1081, %v1376
      %v1399 = vmul.f32 %v1082, %v1376
      %v1400 = vmul.f32 %v1083, %v1376
      %v1425 = vrot.slane %v1377, 3
      %v1426 = vrot.slane %v1378, 3
      %v1427 = vsel %vm606, %v1425, %v1426
      %v1428 = vrot.slane %v1379, 3
      %v1429 = vsel %vm606, %v1426, %v1428
      %v1430 = vrot.slane %v1380, 3
      %v1431 = vrot.slane %v1381, 3
      %v1432 = vsel %vm606, %v1430, %v1431
      %v1433 = vrot.slane %v1382, 3
      %v1434 = vsel %vm606, %v1431, %v1433
      %v1435 = vrot.slane %v1383, 3
      %v1436 = vrot.slane %v1384, 3
      %v1437 = vsel %vm606, %v1435, %v1436
      %v1438 = vrot.slane %v1385, 3
      %v1439 = vsel %vm606, %v1436, %v1438
      %v1440 = vrot.slane %v1386, 3
      %v1441 = vrot.slane %v1387, 3
      %v1442 = vsel %vm606, %v1440, %v1441
      %v1443 = vrot.slane %v1388, 3
      %v1444 = vsel %vm606, %v1441, %v1443
      %v1445 = vrot.slane %v1389, 3
      %v1446 = vrot.slane %v1390, 3
      %v1447 = vsel %vm606, %v1445, %v1446
      %v1448 = vrot.slane %v1391, 3
      %v1449 = vsel %vm606, %v1446, %v1448
      %v1450 = vrot.slane %v1392, 3
      %v1451 = vrot.slane %v1393, 3
      %v1452 = vsel %vm606, %v1450, %v1451
      %v1453 = vrot.slane %v1394, 3
      %v1454 = vsel %vm606, %v1451, %v1453
      %v1455 = vrot.slane %v1395, 3
      %v1456 = vrot.slane %v1396, 3
      %v1457 = vsel %vm606, %v1455, %v1456
      %v1458 = vrot.slane %v1397, 3
      %v1459 = vsel %vm606, %v1456, %v1458
      %v1460 = vrot.slane %v1398, 3
      %v1461 = vrot.slane %v1399, 3
      %v1462 = vsel %vm606, %v1460, %v1461
      %v1463 = vrot.slane %v1400, 3
      %v1464 = vsel %vm606, %v1461, %v1463
      %v1481 = vadd.f32 %v1356, %v1427
      %v1482 = vadd.f32 %v1357, %v1429
      %v1483 = vadd.f32 %v1358, %v1432
      %v1484 = vadd.f32 %v1359, %v1434
      %v1485 = vadd.f32 %v1360, %v1437
      %v1486 = vadd.f32 %v1361, %v1439
      %v1487 = vadd.f32 %v1362, %v1442
      %v1488 = vadd.f32 %v1363, %v1444
      %v1489 = vadd.f32 %v1364, %v1447
      %v1490 = vadd.f32 %v1365, %v1449
      %v1491 = vadd.f32 %v1366, %v1452
      %v1492 = vadd.f32 %v1367, %v1454
      %v1493 = vadd.f32 %v1368, %v1457
      %v1494 = vadd.f32 %v1369, %v1459
      %v1495 = vadd.f32 %v1370, %v1462
      %v1496 = vadd.f32 %v1371, %v1464
      %v1497 = vld [vmem:[%s1084 + $0x4] sm:$0x1]
      %v1498 = vlaneseq
      %v1499 = vshrl.u32 %v1498, 7
      %v1500 = vsub.s32 0, %v1499
      %v1501 = vrot.slane %v1497, %v1500
      %v1502 = vmul.f32 %v1060, %v1501
      %v1503 = vmul.f32 %v1061, %v1501
      %v1504 = vmul.f32 %v1062, %v1501
      %v1505 = vmul.f32 %v1063, %v1501
      %v1506 = vmul.f32 %v1064, %v1501
      %v1507 = vmul.f32 %v1065, %v1501
      %v1508 = vmul.f32 %v1066, %v1501
      %v1509 = vmul.f32 %v1067, %v1501
      %v1510 = vmul.f32 %v1068, %v1501
      %v1511 = vmul.f32 %v1069, %v1501
      %v1512 = vmul.f32 %v1070, %v1501
      %v1513 = vmul.f32 %v1071, %v1501
      %v1514 = vmul.f32 %v1072, %v1501
      %v1515 = vmul.f32 %v1073, %v1501
      %v1516 = vmul.f32 %v1074, %v1501
      %v1517 = vmul.f32 %v1075, %v1501
      %v1518 = vmul.f32 %v1076, %v1501
      %v1519 = vmul.f32 %v1077, %v1501
      %v1520 = vmul.f32 %v1078, %v1501
      %v1521 = vmul.f32 %v1079, %v1501
      %v1522 = vmul.f32 %v1080, %v1501
      %v1523 = vmul.f32 %v1081, %v1501
      %v1524 = vmul.f32 %v1082, %v1501
      %v1525 = vmul.f32 %v1083, %v1501
      %v1550 = vrot.slane %v1502, 4
      %v1551 = vrot.slane %v1503, 4
      %v1552 = vsel %vm732, %v1550, %v1551
      %v1553 = vrot.slane %v1504, 4
      %v1554 = vsel %vm732, %v1551, %v1553
      %v1555 = vrot.slane %v1505, 4
      %v1556 = vrot.slane %v1506, 4
      %v1557 = vsel %vm732, %v1555, %v1556
      %v1558 = vrot.slane %v1507, 4
      %v1559 = vsel %vm732, %v1556, %v1558
      %v1560 = vrot.slane %v1508, 4
      %v1561 = vrot.slane %v1509, 4
      %v1562 = vsel %vm732, %v1560, %v1561
      %v1563 = vrot.slane %v1510, 4
      %v1564 = vsel %vm732, %v1561, %v1563
      %v1565 = vrot.slane %v1511, 4
      %v1566 = vrot.slane %v1512, 4
      %v1567 = vsel %vm732, %v1565, %v1566
      %v1568 = vrot.slane %v1513, 4
      %v1569 = vsel %vm732, %v1566, %v1568
      %v1570 = vrot.slane %v1514, 4
      %v1571 = vrot.slane %v1515, 4
      %v1572 = vsel %vm732, %v1570, %v1571
      %v1573 = vrot.slane %v1516, 4
      %v1574 = vsel %vm732, %v1571, %v1573
      %v1575 = vrot.slane %v1517, 4
      %v1576 = vrot.slane %v1518, 4
      %v1577 = vsel %vm732, %v1575, %v1576
      %v1578 = vrot.slane %v1519, 4
      %v1579 = vsel %vm732, %v1576, %v1578
      %v1580 = vrot.slane %v1520, 4
      %v1581 = vrot.slane %v1521, 4
      %v1582 = vsel %vm732, %v1580, %v1581
      %v1583 = vrot.slane %v1522, 4
      %v1584 = vsel %vm732, %v1581, %v1583
      %v1585 = vrot.slane %v1523, 4
      %v1586 = vrot.slane %v1524, 4
      %v1587 = vsel %vm732, %v1585, %v1586
      %v1588 = vrot.slane %v1525, 4
      %v1589 = vsel %vm732, %v1586, %v1588
      %v1606 = vadd.f32 %v1481, %v1552
      %v1607 = vadd.f32 %v1482, %v1554
      %v1608 = vadd.f32 %v1483, %v1557
      %v1609 = vadd.f32 %v1484, %v1559
      %v1610 = vadd.f32 %v1485, %v1562
      %v1611 = vadd.f32 %v1486, %v1564
      %v1612 = vadd.f32 %v1487, %v1567
      %v1613 = vadd.f32 %v1488, %v1569
      %v1614 = vadd.f32 %v1489, %v1572
      %v1615 = vadd.f32 %v1490, %v1574
      %v1616 = vadd.f32 %v1491, %v1577
      %v1617 = vadd.f32 %v1492, %v1579
      %v1618 = vadd.f32 %v1493, %v1582
      %v1619 = vadd.f32 %v1494, %v1584
      %v1620 = vadd.f32 %v1495, %v1587
      %v1621 = vadd.f32 %v1496, %v1589
      %v1622 = vld [vmem:[%s1084 + $0x5] sm:$0x1]
      %v1623 = vlaneseq
      %v1624 = vshrl.u32 %v1623, 7
      %v1625 = vsub.s32 0, %v1624
      %v1626 = vrot.slane %v1622, %v1625
      %v1627 = vmul.f32 %v1060, %v1626
      %v1628 = vmul.f32 %v1061, %v1626
      %v1629 = vmul.f32 %v1062, %v1626
      %v1630 = vmul.f32 %v1063, %v1626
      %v1631 = vmul.f32 %v1064, %v1626
      %v1632 = vmul.f32 %v1065, %v1626
      %v1633 = vmul.f32 %v1066, %v1626
      %v1634 = vmul.f32 %v1067, %v1626
      %v1635 = vmul.f32 %v1068, %v1626
      %v1636 = vmul.f32 %v1069, %v1626
      %v1637 = vmul.f32 %v1070, %v1626
      %v1638 = vmul.f32 %v1071, %v1626
      %v1639 = vmul.f32 %v1072, %v1626
      %v1640 = vmul.f32 %v1073, %v1626
      %v1641 = vmul.f32 %v1074, %v1626
      %v1642 = vmul.f32 %v1075, %v1626
      %v1643 = vmul.f32 %v1076, %v1626
      %v1644 = vmul.f32 %v1077, %v1626
      %v1645 = vmul.f32 %v1078, %v1626
      %v1646 = vmul.f32 %v1079, %v1626
      %v1647 = vmul.f32 %v1080, %v1626
      %v1648 = vmul.f32 %v1081, %v1626
      %v1649 = vmul.f32 %v1082, %v1626
      %v1650 = vmul.f32 %v1083, %v1626
      %v1675 = vrot.slane %v1627, 5
      %v1676 = vrot.slane %v1628, 5
      %v1677 = vsel %vm858, %v1675, %v1676
      %v1678 = vrot.slane %v1629, 5
      %v1679 = vsel %vm858, %v1676, %v1678
      %v1680 = vrot.slane %v1630, 5
      %v1681 = vrot.slane %v1631, 5
      %v1682 = vsel %vm858, %v1680, %v1681
      %v1683 = vrot.slane %v1632, 5
      %v1684 = vsel %vm858, %v1681, %v1683
      %v1685 = vrot.slane %v1633, 5
      %v1686 = vrot.slane %v1634, 5
      %v1687 = vsel %vm858, %v1685, %v1686
      %v1688 = vrot.slane %v1635, 5
      %v1689 = vsel %vm858, %v1686, %v1688
      %v1690 = vrot.slane %v1636, 5
      %v1691 = vrot.slane %v1637, 5
      %v1692 = vsel %vm858, %v1690, %v1691
      %v1693 = vrot.slane %v1638, 5
      %v1694 = vsel %vm858, %v1691, %v1693
      %v1695 = vrot.slane %v1639, 5
      %v1696 = vrot.slane %v1640, 5
      %v1697 = vsel %vm858, %v1695, %v1696
      %v1698 = vrot.slane %v1641, 5
      %v1699 = vsel %vm858, %v1696, %v1698
      %v1700 = vrot.slane %v1642, 5
      %v1701 = vrot.slane %v1643, 5
      %v1702 = vsel %vm858, %v1700, %v1701
      %v1703 = vrot.slane %v1644, 5
      %v1704 = vsel %vm858, %v1701, %v1703
      %v1705 = vrot.slane %v1645, 5
      %v1706 = vrot.slane %v1646, 5
      %v1707 = vsel %vm858, %v1705, %v1706
      %v1708 = vrot.slane %v1647, 5
      %v1709 = vsel %vm858, %v1706, %v1708
      %v1710 = vrot.slane %v1648, 5
      %v1711 = vrot.slane %v1649, 5
      %v1712 = vsel %vm858, %v1710, %v1711
      %v1713 = vrot.slane %v1650, 5
      %v1714 = vsel %vm858, %v1711, %v1713
      %v1731 = vadd.f32 %v1606, %v1677
      %v1732 = vadd.f32 %v1607, %v1679
      %v1733 = vadd.f32 %v1608, %v1682
      %v1734 = vadd.f32 %v1609, %v1684
      %v1735 = vadd.f32 %v1610, %v1687
      %v1736 = vadd.f32 %v1611, %v1689
      %v1737 = vadd.f32 %v1612, %v1692
      %v1738 = vadd.f32 %v1613, %v1694
      %v1739 = vadd.f32 %v1614, %v1697
      %v1740 = vadd.f32 %v1615, %v1699
      %v1741 = vadd.f32 %v1616, %v1702
      %v1742 = vadd.f32 %v1617, %v1704
      %v1743 = vadd.f32 %v1618, %v1707
      %v1744 = vadd.f32 %v1619, %v1709
      %v1745 = vadd.f32 %v1620, %v1712
      %v1746 = vadd.f32 %v1621, %v1714
      %v1747 = vld [vmem:[%s1084 + $0x6] sm:$0x1]
      %v1748 = vlaneseq
      %v1749 = vshrl.u32 %v1748, 7
      %v1750 = vsub.s32 0, %v1749
      %v1751 = vrot.slane %v1747, %v1750
      %v1752 = vmul.f32 %v1060, %v1751
      %v1753 = vmul.f32 %v1061, %v1751
      %v1754 = vmul.f32 %v1062, %v1751
      %v1755 = vmul.f32 %v1063, %v1751
      %v1756 = vmul.f32 %v1064, %v1751
      %v1757 = vmul.f32 %v1065, %v1751
      %v1758 = vmul.f32 %v1066, %v1751
      %v1759 = vmul.f32 %v1067, %v1751
      %v1760 = vmul.f32 %v1068, %v1751
      %v1761 = vmul.f32 %v1069, %v1751
      %v1762 = vmul.f32 %v1070, %v1751
      %v1763 = vmul.f32 %v1071, %v1751
      %v1764 = vmul.f32 %v1072, %v1751
      %v1765 = vmul.f32 %v1073, %v1751
      %v1766 = vmul.f32 %v1074, %v1751
      %v1767 = vmul.f32 %v1075, %v1751
      %v1768 = vmul.f32 %v1076, %v1751
      %v1769 = vmul.f32 %v1077, %v1751
      %v1770 = vmul.f32 %v1078, %v1751
      %v1771 = vmul.f32 %v1079, %v1751
      %v1772 = vmul.f32 %v1080, %v1751
      %v1773 = vmul.f32 %v1081, %v1751
      %v1774 = vmul.f32 %v1082, %v1751
      %v1775 = vmul.f32 %v1083, %v1751
      %v1800 = vrot.slane %v1752, 6
      %v1801 = vrot.slane %v1753, 6
      %v1802 = vsel %vm984, %v1800, %v1801
      %v1803 = vrot.slane %v1754, 6
      %v1804 = vsel %vm984, %v1801, %v1803
      %v1805 = vrot.slane %v1755, 6
      %v1806 = vrot.slane %v1756, 6
      %v1807 = vsel %vm984, %v1805, %v1806
      %v1808 = vrot.slane %v1757, 6
      %v1809 = vsel %vm984, %v1806, %v1808
      %v1810 = vrot.slane %v1758, 6
      %v1811 = vrot.slane %v1759, 6
      %v1812 = vsel %vm984, %v1810, %v1811
      %v1813 = vrot.slane %v1760, 6
      %v1814 = vsel %vm984, %v1811, %v1813
      %v1815 = vrot.slane %v1761, 6
      %v1816 = vrot.slane %v1762, 6
      %v1817 = vsel %vm984, %v1815, %v1816
      %v1818 = vrot.slane %v1763, 6
      %v1819 = vsel %vm984, %v1816, %v1818
      %v1820 = vrot.slane %v1764, 6
      %v1821 = vrot.slane %v1765, 6
      %v1822 = vsel %vm984, %v1820, %v1821
      %v1823 = vrot.slane %v1766, 6
      %v1824 = vsel %vm984, %v1821, %v1823
      %v1825 = vrot.slane %v1767, 6
      %v1826 = vrot.slane %v1768, 6
      %v1827 = vsel %vm984, %v1825, %v1826
      %v1828 = vrot.slane %v1769, 6
      %v1829 = vsel %vm984, %v1826, %v1828
      %v1830 = vrot.slane %v1770, 6
      %v1831 = vrot.slane %v1771, 6
      %v1832 = vsel %vm984, %v1830, %v1831
      %v1833 = vrot.slane %v1772, 6
      %v1834 = vsel %vm984, %v1831, %v1833
      %v1835 = vrot.slane %v1773, 6
      %v1836 = vrot.slane %v1774, 6
      %v1837 = vsel %vm984, %v1835, %v1836
      %v1838 = vrot.slane %v1775, 6
      %v1839 = vsel %vm984, %v1836, %v1838
      %v1856 = vadd.f32 %v1731, %v1802
      %v1857 = vadd.f32 %v1732, %v1804
      %v1858 = vadd.f32 %v1733, %v1807
      %v1859 = vadd.f32 %v1734, %v1809
      %v1860 = vadd.f32 %v1735, %v1812
      %v1861 = vadd.f32 %v1736, %v1814
      %v1862 = vadd.f32 %v1737, %v1817
      %v1863 = vadd.f32 %v1738, %v1819
      %v1864 = vadd.f32 %v1739, %v1822
      %v1865 = vadd.f32 %v1740, %v1824
      %v1866 = vadd.f32 %v1741, %v1827
      %v1867 = vadd.f32 %v1742, %v1829
      %v1868 = vadd.f32 %v1743, %v1832
      %v1869 = vadd.f32 %v1744, %v1834
      %v1870 = vadd.f32 %v1745, %v1837
      %v1871 = vadd.f32 %v1746, %v1839
      %s1872 = sadd.s32 %s253, 2
      %s1873 = smul.u32 %s1872, 24
      %s1874 = scalar_lea.vmem %s231, %s1873
      %v1875 = vld [vmem:[%s1874] sm:$0xff]
      %v1876 = vld [vmem:[%s1874 + $0x8] sm:$0xff]
      %v1877 = vld [vmem:[%s1874 + $0x10] sm:$0x3f]
      %v1878 = vld [vmem:[%s1874 + $0x18] sm:$0xff]
      %v1879 = vld [vmem:[%s1874 + $0x20] sm:$0xff]
      %v1880 = vld [vmem:[%s1874 + $0x28] sm:$0x3f]
      %v1881 = vld [vmem:[%s1874 + $0x30] sm:$0xff]
      %v1882 = vld [vmem:[%s1874 + $0x38] sm:$0xff]
      %v1883 = vld [vmem:[%s1874 + $0x40] sm:$0x3f]
      %v1884 = vld [vmem:[%s1874 + $0x48] sm:$0xff]
      %v1885 = vld [vmem:[%s1874 + $0x50] sm:$0xff]
      %v1886 = vld [vmem:[%s1874 + $0x58] sm:$0x3f]
      %v1887 = vld [vmem:[%s1874 + $0x60] sm:$0xff]
      %v1888 = vld [vmem:[%s1874 + $0x68] sm:$0xff]
      %v1889 = vld [vmem:[%s1874 + $0x70] sm:$0x3f]
      %v1890 = vld [vmem:[%s1874 + $0x78] sm:$0xff]
      %v1891 = vld [vmem:[%s1874 + $0x80] sm:$0xff]
      %v1892 = vld [vmem:[%s1874 + $0x88] sm:$0x3f]
      %v1893 = vld [vmem:[%s1874 + $0x90] sm:$0xff]
      %v1894 = vld [vmem:[%s1874 + $0x98] sm:$0xff]
      %v1895 = vld [vmem:[%s1874 + $0xa0] sm:$0x3f]
      %v1896 = vld [vmem:[%s1874 + $0xa8] sm:$0xff]
      %v1897 = vld [vmem:[%s1874 + $0xb0] sm:$0xff]
      %v1898 = vld [vmem:[%s1874 + $0xb8] sm:$0x3f]
      %s1899 = scalar_lea.vmem %s235, 16
      %v1900 = vld [vmem:[%s1899] sm:$0x1]
      %v1901 = vlaneseq
      %v1902 = vshrl.u32 %v1901, 7
      %v1903 = vsub.s32 0, %v1902
      %v1904 = vrot.slane %v1900, %v1903
      %v1905 = vmul.f32 %v1875, %v1904
      %v1906 = vmul.f32 %v1876, %v1904
      %v1907 = vmul.f32 %v1878, %v1904
      %v1908 = vmul.f32 %v1879, %v1904
      %v1909 = vmul.f32 %v1881, %v1904
      %v1910 = vmul.f32 %v1882, %v1904
      %v1911 = vmul.f32 %v1884, %v1904
      %v1912 = vmul.f32 %v1885, %v1904
      %v1913 = vmul.f32 %v1887, %v1904
      %v1914 = vmul.f32 %v1888, %v1904
      %v1915 = vmul.f32 %v1890, %v1904
      %v1916 = vmul.f32 %v1891, %v1904
      %v1917 = vmul.f32 %v1893, %v1904
      %v1918 = vmul.f32 %v1894, %v1904
      %v1919 = vmul.f32 %v1896, %v1904
      %v1920 = vmul.f32 %v1897, %v1904
      %v1921 = vadd.f32 %v1856, %v1905
      %v1922 = vadd.f32 %v1857, %v1906
      %v1923 = vadd.f32 %v1858, %v1907
      %v1924 = vadd.f32 %v1859, %v1908
      %v1925 = vadd.f32 %v1860, %v1909
      %v1926 = vadd.f32 %v1861, %v1910
      %v1927 = vadd.f32 %v1862, %v1911
      %v1928 = vadd.f32 %v1863, %v1912
      %v1929 = vadd.f32 %v1864, %v1913
      %v1930 = vadd.f32 %v1865, %v1914
      %v1931 = vadd.f32 %v1866, %v1915
      %v1932 = vadd.f32 %v1867, %v1916
      %v1933 = vadd.f32 %v1868, %v1917
      %v1934 = vadd.f32 %v1869, %v1918
      %v1935 = vadd.f32 %v1870, %v1919
      %v1936 = vadd.f32 %v1871, %v1920
      %v1937 = vld [vmem:[%s1899 + $0x1] sm:$0x1]
      %v1938 = vlaneseq
      %v1939 = vshrl.u32 %v1938, 7
      %v1940 = vsub.s32 0, %v1939
      %v1941 = vrot.slane %v1937, %v1940
      %v1942 = vmul.f32 %v1875, %v1941
      %v1943 = vmul.f32 %v1876, %v1941
      %v1944 = vmul.f32 %v1877, %v1941
      %v1945 = vmul.f32 %v1878, %v1941
      %v1946 = vmul.f32 %v1879, %v1941
      %v1947 = vmul.f32 %v1880, %v1941
      %v1948 = vmul.f32 %v1881, %v1941
      %v1949 = vmul.f32 %v1882, %v1941
      %v1950 = vmul.f32 %v1883, %v1941
      %v1951 = vmul.f32 %v1884, %v1941
      %v1952 = vmul.f32 %v1885, %v1941
      %v1953 = vmul.f32 %v1886, %v1941
      %v1954 = vmul.f32 %v1887, %v1941
      %v1955 = vmul.f32 %v1888, %v1941
      %v1956 = vmul.f32 %v1889, %v1941
      %v1957 = vmul.f32 %v1890, %v1941
      %v1958 = vmul.f32 %v1891, %v1941
      %v1959 = vmul.f32 %v1892, %v1941
      %v1960 = vmul.f32 %v1893, %v1941
      %v1961 = vmul.f32 %v1894, %v1941
      %v1962 = vmul.f32 %v1895, %v1941
      %v1963 = vmul.f32 %v1896, %v1941
      %v1964 = vmul.f32 %v1897, %v1941
      %v1965 = vmul.f32 %v1898, %v1941
      %v1990 = vrot.slane %v1942, 1
      %v1991 = vrot.slane %v1943, 1
      %v1992 = vsel %vm354, %v1990, %v1991
      %v1993 = vrot.slane %v1944, 1
      %v1994 = vsel %vm354, %v1991, %v1993
      %v1995 = vrot.slane %v1945, 1
      %v1996 = vrot.slane %v1946, 1
      %v1997 = vsel %vm354, %v1995, %v1996
      %v1998 = vrot.slane %v1947, 1
      %v1999 = vsel %vm354, %v1996, %v1998
      %v2000 = vrot.slane %v1948, 1
      %v2001 = vrot.slane %v1949, 1
      %v2002 = vsel %vm354, %v2000, %v2001
      %v2003 = vrot.slane %v1950, 1
      %v2004 = vsel %vm354, %v2001, %v2003
      %v2005 = vrot.slane %v1951, 1
      %v2006 = vrot.slane %v1952, 1
      %v2007 = vsel %vm354, %v2005, %v2006
      %v2008 = vrot.slane %v1953, 1
      %v2009 = vsel %vm354, %v2006, %v2008
      %v2010 = vrot.slane %v1954, 1
      %v2011 = vrot.slane %v1955, 1
      %v2012 = vsel %vm354, %v2010, %v2011
      %v2013 = vrot.slane %v1956, 1
      %v2014 = vsel %vm354, %v2011, %v2013
      %v2015 = vrot.slane %v1957, 1
      %v2016 = vrot.slane %v1958, 1
      %v2017 = vsel %vm354, %v2015, %v2016
      %v2018 = vrot.slane %v1959, 1
      %v2019 = vsel %vm354, %v2016, %v2018
      %v2020 = vrot.slane %v1960, 1
      %v2021 = vrot.slane %v1961, 1
      %v2022 = vsel %vm354, %v2020, %v2021
      %v2023 = vrot.slane %v1962, 1
      %v2024 = vsel %vm354, %v2021, %v2023
      %v2025 = vrot.slane %v1963, 1
      %v2026 = vrot.slane %v1964, 1
      %v2027 = vsel %vm354, %v2025, %v2026
      %v2028 = vrot.slane %v1965, 1
      %v2029 = vsel %vm354, %v2026, %v2028
      %v2046 = vadd.f32 %v1921, %v1992
      %v2047 = vadd.f32 %v1922, %v1994
      %v2048 = vadd.f32 %v1923, %v1997
      %v2049 = vadd.f32 %v1924, %v1999
      %v2050 = vadd.f32 %v1925, %v2002
      %v2051 = vadd.f32 %v1926, %v2004
      %v2052 = vadd.f32 %v1927, %v2007
      %v2053 = vadd.f32 %v1928, %v2009
      %v2054 = vadd.f32 %v1929, %v2012
      %v2055 = vadd.f32 %v1930, %v2014
      %v2056 = vadd.f32 %v1931, %v2017
      %v2057 = vadd.f32 %v1932, %v2019
      %v2058 = vadd.f32 %v1933, %v2022
      %v2059 = vadd.f32 %v1934, %v2024
      %v2060 = vadd.f32 %v1935, %v2027
      %v2061 = vadd.f32 %v1936, %v2029
      %v2062 = vld [vmem:[%s1899 + $0x2] sm:$0x1]
      %v2063 = vlaneseq
      %v2064 = vshrl.u32 %v2063, 7
      %v2065 = vsub.s32 0, %v2064
      %v2066 = vrot.slane %v2062, %v2065
      %v2067 = vmul.f32 %v1875, %v2066
      %v2068 = vmul.f32 %v1876, %v2066
      %v2069 = vmul.f32 %v1877, %v2066
      %v2070 = vmul.f32 %v1878, %v2066
      %v2071 = vmul.f32 %v1879, %v2066
      %v2072 = vmul.f32 %v1880, %v2066
      %v2073 = vmul.f32 %v1881, %v2066
      %v2074 = vmul.f32 %v1882, %v2066
      %v2075 = vmul.f32 %v1883, %v2066
      %v2076 = vmul.f32 %v1884, %v2066
      %v2077 = vmul.f32 %v1885, %v2066
      %v2078 = vmul.f32 %v1886, %v2066
      %v2079 = vmul.f32 %v1887, %v2066
      %v2080 = vmul.f32 %v1888, %v2066
      %v2081 = vmul.f32 %v1889, %v2066
      %v2082 = vmul.f32 %v1890, %v2066
      %v2083 = vmul.f32 %v1891, %v2066
      %v2084 = vmul.f32 %v1892, %v2066
      %v2085 = vmul.f32 %v1893, %v2066
      %v2086 = vmul.f32 %v1894, %v2066
      %v2087 = vmul.f32 %v1895, %v2066
      %v2088 = vmul.f32 %v1896, %v2066
      %v2089 = vmul.f32 %v1897, %v2066
      %v2090 = vmul.f32 %v1898, %v2066
      %v2115 = vrot.slane %v2067, 2
      %v2116 = vrot.slane %v2068, 2
      %v2117 = vsel %vm480, %v2115, %v2116
      %v2118 = vrot.slane %v2069, 2
      %v2119 = vsel %vm480, %v2116, %v2118
      %v2120 = vrot.slane %v2070, 2
      %v2121 = vrot.slane %v2071, 2
      %v2122 = vsel %vm480, %v2120, %v2121
      %v2123 = vrot.slane %v2072, 2
      %v2124 = vsel %vm480, %v2121, %v2123
      %v2125 = vrot.slane %v2073, 2
      %v2126 = vrot.slane %v2074, 2
      %v2127 = vsel %vm480, %v2125, %v2126
      %v2128 = vrot.slane %v2075, 2
      %v2129 = vsel %vm480, %v2126, %v2128
      %v2130 = vrot.slane %v2076, 2
      %v2131 = vrot.slane %v2077, 2
      %v2132 = vsel %vm480, %v2130, %v2131
      %v2133 = vrot.slane %v2078, 2
      %v2134 = vsel %vm480, %v2131, %v2133
      %v2135 = vrot.slane %v2079, 2
      %v2136 = vrot.slane %v2080, 2
      %v2137 = vsel %vm480, %v2135, %v2136
      %v2138 = vrot.slane %v2081, 2
      %v2139 = vsel %vm480, %v2136, %v2138
      %v2140 = vrot.slane %v2082, 2
      %v2141 = vrot.slane %v2083, 2
      %v2142 = vsel %vm480, %v2140, %v2141
      %v2143 = vrot.slane %v2084, 2
      %v2144 = vsel %vm480, %v2141, %v2143
      %v2145 = vrot.slane %v2085, 2
      %v2146 = vrot.slane %v2086, 2
      %v2147 = vsel %vm480, %v2145, %v2146
      %v2148 = vrot.slane %v2087, 2
      %v2149 = vsel %vm480, %v2146, %v2148
      %v2150 = vrot.slane %v2088, 2
      %v2151 = vrot.slane %v2089, 2
      %v2152 = vsel %vm480, %v2150, %v2151
      %v2153 = vrot.slane %v2090, 2
      %v2154 = vsel %vm480, %v2151, %v2153
      %v2171 = vadd.f32 %v2046, %v2117
      %v2172 = vadd.f32 %v2047, %v2119
      %v2173 = vadd.f32 %v2048, %v2122
      %v2174 = vadd.f32 %v2049, %v2124
      %v2175 = vadd.f32 %v2050, %v2127
      %v2176 = vadd.f32 %v2051, %v2129
      %v2177 = vadd.f32 %v2052, %v2132
      %v2178 = vadd.f32 %v2053, %v2134
      %v2179 = vadd.f32 %v2054, %v2137
      %v2180 = vadd.f32 %v2055, %v2139
      %v2181 = vadd.f32 %v2056, %v2142
      %v2182 = vadd.f32 %v2057, %v2144
      %v2183 = vadd.f32 %v2058, %v2147
      %v2184 = vadd.f32 %v2059, %v2149
      %v2185 = vadd.f32 %v2060, %v2152
      %v2186 = vadd.f32 %v2061, %v2154
      %v2187 = vld [vmem:[%s1899 + $0x3] sm:$0x1]
      %v2188 = vlaneseq
      %v2189 = vshrl.u32 %v2188, 7
      %v2190 = vsub.s32 0, %v2189
      %v2191 = vrot.slane %v2187, %v2190
      %v2192 = vmul.f32 %v1875, %v2191
      %v2193 = vmul.f32 %v1876, %v2191
      %v2194 = vmul.f32 %v1877, %v2191
      %v2195 = vmul.f32 %v1878, %v2191
      %v2196 = vmul.f32 %v1879, %v2191
      %v2197 = vmul.f32 %v1880, %v2191
      %v2198 = vmul.f32 %v1881, %v2191
      %v2199 = vmul.f32 %v1882, %v2191
      %v2200 = vmul.f32 %v1883, %v2191
      %v2201 = vmul.f32 %v1884, %v2191
      %v2202 = vmul.f32 %v1885, %v2191
      %v2203 = vmul.f32 %v1886, %v2191
      %v2204 = vmul.f32 %v1887, %v2191
      %v2205 = vmul.f32 %v1888, %v2191
      %v2206 = vmul.f32 %v1889, %v2191
      %v2207 = vmul.f32 %v1890, %v2191
      %v2208 = vmul.f32 %v1891, %v2191
      %v2209 = vmul.f32 %v1892, %v2191
      %v2210 = vmul.f32 %v1893, %v2191
      %v2211 = vmul.f32 %v1894, %v2191
      %v2212 = vmul.f32 %v1895, %v2191
      %v2213 = vmul.f32 %v1896, %v2191
      %v2214 = vmul.f32 %v1897, %v2191
      %v2215 = vmul.f32 %v1898, %v2191
      %v2240 = vrot.slane %v2192, 3
      %v2241 = vrot.slane %v2193, 3
      %v2242 = vsel %vm606, %v2240, %v2241
      %v2243 = vrot.slane %v2194, 3
      %v2244 = vsel %vm606, %v2241, %v2243
      %v2245 = vrot.slane %v2195, 3
      %v2246 = vrot.slane %v2196, 3
      %v2247 = vsel %vm606, %v2245, %v2246
      %v2248 = vrot.slane %v2197, 3
      %v2249 = vsel %vm606, %v2246, %v2248
      %v2250 = vrot.slane %v2198, 3
      %v2251 = vrot.slane %v2199, 3
      %v2252 = vsel %vm606, %v2250, %v2251
      %v2253 = vrot.slane %v2200, 3
      %v2254 = vsel %vm606, %v2251, %v2253
      %v2255 = vrot.slane %v2201, 3
      %v2256 = vrot.slane %v2202, 3
      %v2257 = vsel %vm606, %v2255, %v2256
      %v2258 = vrot.slane %v2203, 3
      %v2259 = vsel %vm606, %v2256, %v2258
      %v2260 = vrot.slane %v2204, 3
      %v2261 = vrot.slane %v2205, 3
      %v2262 = vsel %vm606, %v2260, %v2261
      %v2263 = vrot.slane %v2206, 3
      %v2264 = vsel %vm606, %v2261, %v2263
      %v2265 = vrot.slane %v2207, 3
      %v2266 = vrot.slane %v2208, 3
      %v2267 = vsel %vm606, %v2265, %v2266
      %v2268 = vrot.slane %v2209, 3
      %v2269 = vsel %vm606, %v2266, %v2268
      %v2270 = vrot.slane %v2210, 3
      %v2271 = vrot.slane %v2211, 3
      %v2272 = vsel %vm606, %v2270, %v2271
      %v2273 = vrot.slane %v2212, 3
      %v2274 = vsel %vm606, %v2271, %v2273
      %v2275 = vrot.slane %v2213, 3
      %v2276 = vrot.slane %v2214, 3
      %v2277 = vsel %vm606, %v2275, %v2276
      %v2278 = vrot.slane %v2215, 3
      %v2279 = vsel %vm606, %v2276, %v2278
      %v2296 = vadd.f32 %v2171, %v2242
      %v2297 = vadd.f32 %v2172, %v2244
      %v2298 = vadd.f32 %v2173, %v2247
      %v2299 = vadd.f32 %v2174, %v2249
      %v2300 = vadd.f32 %v2175, %v2252
      %v2301 = vadd.f32 %v2176, %v2254
      %v2302 = vadd.f32 %v2177, %v2257
      %v2303 = vadd.f32 %v2178, %v2259
      %v2304 = vadd.f32 %v2179, %v2262
      %v2305 = vadd.f32 %v2180, %v2264
      %v2306 = vadd.f32 %v2181, %v2267
      %v2307 = vadd.f32 %v2182, %v2269
      %v2308 = vadd.f32 %v2183, %v2272
      %v2309 = vadd.f32 %v2184, %v2274
      %v2310 = vadd.f32 %v2185, %v2277
      %v2311 = vadd.f32 %v2186, %v2279
      %v2312 = vld [vmem:[%s1899 + $0x4] sm:$0x1]
      %v2313 = vlaneseq
      %v2314 = vshrl.u32 %v2313, 7
      %v2315 = vsub.s32 0, %v2314
      %v2316 = vrot.slane %v2312, %v2315
      %v2317 = vmul.f32 %v1875, %v2316
      %v2318 = vmul.f32 %v1876, %v2316
      %v2319 = vmul.f32 %v1877, %v2316
      %v2320 = vmul.f32 %v1878, %v2316
      %v2321 = vmul.f32 %v1879, %v2316
      %v2322 = vmul.f32 %v1880, %v2316
      %v2323 = vmul.f32 %v1881, %v2316
      %v2324 = vmul.f32 %v1882, %v2316
      %v2325 = vmul.f32 %v1883, %v2316
      %v2326 = vmul.f32 %v1884, %v2316
      %v2327 = vmul.f32 %v1885, %v2316
      %v2328 = vmul.f32 %v1886, %v2316
      %v2329 = vmul.f32 %v1887, %v2316
      %v2330 = vmul.f32 %v1888, %v2316
      %v2331 = vmul.f32 %v1889, %v2316
      %v2332 = vmul.f32 %v1890, %v2316
      %v2333 = vmul.f32 %v1891, %v2316
      %v2334 = vmul.f32 %v1892, %v2316
      %v2335 = vmul.f32 %v1893, %v2316
      %v2336 = vmul.f32 %v1894, %v2316
      %v2337 = vmul.f32 %v1895, %v2316
      %v2338 = vmul.f32 %v1896, %v2316
      %v2339 = vmul.f32 %v1897, %v2316
      %v2340 = vmul.f32 %v1898, %v2316
      %v2365 = vrot.slane %v2317, 4
      %v2366 = vrot.slane %v2318, 4
      %v2367 = vsel %vm732, %v2365, %v2366
      %v2368 = vrot.slane %v2319, 4
      %v2369 = vsel %vm732, %v2366, %v2368
      %v2370 = vrot.slane %v2320, 4
      %v2371 = vrot.slane %v2321, 4
      %v2372 = vsel %vm732, %v2370, %v2371
      %v2373 = vrot.slane %v2322, 4
      %v2374 = vsel %vm732, %v2371, %v2373
      %v2375 = vrot.slane %v2323, 4
      %v2376 = vrot.slane %v2324, 4
      %v2377 = vsel %vm732, %v2375, %v2376
      %v2378 = vrot.slane %v2325, 4
      %v2379 = vsel %vm732, %v2376, %v2378
      %v2380 = vrot.slane %v2326, 4
      %v2381 = vrot.slane %v2327, 4
      %v2382 = vsel %vm732, %v2380, %v2381
      %v2383 = vrot.slane %v2328, 4
      %v2384 = vsel %vm732, %v2381, %v2383
      %v2385 = vrot.slane %v2329, 4
      %v2386 = vrot.slane %v2330, 4
      %v2387 = vsel %vm732, %v2385, %v2386
      %v2388 = vrot.slane %v2331, 4
      %v2389 = vsel %vm732, %v2386, %v2388
      %v2390 = vrot.slane %v2332, 4
      %v2391 = vrot.slane %v2333, 4
      %v2392 = vsel %vm732, %v2390, %v2391
      %v2393 = vrot.slane %v2334, 4
      %v2394 = vsel %vm732, %v2391, %v2393
      %v2395 = vrot.slane %v2335, 4
      %v2396 = vrot.slane %v2336, 4
      %v2397 = vsel %vm732, %v2395, %v2396
      %v2398 = vrot.slane %v2337, 4
      %v2399 = vsel %vm732, %v2396, %v2398
      %v2400 = vrot.slane %v2338, 4
      %v2401 = vrot.slane %v2339, 4
      %v2402 = vsel %vm732, %v2400, %v2401
      %v2403 = vrot.slane %v2340, 4
      %v2404 = vsel %vm732, %v2401, %v2403
      %v2421 = vadd.f32 %v2296, %v2367
      %v2422 = vadd.f32 %v2297, %v2369
      %v2423 = vadd.f32 %v2298, %v2372
      %v2424 = vadd.f32 %v2299, %v2374
      %v2425 = vadd.f32 %v2300, %v2377
      %v2426 = vadd.f32 %v2301, %v2379
      %v2427 = vadd.f32 %v2302, %v2382
      %v2428 = vadd.f32 %v2303, %v2384
      %v2429 = vadd.f32 %v2304, %v2387
      %v2430 = vadd.f32 %v2305, %v2389
      %v2431 = vadd.f32 %v2306, %v2392
      %v2432 = vadd.f32 %v2307, %v2394
      %v2433 = vadd.f32 %v2308, %v2397
      %v2434 = vadd.f32 %v2309, %v2399
      %v2435 = vadd.f32 %v2310, %v2402
      %v2436 = vadd.f32 %v2311, %v2404
      %v2437 = vld [vmem:[%s1899 + $0x5] sm:$0x1]
      %v2438 = vlaneseq
      %v2439 = vshrl.u32 %v2438, 7
      %v2440 = vsub.s32 0, %v2439
      %v2441 = vrot.slane %v2437, %v2440
      %v2442 = vmul.f32 %v1875, %v2441
      %v2443 = vmul.f32 %v1876, %v2441
      %v2444 = vmul.f32 %v1877, %v2441
      %v2445 = vmul.f32 %v1878, %v2441
      %v2446 = vmul.f32 %v1879, %v2441
      %v2447 = vmul.f32 %v1880, %v2441
      %v2448 = vmul.f32 %v1881, %v2441
      %v2449 = vmul.f32 %v1882, %v2441
      %v2450 = vmul.f32 %v1883, %v2441
      %v2451 = vmul.f32 %v1884, %v2441
      %v2452 = vmul.f32 %v1885, %v2441
      %v2453 = vmul.f32 %v1886, %v2441
      %v2454 = vmul.f32 %v1887, %v2441
      %v2455 = vmul.f32 %v1888, %v2441
      %v2456 = vmul.f32 %v1889, %v2441
      %v2457 = vmul.f32 %v1890, %v2441
      %v2458 = vmul.f32 %v1891, %v2441
      %v2459 = vmul.f32 %v1892, %v2441
      %v2460 = vmul.f32 %v1893, %v2441
      %v2461 = vmul.f32 %v1894, %v2441
      %v2462 = vmul.f32 %v1895, %v2441
      %v2463 = vmul.f32 %v1896, %v2441
      %v2464 = vmul.f32 %v1897, %v2441
      %v2465 = vmul.f32 %v1898, %v2441
      %v2490 = vrot.slane %v2442, 5
      %v2491 = vrot.slane %v2443, 5
      %v2492 = vsel %vm858, %v2490, %v2491
      %v2493 = vrot.slane %v2444, 5
      %v2494 = vsel %vm858, %v2491, %v2493
      %v2495 = vrot.slane %v2445, 5
      %v2496 = vrot.slane %v2446, 5
      %v2497 = vsel %vm858, %v2495, %v2496
      %v2498 = vrot.slane %v2447, 5
      %v2499 = vsel %vm858, %v2496, %v2498
      %v2500 = vrot.slane %v2448, 5
      %v2501 = vrot.slane %v2449, 5
      %v2502 = vsel %vm858, %v2500, %v2501
      %v2503 = vrot.slane %v2450, 5
      %v2504 = vsel %vm858, %v2501, %v2503
      %v2505 = vrot.slane %v2451, 5
      %v2506 = vrot.slane %v2452, 5
      %v2507 = vsel %vm858, %v2505, %v2506
      %v2508 = vrot.slane %v2453, 5
      %v2509 = vsel %vm858, %v2506, %v2508
      %v2510 = vrot.slane %v2454, 5
      %v2511 = vrot.slane %v2455, 5
      %v2512 = vsel %vm858, %v2510, %v2511
      %v2513 = vrot.slane %v2456, 5
      %v2514 = vsel %vm858, %v2511, %v2513
      %v2515 = vrot.slane %v2457, 5
      %v2516 = vrot.slane %v2458, 5
      %v2517 = vsel %vm858, %v2515, %v2516
      %v2518 = vrot.slane %v2459, 5
      %v2519 = vsel %vm858, %v2516, %v2518
      %v2520 = vrot.slane %v2460, 5
      %v2521 = vrot.slane %v2461, 5
      %v2522 = vsel %vm858, %v2520, %v2521
      %v2523 = vrot.slane %v2462, 5
      %v2524 = vsel %vm858, %v2521, %v2523
      %v2525 = vrot.slane %v2463, 5
      %v2526 = vrot.slane %v2464, 5
      %v2527 = vsel %vm858, %v2525, %v2526
      %v2528 = vrot.slane %v2465, 5
      %v2529 = vsel %vm858, %v2526, %v2528
      %v2546 = vadd.f32 %v2421, %v2492
      %v2547 = vadd.f32 %v2422, %v2494
      %v2548 = vadd.f32 %v2423, %v2497
      %v2549 = vadd.f32 %v2424, %v2499
      %v2550 = vadd.f32 %v2425, %v2502
      %v2551 = vadd.f32 %v2426, %v2504
      %v2552 = vadd.f32 %v2427, %v2507
      %v2553 = vadd.f32 %v2428, %v2509
      %v2554 = vadd.f32 %v2429, %v2512
      %v2555 = vadd.f32 %v2430, %v2514
      %v2556 = vadd.f32 %v2431, %v2517
      %v2557 = vadd.f32 %v2432, %v2519
      %v2558 = vadd.f32 %v2433, %v2522
      %v2559 = vadd.f32 %v2434, %v2524
      %v2560 = vadd.f32 %v2435, %v2527
      %v2561 = vadd.f32 %v2436, %v2529
      %v2562 = vld [vmem:[%s1899 + $0x6] sm:$0x1]
      %v2563 = vlaneseq
      %v2564 = vshrl.u32 %v2563, 7
      %v2565 = vsub.s32 0, %v2564
      %v2566 = vrot.slane %v2562, %v2565
      %v2567 = vmul.f32 %v1875, %v2566
      %v2568 = vmul.f32 %v1876, %v2566
      %v2569 = vmul.f32 %v1877, %v2566
      %v2570 = vmul.f32 %v1878, %v2566
      %v2571 = vmul.f32 %v1879, %v2566
      %v2572 = vmul.f32 %v1880, %v2566
      %v2573 = vmul.f32 %v1881, %v2566
      %v2574 = vmul.f32 %v1882, %v2566
      %v2575 = vmul.f32 %v1883, %v2566
      %v2576 = vmul.f32 %v1884, %v2566
      %v2577 = vmul.f32 %v1885, %v2566
      %v2578 = vmul.f32 %v1886, %v2566
      %v2579 = vmul.f32 %v1887, %v2566
      %v2580 = vmul.f32 %v1888, %v2566
      %v2581 = vmul.f32 %v1889, %v2566
      %v2582 = vmul.f32 %v1890, %v2566
      %v2583 = vmul.f32 %v1891, %v2566
      %v2584 = vmul.f32 %v1892, %v2566
      %v2585 = vmul.f32 %v1893, %v2566
      %v2586 = vmul.f32 %v1894, %v2566
      %v2587 = vmul.f32 %v1895, %v2566
      %v2588 = vmul.f32 %v1896, %v2566
      %v2589 = vmul.f32 %v1897, %v2566
      %v2590 = vmul.f32 %v1898, %v2566
      %v2615 = vrot.slane %v2567, 6
      %v2616 = vrot.slane %v2568, 6
      %v2617 = vsel %vm984, %v2615, %v2616
      %v2618 = vrot.slane %v2569, 6
      %v2619 = vsel %vm984, %v2616, %v2618
      %v2620 = vrot.slane %v2570, 6
      %v2621 = vrot.slane %v2571, 6
      %v2622 = vsel %vm984, %v2620, %v2621
      %v2623 = vrot.slane %v2572, 6
      %v2624 = vsel %vm984, %v2621, %v2623
      %v2625 = vrot.slane %v2573, 6
      %v2626 = vrot.slane %v2574, 6
      %v2627 = vsel %vm984, %v2625, %v2626
      %v2628 = vrot.slane %v2575, 6
      %v2629 = vsel %vm984, %v2626, %v2628
      %v2630 = vrot.slane %v2576, 6
      %v2631 = vrot.slane %v2577, 6
      %v2632 = vsel %vm984, %v2630, %v2631
      %v2633 = vrot.slane %v2578, 6
      %v2634 = vsel %vm984, %v2631, %v2633
      %v2635 = vrot.slane %v2579, 6
      %v2636 = vrot.slane %v2580, 6
      %v2637 = vsel %vm984, %v2635, %v2636
      %v2638 = vrot.slane %v2581, 6
      %v2639 = vsel %vm984, %v2636, %v2638
      %v2640 = vrot.slane %v2582, 6
      %v2641 = vrot.slane %v2583, 6
      %v2642 = vsel %vm984, %v2640, %v2641
      %v2643 = vrot.slane %v2584, 6
      %v2644 = vsel %vm984, %v2641, %v2643
      %v2645 = vrot.slane %v2585, 6
      %v2646 = vrot.slane %v2586, 6
      %v2647 = vsel %vm984, %v2645, %v2646
      %v2648 = vrot.slane %v2587, 6
      %v2649 = vsel %vm984, %v2646, %v2648
      %v2650 = vrot.slane %v2588, 6
      %v2651 = vrot.slane %v2589, 6
      %v2652 = vsel %vm984, %v2650, %v2651
      %v2653 = vrot.slane %v2590, 6
      %v2654 = vsel %vm984, %v2651, %v2653
      %v2671 = vadd.f32 %v2546, %v2617
      %v2672 = vadd.f32 %v2547, %v2619
      %v2673 = vadd.f32 %v2548, %v2622
      %v2674 = vadd.f32 %v2549, %v2624
      %v2675 = vadd.f32 %v2550, %v2627
      %v2676 = vadd.f32 %v2551, %v2629
      %v2677 = vadd.f32 %v2552, %v2632
      %v2678 = vadd.f32 %v2553, %v2634
      %v2679 = vadd.f32 %v2554, %v2637
      %v2680 = vadd.f32 %v2555, %v2639
      %v2681 = vadd.f32 %v2556, %v2642
      %v2682 = vadd.f32 %v2557, %v2644
      %v2683 = vadd.f32 %v2558, %v2647
      %v2684 = vadd.f32 %v2559, %v2649
      %v2685 = vadd.f32 %v2560, %v2652
      %v2686 = vadd.f32 %v2561, %v2654
      %s2687 = sadd.s32 %s253, 3
      %s2688 = smul.u32 %s2687, 24
      %s2689 = scalar_lea.vmem %s231, %s2688
      %v2690 = vld [vmem:[%s2689] sm:$0xff]
      %v2691 = vld [vmem:[%s2689 + $0x8] sm:$0xff]
      %v2692 = vld [vmem:[%s2689 + $0x10] sm:$0x3f]
      %v2693 = vld [vmem:[%s2689 + $0x18] sm:$0xff]
      %v2694 = vld [vmem:[%s2689 + $0x20] sm:$0xff]
      %v2695 = vld [vmem:[%s2689 + $0x28] sm:$0x3f]
      %v2696 = vld [vmem:[%s2689 + $0x30] sm:$0xff]
      %v2697 = vld [vmem:[%s2689 + $0x38] sm:$0xff]
      %v2698 = vld [vmem:[%s2689 + $0x40] sm:$0x3f]
      %v2699 = vld [vmem:[%s2689 + $0x48] sm:$0xff]
      %v2700 = vld [vmem:[%s2689 + $0x50] sm:$0xff]
      %v2701 = vld [vmem:[%s2689 + $0x58] sm:$0x3f]
      %v2702 = vld [vmem:[%s2689 + $0x60] sm:$0xff]
      %v2703 = vld [vmem:[%s2689 + $0x68] sm:$0xff]
      %v2704 = vld [vmem:[%s2689 + $0x70] sm:$0x3f]
      %v2705 = vld [vmem:[%s2689 + $0x78] sm:$0xff]
      %v2706 = vld [vmem:[%s2689 + $0x80] sm:$0xff]
      %v2707 = vld [vmem:[%s2689 + $0x88] sm:$0x3f]
      %v2708 = vld [vmem:[%s2689 + $0x90] sm:$0xff]
      %v2709 = vld [vmem:[%s2689 + $0x98] sm:$0xff]
      %v2710 = vld [vmem:[%s2689 + $0xa0] sm:$0x3f]
      %v2711 = vld [vmem:[%s2689 + $0xa8] sm:$0xff]
      %v2712 = vld [vmem:[%s2689 + $0xb0] sm:$0xff]
      %v2713 = vld [vmem:[%s2689 + $0xb8] sm:$0x3f]
      %s2714 = scalar_lea.vmem %s235, 24
      %v2715 = vld [vmem:[%s2714] sm:$0x1]
      %v2716 = vlaneseq
      %v2717 = vshrl.u32 %v2716, 7
      %v2718 = vsub.s32 0, %v2717
      %v2719 = vrot.slane %v2715, %v2718
      %v2720 = vmul.f32 %v2690, %v2719
      %v2721 = vmul.f32 %v2691, %v2719
      %v2722 = vmul.f32 %v2693, %v2719
      %v2723 = vmul.f32 %v2694, %v2719
      %v2724 = vmul.f32 %v2696, %v2719
      %v2725 = vmul.f32 %v2697, %v2719
      %v2726 = vmul.f32 %v2699, %v2719
      %v2727 = vmul.f32 %v2700, %v2719
      %v2728 = vmul.f32 %v2702, %v2719
      %v2729 = vmul.f32 %v2703, %v2719
      %v2730 = vmul.f32 %v2705, %v2719
      %v2731 = vmul.f32 %v2706, %v2719
      %v2732 = vmul.f32 %v2708, %v2719
      %v2733 = vmul.f32 %v2709, %v2719
      %v2734 = vmul.f32 %v2711, %v2719
      %v2735 = vmul.f32 %v2712, %v2719
      %v2736 = vadd.f32 %v2671, %v2720
      %v2737 = vadd.f32 %v2672, %v2721
      %v2738 = vadd.f32 %v2673, %v2722
      %v2739 = vadd.f32 %v2674, %v2723
      %v2740 = vadd.f32 %v2675, %v2724
      %v2741 = vadd.f32 %v2676, %v2725
      %v2742 = vadd.f32 %v2677, %v2726
      %v2743 = vadd.f32 %v2678, %v2727
      %v2744 = vadd.f32 %v2679, %v2728
      %v2745 = vadd.f32 %v2680, %v2729
      %v2746 = vadd.f32 %v2681, %v2730
      %v2747 = vadd.f32 %v2682, %v2731
      %v2748 = vadd.f32 %v2683, %v2732
      %v2749 = vadd.f32 %v2684, %v2733
      %v2750 = vadd.f32 %v2685, %v2734
      %v2751 = vadd.f32 %v2686, %v2735
      %v2752 = vld [vmem:[%s2714 + $0x1] sm:$0x1]
      %v2753 = vlaneseq
      %v2754 = vshrl.u32 %v2753, 7
      %v2755 = vsub.s32 0, %v2754
      %v2756 = vrot.slane %v2752, %v2755
      %v2757 = vmul.f32 %v2690, %v2756
      %v2758 = vmul.f32 %v2691, %v2756
      %v2759 = vmul.f32 %v2692, %v2756
      %v2760 = vmul.f32 %v2693, %v2756
      %v2761 = vmul.f32 %v2694, %v2756
      %v2762 = vmul.f32 %v2695, %v2756
      %v2763 = vmul.f32 %v2696, %v2756
      %v2764 = vmul.f32 %v2697, %v2756
      %v2765 = vmul.f32 %v2698, %v2756
      %v2766 = vmul.f32 %v2699, %v2756
      %v2767 = vmul.f32 %v2700, %v2756
      %v2768 = vmul.f32 %v2701, %v2756
      %v2769 = vmul.f32 %v2702, %v2756
      %v2770 = vmul.f32 %v2703, %v2756
      %v2771 = vmul.f32 %v2704, %v2756
      %v2772 = vmul.f32 %v2705, %v2756
      %v2773 = vmul.f32 %v2706, %v2756
      %v2774 = vmul.f32 %v2707, %v2756
      %v2775 = vmul.f32 %v2708, %v2756
      %v2776 = vmul.f32 %v2709, %v2756
      %v2777 = vmul.f32 %v2710, %v2756
      %v2778 = vmul.f32 %v2711, %v2756
      %v2779 = vmul.f32 %v2712, %v2756
      %v2780 = vmul.f32 %v2713, %v2756
      %v2805 = vrot.slane %v2757, 1
      %v2806 = vrot.slane %v2758, 1
      %v2807 = vsel %vm354, %v2805, %v2806
      %v2808 = vrot.slane %v2759, 1
      %v2809 = vsel %vm354, %v2806, %v2808
      %v2810 = vrot.slane %v2760, 1
      %v2811 = vrot.slane %v2761, 1
      %v2812 = vsel %vm354, %v2810, %v2811
      %v2813 = vrot.slane %v2762, 1
      %v2814 = vsel %vm354, %v2811, %v2813
      %v2815 = vrot.slane %v2763, 1
      %v2816 = vrot.slane %v2764, 1
      %v2817 = vsel %vm354, %v2815, %v2816
      %v2818 = vrot.slane %v2765, 1
      %v2819 = vsel %vm354, %v2816, %v2818
      %v2820 = vrot.slane %v2766, 1
      %v2821 = vrot.slane %v2767, 1
      %v2822 = vsel %vm354, %v2820, %v2821
      %v2823 = vrot.slane %v2768, 1
      %v2824 = vsel %vm354, %v2821, %v2823
      %v2825 = vrot.slane %v2769, 1
      %v2826 = vrot.slane %v2770, 1
      %v2827 = vsel %vm354, %v2825, %v2826
      %v2828 = vrot.slane %v2771, 1
      %v2829 = vsel %vm354, %v2826, %v2828
      %v2830 = vrot.slane %v2772, 1
      %v2831 = vrot.slane %v2773, 1
      %v2832 = vsel %vm354, %v2830, %v2831
      %v2833 = vrot.slane %v2774, 1
      %v2834 = vsel %vm354, %v2831, %v2833
      %v2835 = vrot.slane %v2775, 1
      %v2836 = vrot.slane %v2776, 1
      %v2837 = vsel %vm354, %v2835, %v2836
      %v2838 = vrot.slane %v2777, 1
      %v2839 = vsel %vm354, %v2836, %v2838
      %v2840 = vrot.slane %v2778, 1
      %v2841 = vrot.slane %v2779, 1
      %v2842 = vsel %vm354, %v2840, %v2841
      %v2843 = vrot.slane %v2780, 1
      %v2844 = vsel %vm354, %v2841, %v2843
      %v2861 = vadd.f32 %v2736, %v2807
      %v2862 = vadd.f32 %v2737, %v2809
      %v2863 = vadd.f32 %v2738, %v2812
      %v2864 = vadd.f32 %v2739, %v2814
      %v2865 = vadd.f32 %v2740, %v2817
      %v2866 = vadd.f32 %v2741, %v2819
      %v2867 = vadd.f32 %v2742, %v2822
      %v2868 = vadd.f32 %v2743, %v2824
      %v2869 = vadd.f32 %v2744, %v2827
      %v2870 = vadd.f32 %v2745, %v2829
      %v2871 = vadd.f32 %v2746, %v2832
      %v2872 = vadd.f32 %v2747, %v2834
      %v2873 = vadd.f32 %v2748, %v2837
      %v2874 = vadd.f32 %v2749, %v2839
      %v2875 = vadd.f32 %v2750, %v2842
      %v2876 = vadd.f32 %v2751, %v2844
      %v2877 = vld [vmem:[%s2714 + $0x2] sm:$0x1]
      %v2878 = vlaneseq
      %v2879 = vshrl.u32 %v2878, 7
      %v2880 = vsub.s32 0, %v2879
      %v2881 = vrot.slane %v2877, %v2880
      %v2882 = vmul.f32 %v2690, %v2881
      %v2883 = vmul.f32 %v2691, %v2881
      %v2884 = vmul.f32 %v2692, %v2881
      %v2885 = vmul.f32 %v2693, %v2881
      %v2886 = vmul.f32 %v2694, %v2881
      %v2887 = vmul.f32 %v2695, %v2881
      %v2888 = vmul.f32 %v2696, %v2881
      %v2889 = vmul.f32 %v2697, %v2881
      %v2890 = vmul.f32 %v2698, %v2881
      %v2891 = vmul.f32 %v2699, %v2881
      %v2892 = vmul.f32 %v2700, %v2881
      %v2893 = vmul.f32 %v2701, %v2881
      %v2894 = vmul.f32 %v2702, %v2881
      %v2895 = vmul.f32 %v2703, %v2881
      %v2896 = vmul.f32 %v2704, %v2881
      %v2897 = vmul.f32 %v2705, %v2881
      %v2898 = vmul.f32 %v2706, %v2881
      %v2899 = vmul.f32 %v2707, %v2881
      %v2900 = vmul.f32 %v2708, %v2881
      %v2901 = vmul.f32 %v2709, %v2881
      %v2902 = vmul.f32 %v2710, %v2881
      %v2903 = vmul.f32 %v2711, %v2881
      %v2904 = vmul.f32 %v2712, %v2881
      %v2905 = vmul.f32 %v2713, %v2881
      %v2930 = vrot.slane %v2882, 2
      %v2931 = vrot.slane %v2883, 2
      %v2932 = vsel %vm480, %v2930, %v2931
      %v2933 = vrot.slane %v2884, 2
      %v2934 = vsel %vm480, %v2931, %v2933
      %v2935 = vrot.slane %v2885, 2
      %v2936 = vrot.slane %v2886, 2
      %v2937 = vsel %vm480, %v2935, %v2936
      %v2938 = vrot.slane %v2887, 2
      %v2939 = vsel %vm480, %v2936, %v2938
      %v2940 = vrot.slane %v2888, 2
      %v2941 = vrot.slane %v2889, 2
      %v2942 = vsel %vm480, %v2940, %v2941
      %v2943 = vrot.slane %v2890, 2
      %v2944 = vsel %vm480, %v2941, %v2943
      %v2945 = vrot.slane %v2891, 2
      %v2946 = vrot.slane %v2892, 2
      %v2947 = vsel %vm480, %v2945, %v2946
      %v2948 = vrot.slane %v2893, 2
      %v2949 = vsel %vm480, %v2946, %v2948
      %v2950 = vrot.slane %v2894, 2
      %v2951 = vrot.slane %v2895, 2
      %v2952 = vsel %vm480, %v2950, %v2951
      %v2953 = vrot.slane %v2896, 2
      %v2954 = vsel %vm480, %v2951, %v2953
      %v2955 = vrot.slane %v2897, 2
      %v2956 = vrot.slane %v2898, 2
      %v2957 = vsel %vm480, %v2955, %v2956
      %v2958 = vrot.slane %v2899, 2
      %v2959 = vsel %vm480, %v2956, %v2958
      %v2960 = vrot.slane %v2900, 2
      %v2961 = vrot.slane %v2901, 2
      %v2962 = vsel %vm480, %v2960, %v2961
      %v2963 = vrot.slane %v2902, 2
      %v2964 = vsel %vm480, %v2961, %v2963
      %v2965 = vrot.slane %v2903, 2
      %v2966 = vrot.slane %v2904, 2
      %v2967 = vsel %vm480, %v2965, %v2966
      %v2968 = vrot.slane %v2905, 2
      %v2969 = vsel %vm480, %v2966, %v2968
      %v2986 = vadd.f32 %v2861, %v2932
      %v2987 = vadd.f32 %v2862, %v2934
      %v2988 = vadd.f32 %v2863, %v2937
      %v2989 = vadd.f32 %v2864, %v2939
      %v2990 = vadd.f32 %v2865, %v2942
      %v2991 = vadd.f32 %v2866, %v2944
      %v2992 = vadd.f32 %v2867, %v2947
      %v2993 = vadd.f32 %v2868, %v2949
      %v2994 = vadd.f32 %v2869, %v2952
      %v2995 = vadd.f32 %v2870, %v2954
      %v2996 = vadd.f32 %v2871, %v2957
      %v2997 = vadd.f32 %v2872, %v2959
      %v2998 = vadd.f32 %v2873, %v2962
      %v2999 = vadd.f32 %v2874, %v2964
      %v3000 = vadd.f32 %v2875, %v2967
      %v3001 = vadd.f32 %v2876, %v2969
      %v3002 = vld [vmem:[%s2714 + $0x3] sm:$0x1]
      %v3003 = vlaneseq
      %v3004 = vshrl.u32 %v3003, 7
      %v3005 = vsub.s32 0, %v3004
      %v3006 = vrot.slane %v3002, %v3005
      %v3007 = vmul.f32 %v2690, %v3006
      %v3008 = vmul.f32 %v2691, %v3006
      %v3009 = vmul.f32 %v2692, %v3006
      %v3010 = vmul.f32 %v2693, %v3006
      %v3011 = vmul.f32 %v2694, %v3006
      %v3012 = vmul.f32 %v2695, %v3006
      %v3013 = vmul.f32 %v2696, %v3006
      %v3014 = vmul.f32 %v2697, %v3006
      %v3015 = vmul.f32 %v2698, %v3006
      %v3016 = vmul.f32 %v2699, %v3006
      %v3017 = vmul.f32 %v2700, %v3006
      %v3018 = vmul.f32 %v2701, %v3006
      %v3019 = vmul.f32 %v2702, %v3006
      %v3020 = vmul.f32 %v2703, %v3006
      %v3021 = vmul.f32 %v2704, %v3006
      %v3022 = vmul.f32 %v2705, %v3006
      %v3023 = vmul.f32 %v2706, %v3006
      %v3024 = vmul.f32 %v2707, %v3006
      %v3025 = vmul.f32 %v2708, %v3006
      %v3026 = vmul.f32 %v2709, %v3006
      %v3027 = vmul.f32 %v2710, %v3006
      %v3028 = vmul.f32 %v2711, %v3006
      %v3029 = vmul.f32 %v2712, %v3006
      %v3030 = vmul.f32 %v2713, %v3006
      %v3055 = vrot.slane %v3007, 3
      %v3056 = vrot.slane %v3008, 3
      %v3057 = vsel %vm606, %v3055, %v3056
      %v3058 = vrot.slane %v3009, 3
      %v3059 = vsel %vm606, %v3056, %v3058
      %v3060 = vrot.slane %v3010, 3
      %v3061 = vrot.slane %v3011, 3
      %v3062 = vsel %vm606, %v3060, %v3061
      %v3063 = vrot.slane %v3012, 3
      %v3064 = vsel %vm606, %v3061, %v3063
      %v3065 = vrot.slane %v3013, 3
      %v3066 = vrot.slane %v3014, 3
      %v3067 = vsel %vm606, %v3065, %v3066
      %v3068 = vrot.slane %v3015, 3
      %v3069 = vsel %vm606, %v3066, %v3068
      %v3070 = vrot.slane %v3016, 3
      %v3071 = vrot.slane %v3017, 3
      %v3072 = vsel %vm606, %v3070, %v3071
      %v3073 = vrot.slane %v3018, 3
      %v3074 = vsel %vm606, %v3071, %v3073
      %v3075 = vrot.slane %v3019, 3
      %v3076 = vrot.slane %v3020, 3
      %v3077 = vsel %vm606, %v3075, %v3076
      %v3078 = vrot.slane %v3021, 3
      %v3079 = vsel %vm606, %v3076, %v3078
      %v3080 = vrot.slane %v3022, 3
      %v3081 = vrot.slane %v3023, 3
      %v3082 = vsel %vm606, %v3080, %v3081
      %v3083 = vrot.slane %v3024, 3
      %v3084 = vsel %vm606, %v3081, %v3083
      %v3085 = vrot.slane %v3025, 3
      %v3086 = vrot.slane %v3026, 3
      %v3087 = vsel %vm606, %v3085, %v3086
      %v3088 = vrot.slane %v3027, 3
      %v3089 = vsel %vm606, %v3086, %v3088
      %v3090 = vrot.slane %v3028, 3
      %v3091 = vrot.slane %v3029, 3
      %v3092 = vsel %vm606, %v3090, %v3091
      %v3093 = vrot.slane %v3030, 3
      %v3094 = vsel %vm606, %v3091, %v3093
      %v3111 = vadd.f32 %v2986, %v3057
      %v3112 = vadd.f32 %v2987, %v3059
      %v3113 = vadd.f32 %v2988, %v3062
      %v3114 = vadd.f32 %v2989, %v3064
      %v3115 = vadd.f32 %v2990, %v3067
      %v3116 = vadd.f32 %v2991, %v3069
      %v3117 = vadd.f32 %v2992, %v3072
      %v3118 = vadd.f32 %v2993, %v3074
      %v3119 = vadd.f32 %v2994, %v3077
      %v3120 = vadd.f32 %v2995, %v3079
      %v3121 = vadd.f32 %v2996, %v3082
      %v3122 = vadd.f32 %v2997, %v3084
      %v3123 = vadd.f32 %v2998, %v3087
      %v3124 = vadd.f32 %v2999, %v3089
      %v3125 = vadd.f32 %v3000, %v3092
      %v3126 = vadd.f32 %v3001, %v3094
      %v3127 = vld [vmem:[%s2714 + $0x4] sm:$0x1]
      %v3128 = vlaneseq
      %v3129 = vshrl.u32 %v3128, 7
      %v3130 = vsub.s32 0, %v3129
      %v3131 = vrot.slane %v3127, %v3130
      %v3132 = vmul.f32 %v2690, %v3131
      %v3133 = vmul.f32 %v2691, %v3131
      %v3134 = vmul.f32 %v2692, %v3131
      %v3135 = vmul.f32 %v2693, %v3131
      %v3136 = vmul.f32 %v2694, %v3131
      %v3137 = vmul.f32 %v2695, %v3131
      %v3138 = vmul.f32 %v2696, %v3131
      %v3139 = vmul.f32 %v2697, %v3131
      %v3140 = vmul.f32 %v2698, %v3131
      %v3141 = vmul.f32 %v2699, %v3131
      %v3142 = vmul.f32 %v2700, %v3131
      %v3143 = vmul.f32 %v2701, %v3131
      %v3144 = vmul.f32 %v2702, %v3131
      %v3145 = vmul.f32 %v2703, %v3131
      %v3146 = vmul.f32 %v2704, %v3131
      %v3147 = vmul.f32 %v2705, %v3131
      %v3148 = vmul.f32 %v2706, %v3131
      %v3149 = vmul.f32 %v2707, %v3131
      %v3150 = vmul.f32 %v2708, %v3131
      %v3151 = vmul.f32 %v2709, %v3131
      %v3152 = vmul.f32 %v2710, %v3131
      %v3153 = vmul.f32 %v2711, %v3131
      %v3154 = vmul.f32 %v2712, %v3131
      %v3155 = vmul.f32 %v2713, %v3131
      %v3180 = vrot.slane %v3132, 4
      %v3181 = vrot.slane %v3133, 4
      %v3182 = vsel %vm732, %v3180, %v3181
      %v3183 = vrot.slane %v3134, 4
      %v3184 = vsel %vm732, %v3181, %v3183
      %v3185 = vrot.slane %v3135, 4
      %v3186 = vrot.slane %v3136, 4
      %v3187 = vsel %vm732, %v3185, %v3186
      %v3188 = vrot.slane %v3137, 4
      %v3189 = vsel %vm732, %v3186, %v3188
      %v3190 = vrot.slane %v3138, 4
      %v3191 = vrot.slane %v3139, 4
      %v3192 = vsel %vm732, %v3190, %v3191
      %v3193 = vrot.slane %v3140, 4
      %v3194 = vsel %vm732, %v3191, %v3193
      %v3195 = vrot.slane %v3141, 4
      %v3196 = vrot.slane %v3142, 4
      %v3197 = vsel %vm732, %v3195, %v3196
      %v3198 = vrot.slane %v3143, 4
      %v3199 = vsel %vm732, %v3196, %v3198
      %v3200 = vrot.slane %v3144, 4
      %v3201 = vrot.slane %v3145, 4
      %v3202 = vsel %vm732, %v3200, %v3201
      %v3203 = vrot.slane %v3146, 4
      %v3204 = vsel %vm732, %v3201, %v3203
      %v3205 = vrot.slane %v3147, 4
      %v3206 = vrot.slane %v3148, 4
      %v3207 = vsel %vm732, %v3205, %v3206
      %v3208 = vrot.slane %v3149, 4
      %v3209 = vsel %vm732, %v3206, %v3208
      %v3210 = vrot.slane %v3150, 4
      %v3211 = vrot.slane %v3151, 4
      %v3212 = vsel %vm732, %v3210, %v3211
      %v3213 = vrot.slane %v3152, 4
      %v3214 = vsel %vm732, %v3211, %v3213
      %v3215 = vrot.slane %v3153, 4
      %v3216 = vrot.slane %v3154, 4
      %v3217 = vsel %vm732, %v3215, %v3216
      %v3218 = vrot.slane %v3155, 4
      %v3219 = vsel %vm732, %v3216, %v3218
      %v3236 = vadd.f32 %v3111, %v3182
      %v3237 = vadd.f32 %v3112, %v3184
      %v3238 = vadd.f32 %v3113, %v3187
      %v3239 = vadd.f32 %v3114, %v3189
      %v3240 = vadd.f32 %v3115, %v3192
      %v3241 = vadd.f32 %v3116, %v3194
      %v3242 = vadd.f32 %v3117, %v3197
      %v3243 = vadd.f32 %v3118, %v3199
      %v3244 = vadd.f32 %v3119, %v3202
      %v3245 = vadd.f32 %v3120, %v3204
      %v3246 = vadd.f32 %v3121, %v3207
      %v3247 = vadd.f32 %v3122, %v3209
      %v3248 = vadd.f32 %v3123, %v3212
      %v3249 = vadd.f32 %v3124, %v3214
      %v3250 = vadd.f32 %v3125, %v3217
      %v3251 = vadd.f32 %v3126, %v3219
      %v3252 = vld [vmem:[%s2714 + $0x5] sm:$0x1]
      %v3253 = vlaneseq
      %v3254 = vshrl.u32 %v3253, 7
      %v3255 = vsub.s32 0, %v3254
      %v3256 = vrot.slane %v3252, %v3255
      %v3257 = vmul.f32 %v2690, %v3256
      %v3258 = vmul.f32 %v2691, %v3256
      %v3259 = vmul.f32 %v2692, %v3256
      %v3260 = vmul.f32 %v2693, %v3256
      %v3261 = vmul.f32 %v2694, %v3256
      %v3262 = vmul.f32 %v2695, %v3256
      %v3263 = vmul.f32 %v2696, %v3256
      %v3264 = vmul.f32 %v2697, %v3256
      %v3265 = vmul.f32 %v2698, %v3256
      %v3266 = vmul.f32 %v2699, %v3256
      %v3267 = vmul.f32 %v2700, %v3256
      %v3268 = vmul.f32 %v2701, %v3256
      %v3269 = vmul.f32 %v2702, %v3256
      %v3270 = vmul.f32 %v2703, %v3256
      %v3271 = vmul.f32 %v2704, %v3256
      %v3272 = vmul.f32 %v2705, %v3256
      %v3273 = vmul.f32 %v2706, %v3256
      %v3274 = vmul.f32 %v2707, %v3256
      %v3275 = vmul.f32 %v2708, %v3256
      %v3276 = vmul.f32 %v2709, %v3256
      %v3277 = vmul.f32 %v2710, %v3256
      %v3278 = vmul.f32 %v2711, %v3256
      %v3279 = vmul.f32 %v2712, %v3256
      %v3280 = vmul.f32 %v2713, %v3256
      %v3305 = vrot.slane %v3257, 5
      %v3306 = vrot.slane %v3258, 5
      %v3307 = vsel %vm858, %v3305, %v3306
      %v3308 = vrot.slane %v3259, 5
      %v3309 = vsel %vm858, %v3306, %v3308
      %v3310 = vrot.slane %v3260, 5
      %v3311 = vrot.slane %v3261, 5
      %v3312 = vsel %vm858, %v3310, %v3311
      %v3313 = vrot.slane %v3262, 5
      %v3314 = vsel %vm858, %v3311, %v3313
      %v3315 = vrot.slane %v3263, 5
      %v3316 = vrot.slane %v3264, 5
      %v3317 = vsel %vm858, %v3315, %v3316
      %v3318 = vrot.slane %v3265, 5
      %v3319 = vsel %vm858, %v3316, %v3318
      %v3320 = vrot.slane %v3266, 5
      %v3321 = vrot.slane %v3267, 5
      %v3322 = vsel %vm858, %v3320, %v3321
      %v3323 = vrot.slane %v3268, 5
      %v3324 = vsel %vm858, %v3321, %v3323
      %v3325 = vrot.slane %v3269, 5
      %v3326 = vrot.slane %v3270, 5
      %v3327 = vsel %vm858, %v3325, %v3326
      %v3328 = vrot.slane %v3271, 5
      %v3329 = vsel %vm858, %v3326, %v3328
      %v3330 = vrot.slane %v3272, 5
      %v3331 = vrot.slane %v3273, 5
      %v3332 = vsel %vm858, %v3330, %v3331
      %v3333 = vrot.slane %v3274, 5
      %v3334 = vsel %vm858, %v3331, %v3333
      %v3335 = vrot.slane %v3275, 5
      %v3336 = vrot.slane %v3276, 5
      %v3337 = vsel %vm858, %v3335, %v3336
      %v3338 = vrot.slane %v3277, 5
      %v3339 = vsel %vm858, %v3336, %v3338
      %v3340 = vrot.slane %v3278, 5
      %v3341 = vrot.slane %v3279, 5
      %v3342 = vsel %vm858, %v3340, %v3341
      %v3343 = vrot.slane %v3280, 5
      %v3344 = vsel %vm858, %v3341, %v3343
      %v3361 = vadd.f32 %v3236, %v3307
      %v3362 = vadd.f32 %v3237, %v3309
      %v3363 = vadd.f32 %v3238, %v3312
      %v3364 = vadd.f32 %v3239, %v3314
      %v3365 = vadd.f32 %v3240, %v3317
      %v3366 = vadd.f32 %v3241, %v3319
      %v3367 = vadd.f32 %v3242, %v3322
      %v3368 = vadd.f32 %v3243, %v3324
      %v3369 = vadd.f32 %v3244, %v3327
      %v3370 = vadd.f32 %v3245, %v3329
      %v3371 = vadd.f32 %v3246, %v3332
      %v3372 = vadd.f32 %v3247, %v3334
      %v3373 = vadd.f32 %v3248, %v3337
      %v3374 = vadd.f32 %v3249, %v3339
      %v3375 = vadd.f32 %v3250, %v3342
      %v3376 = vadd.f32 %v3251, %v3344
      %v3377 = vld [vmem:[%s2714 + $0x6] sm:$0x1]
      %v3378 = vlaneseq
      %v3379 = vshrl.u32 %v3378, 7
      %v3380 = vsub.s32 0, %v3379
      %v3381 = vrot.slane %v3377, %v3380
      %v3382 = vmul.f32 %v2690, %v3381
      %v3383 = vmul.f32 %v2691, %v3381
      %v3384 = vmul.f32 %v2692, %v3381
      %v3385 = vmul.f32 %v2693, %v3381
      %v3386 = vmul.f32 %v2694, %v3381
      %v3387 = vmul.f32 %v2695, %v3381
      %v3388 = vmul.f32 %v2696, %v3381
      %v3389 = vmul.f32 %v2697, %v3381
      %v3390 = vmul.f32 %v2698, %v3381
      %v3391 = vmul.f32 %v2699, %v3381
      %v3392 = vmul.f32 %v2700, %v3381
      %v3393 = vmul.f32 %v2701, %v3381
      %v3394 = vmul.f32 %v2702, %v3381
      %v3395 = vmul.f32 %v2703, %v3381
      %v3396 = vmul.f32 %v2704, %v3381
      %v3397 = vmul.f32 %v2705, %v3381
      %v3398 = vmul.f32 %v2706, %v3381
      %v3399 = vmul.f32 %v2707, %v3381
      %v3400 = vmul.f32 %v2708, %v3381
      %v3401 = vmul.f32 %v2709, %v3381
      %v3402 = vmul.f32 %v2710, %v3381
      %v3403 = vmul.f32 %v2711, %v3381
      %v3404 = vmul.f32 %v2712, %v3381
      %v3405 = vmul.f32 %v2713, %v3381
      %v3430 = vrot.slane %v3382, 6
      %v3431 = vrot.slane %v3383, 6
      %v3432 = vsel %vm984, %v3430, %v3431
      %v3433 = vrot.slane %v3384, 6
      %v3434 = vsel %vm984, %v3431, %v3433
      %v3435 = vrot.slane %v3385, 6
      %v3436 = vrot.slane %v3386, 6
      %v3437 = vsel %vm984, %v3435, %v3436
      %v3438 = vrot.slane %v3387, 6
      %v3439 = vsel %vm984, %v3436, %v3438
      %v3440 = vrot.slane %v3388, 6
      %v3441 = vrot.slane %v3389, 6
      %v3442 = vsel %vm984, %v3440, %v3441
      %v3443 = vrot.slane %v3390, 6
      %v3444 = vsel %vm984, %v3441, %v3443
      %v3445 = vrot.slane %v3391, 6
      %v3446 = vrot.slane %v3392, 6
      %v3447 = vsel %vm984, %v3445, %v3446
      %v3448 = vrot.slane %v3393, 6
      %v3449 = vsel %vm984, %v3446, %v3448
      %v3450 = vrot.slane %v3394, 6
      %v3451 = vrot.slane %v3395, 6
      %v3452 = vsel %vm984, %v3450, %v3451
      %v3453 = vrot.slane %v3396, 6
      %v3454 = vsel %vm984, %v3451, %v3453
      %v3455 = vrot.slane %v3397, 6
      %v3456 = vrot.slane %v3398, 6
      %v3457 = vsel %vm984, %v3455, %v3456
      %v3458 = vrot.slane %v3399, 6
      %v3459 = vsel %vm984, %v3456, %v3458
      %v3460 = vrot.slane %v3400, 6
      %v3461 = vrot.slane %v3401, 6
      %v3462 = vsel %vm984, %v3460, %v3461
      %v3463 = vrot.slane %v3402, 6
      %v3464 = vsel %vm984, %v3461, %v3463
      %v3465 = vrot.slane %v3403, 6
      %v3466 = vrot.slane %v3404, 6
      %v3467 = vsel %vm984, %v3465, %v3466
      %v3468 = vrot.slane %v3405, 6
      %v3469 = vsel %vm984, %v3466, %v3468
      %v3486 = vadd.f32 %v3361, %v3432
      %v3487 = vadd.f32 %v3362, %v3434
      %v3488 = vadd.f32 %v3363, %v3437
      %v3489 = vadd.f32 %v3364, %v3439
      %v3490 = vadd.f32 %v3365, %v3442
      %v3491 = vadd.f32 %v3366, %v3444
      %v3492 = vadd.f32 %v3367, %v3447
      %v3493 = vadd.f32 %v3368, %v3449
      %v3494 = vadd.f32 %v3369, %v3452
      %v3495 = vadd.f32 %v3370, %v3454
      %v3496 = vadd.f32 %v3371, %v3457
      %v3497 = vadd.f32 %v3372, %v3459
      %v3498 = vadd.f32 %v3373, %v3462
      %v3499 = vadd.f32 %v3374, %v3464
      %v3500 = vadd.f32 %v3375, %v3467
      %v3501 = vadd.f32 %v3376, %v3469
      %s3502 = sadd.s32 %s253, 4
      %s3503 = smul.u32 %s3502, 24
      %s3504 = scalar_lea.vmem %s231, %s3503
      %v3505 = vld [vmem:[%s3504] sm:$0xff]
      %v3506 = vld [vmem:[%s3504 + $0x8] sm:$0xff]
      %v3507 = vld [vmem:[%s3504 + $0x10] sm:$0x3f]
      %v3508 = vld [vmem:[%s3504 + $0x18] sm:$0xff]
      %v3509 = vld [vmem:[%s3504 + $0x20] sm:$0xff]
      %v3510 = vld [vmem:[%s3504 + $0x28] sm:$0x3f]
      %v3511 = vld [vmem:[%s3504 + $0x30] sm:$0xff]
      %v3512 = vld [vmem:[%s3504 + $0x38] sm:$0xff]
      %v3513 = vld [vmem:[%s3504 + $0x40] sm:$0x3f]
      %v3514 = vld [vmem:[%s3504 + $0x48] sm:$0xff]
      %v3515 = vld [vmem:[%s3504 + $0x50] sm:$0xff]
      %v3516 = vld [vmem:[%s3504 + $0x58] sm:$0x3f]
      %v3517 = vld [vmem:[%s3504 + $0x60] sm:$0xff]
      %v3518 = vld [vmem:[%s3504 + $0x68] sm:$0xff]
      %v3519 = vld [vmem:[%s3504 + $0x70] sm:$0x3f]
      %v3520 = vld [vmem:[%s3504 + $0x78] sm:$0xff]
      %v3521 = vld [vmem:[%s3504 + $0x80] sm:$0xff]
      %v3522 = vld [vmem:[%s3504 + $0x88] sm:$0x3f]
      %v3523 = vld [vmem:[%s3504 + $0x90] sm:$0xff]
      %v3524 = vld [vmem:[%s3504 + $0x98] sm:$0xff]
      %v3525 = vld [vmem:[%s3504 + $0xa0] sm:$0x3f]
      %v3526 = vld [vmem:[%s3504 + $0xa8] sm:$0xff]
      %v3527 = vld [vmem:[%s3504 + $0xb0] sm:$0xff]
      %v3528 = vld [vmem:[%s3504 + $0xb8] sm:$0x3f]
      %s3529 = scalar_lea.vmem %s235, 32
      %v3530 = vld [vmem:[%s3529] sm:$0x1]
      %v3531 = vlaneseq
      %v3532 = vshrl.u32 %v3531, 7
      %v3533 = vsub.s32 0, %v3532
      %v3534 = vrot.slane %v3530, %v3533
      %v3535 = vmul.f32 %v3505, %v3534
      %v3536 = vmul.f32 %v3506, %v3534
      %v3537 = vmul.f32 %v3508, %v3534
      %v3538 = vmul.f32 %v3509, %v3534
      %v3539 = vmul.f32 %v3511, %v3534
      %v3540 = vmul.f32 %v3512, %v3534
      %v3541 = vmul.f32 %v3514, %v3534
      %v3542 = vmul.f32 %v3515, %v3534
      %v3543 = vmul.f32 %v3517, %v3534
      %v3544 = vmul.f32 %v3518, %v3534
      %v3545 = vmul.f32 %v3520, %v3534
      %v3546 = vmul.f32 %v3521, %v3534
      %v3547 = vmul.f32 %v3523, %v3534
      %v3548 = vmul.f32 %v3524, %v3534
      %v3549 = vmul.f32 %v3526, %v3534
      %v3550 = vmul.f32 %v3527, %v3534
      %v3551 = vadd.f32 %v3486, %v3535
      %v3552 = vadd.f32 %v3487, %v3536
      %v3553 = vadd.f32 %v3488, %v3537
      %v3554 = vadd.f32 %v3489, %v3538
      %v3555 = vadd.f32 %v3490, %v3539
      %v3556 = vadd.f32 %v3491, %v3540
      %v3557 = vadd.f32 %v3492, %v3541
      %v3558 = vadd.f32 %v3493, %v3542
      %v3559 = vadd.f32 %v3494, %v3543
      %v3560 = vadd.f32 %v3495, %v3544
      %v3561 = vadd.f32 %v3496, %v3545
      %v3562 = vadd.f32 %v3497, %v3546
      %v3563 = vadd.f32 %v3498, %v3547
      %v3564 = vadd.f32 %v3499, %v3548
      %v3565 = vadd.f32 %v3500, %v3549
      %v3566 = vadd.f32 %v3501, %v3550
      %v3567 = vld [vmem:[%s3529 + $0x1] sm:$0x1]
      %v3568 = vlaneseq
      %v3569 = vshrl.u32 %v3568, 7
      %v3570 = vsub.s32 0, %v3569
      %v3571 = vrot.slane %v3567, %v3570
      %v3572 = vmul.f32 %v3505, %v3571
      %v3573 = vmul.f32 %v3506, %v3571
      %v3574 = vmul.f32 %v3507, %v3571
      %v3575 = vmul.f32 %v3508, %v3571
      %v3576 = vmul.f32 %v3509, %v3571
      %v3577 = vmul.f32 %v3510, %v3571
      %v3578 = vmul.f32 %v3511, %v3571
      %v3579 = vmul.f32 %v3512, %v3571
      %v3580 = vmul.f32 %v3513, %v3571
      %v3581 = vmul.f32 %v3514, %v3571
      %v3582 = vmul.f32 %v3515, %v3571
      %v3583 = vmul.f32 %v3516, %v3571
      %v3584 = vmul.f32 %v3517, %v3571
      %v3585 = vmul.f32 %v3518, %v3571
      %v3586 = vmul.f32 %v3519, %v3571
      %v3587 = vmul.f32 %v3520, %v3571
      %v3588 = vmul.f32 %v3521, %v3571
      %v3589 = vmul.f32 %v3522, %v3571
      %v3590 = vmul.f32 %v3523, %v3571
      %v3591 = vmul.f32 %v3524, %v3571
      %v3592 = vmul.f32 %v3525, %v3571
      %v3593 = vmul.f32 %v3526, %v3571
      %v3594 = vmul.f32 %v3527, %v3571
      %v3595 = vmul.f32 %v3528, %v3571
      %v3620 = vrot.slane %v3572, 1
      %v3621 = vrot.slane %v3573, 1
      %v3622 = vsel %vm354, %v3620, %v3621
      %v3623 = vrot.slane %v3574, 1
      %v3624 = vsel %vm354, %v3621, %v3623
      %v3625 = vrot.slane %v3575, 1
      %v3626 = vrot.slane %v3576, 1
      %v3627 = vsel %vm354, %v3625, %v3626
      %v3628 = vrot.slane %v3577, 1
      %v3629 = vsel %vm354, %v3626, %v3628
      %v3630 = vrot.slane %v3578, 1
      %v3631 = vrot.slane %v3579, 1
      %v3632 = vsel %vm354, %v3630, %v3631
      %v3633 = vrot.slane %v3580, 1
      %v3634 = vsel %vm354, %v3631, %v3633
      %v3635 = vrot.slane %v3581, 1
      %v3636 = vrot.slane %v3582, 1
      %v3637 = vsel %vm354, %v3635, %v3636
      %v3638 = vrot.slane %v3583, 1
      %v3639 = vsel %vm354, %v3636, %v3638
      %v3640 = vrot.slane %v3584, 1
      %v3641 = vrot.slane %v3585, 1
      %v3642 = vsel %vm354, %v3640, %v3641
      %v3643 = vrot.slane %v3586, 1
      %v3644 = vsel %vm354, %v3641, %v3643
      %v3645 = vrot.slane %v3587, 1
      %v3646 = vrot.slane %v3588, 1
      %v3647 = vsel %vm354, %v3645, %v3646
      %v3648 = vrot.slane %v3589, 1
      %v3649 = vsel %vm354, %v3646, %v3648
      %v3650 = vrot.slane %v3590, 1
      %v3651 = vrot.slane %v3591, 1
      %v3652 = vsel %vm354, %v3650, %v3651
      %v3653 = vrot.slane %v3592, 1
      %v3654 = vsel %vm354, %v3651, %v3653
      %v3655 = vrot.slane %v3593, 1
      %v3656 = vrot.slane %v3594, 1
      %v3657 = vsel %vm354, %v3655, %v3656
      %v3658 = vrot.slane %v3595, 1
      %v3659 = vsel %vm354, %v3656, %v3658
      %v3676 = vadd.f32 %v3551, %v3622
      %v3677 = vadd.f32 %v3552, %v3624
      %v3678 = vadd.f32 %v3553, %v3627
      %v3679 = vadd.f32 %v3554, %v3629
      %v3680 = vadd.f32 %v3555, %v3632
      %v3681 = vadd.f32 %v3556, %v3634
      %v3682 = vadd.f32 %v3557, %v3637
      %v3683 = vadd.f32 %v3558, %v3639
      %v3684 = vadd.f32 %v3559, %v3642
      %v3685 = vadd.f32 %v3560, %v3644
      %v3686 = vadd.f32 %v3561, %v3647
      %v3687 = vadd.f32 %v3562, %v3649
      %v3688 = vadd.f32 %v3563, %v3652
      %v3689 = vadd.f32 %v3564, %v3654
      %v3690 = vadd.f32 %v3565, %v3657
      %v3691 = vadd.f32 %v3566, %v3659
      %v3692 = vld [vmem:[%s3529 + $0x2] sm:$0x1]
      %v3693 = vlaneseq
      %v3694 = vshrl.u32 %v3693, 7
      %v3695 = vsub.s32 0, %v3694
      %v3696 = vrot.slane %v3692, %v3695
      %v3697 = vmul.f32 %v3505, %v3696
      %v3698 = vmul.f32 %v3506, %v3696
      %v3699 = vmul.f32 %v3507, %v3696
      %v3700 = vmul.f32 %v3508, %v3696
      %v3701 = vmul.f32 %v3509, %v3696
      %v3702 = vmul.f32 %v3510, %v3696
      %v3703 = vmul.f32 %v3511, %v3696
      %v3704 = vmul.f32 %v3512, %v3696
      %v3705 = vmul.f32 %v3513, %v3696
      %v3706 = vmul.f32 %v3514, %v3696
      %v3707 = vmul.f32 %v3515, %v3696
      %v3708 = vmul.f32 %v3516, %v3696
      %v3709 = vmul.f32 %v3517, %v3696
      %v3710 = vmul.f32 %v3518, %v3696
      %v3711 = vmul.f32 %v3519, %v3696
      %v3712 = vmul.f32 %v3520, %v3696
      %v3713 = vmul.f32 %v3521, %v3696
      %v3714 = vmul.f32 %v3522, %v3696
      %v3715 = vmul.f32 %v3523, %v3696
      %v3716 = vmul.f32 %v3524, %v3696
      %v3717 = vmul.f32 %v3525, %v3696
      %v3718 = vmul.f32 %v3526, %v3696
      %v3719 = vmul.f32 %v3527, %v3696
      %v3720 = vmul.f32 %v3528, %v3696
      %v3745 = vrot.slane %v3697, 2
      %v3746 = vrot.slane %v3698, 2
      %v3747 = vsel %vm480, %v3745, %v3746
      %v3748 = vrot.slane %v3699, 2
      %v3749 = vsel %vm480, %v3746, %v3748
      %v3750 = vrot.slane %v3700, 2
      %v3751 = vrot.slane %v3701, 2
      %v3752 = vsel %vm480, %v3750, %v3751
      %v3753 = vrot.slane %v3702, 2
      %v3754 = vsel %vm480, %v3751, %v3753
      %v3755 = vrot.slane %v3703, 2
      %v3756 = vrot.slane %v3704, 2
      %v3757 = vsel %vm480, %v3755, %v3756
      %v3758 = vrot.slane %v3705, 2
      %v3759 = vsel %vm480, %v3756, %v3758
      %v3760 = vrot.slane %v3706, 2
      %v3761 = vrot.slane %v3707, 2
      %v3762 = vsel %vm480, %v3760, %v3761
      %v3763 = vrot.slane %v3708, 2
      %v3764 = vsel %vm480, %v3761, %v3763
      %v3765 = vrot.slane %v3709, 2
      %v3766 = vrot.slane %v3710, 2
      %v3767 = vsel %vm480, %v3765, %v3766
      %v3768 = vrot.slane %v3711, 2
      %v3769 = vsel %vm480, %v3766, %v3768
      %v3770 = vrot.slane %v3712, 2
      %v3771 = vrot.slane %v3713, 2
      %v3772 = vsel %vm480, %v3770, %v3771
      %v3773 = vrot.slane %v3714, 2
      %v3774 = vsel %vm480, %v3771, %v3773
      %v3775 = vrot.slane %v3715, 2
      %v3776 = vrot.slane %v3716, 2
      %v3777 = vsel %vm480, %v3775, %v3776
      %v3778 = vrot.slane %v3717, 2
      %v3779 = vsel %vm480, %v3776, %v3778
      %v3780 = vrot.slane %v3718, 2
      %v3781 = vrot.slane %v3719, 2
      %v3782 = vsel %vm480, %v3780, %v3781
      %v3783 = vrot.slane %v3720, 2
      %v3784 = vsel %vm480, %v3781, %v3783
      %v3801 = vadd.f32 %v3676, %v3747
      %v3802 = vadd.f32 %v3677, %v3749
      %v3803 = vadd.f32 %v3678, %v3752
      %v3804 = vadd.f32 %v3679, %v3754
      %v3805 = vadd.f32 %v3680, %v3757
      %v3806 = vadd.f32 %v3681, %v3759
      %v3807 = vadd.f32 %v3682, %v3762
      %v3808 = vadd.f32 %v3683, %v3764
      %v3809 = vadd.f32 %v3684, %v3767
      %v3810 = vadd.f32 %v3685, %v3769
      %v3811 = vadd.f32 %v3686, %v3772
      %v3812 = vadd.f32 %v3687, %v3774
      %v3813 = vadd.f32 %v3688, %v3777
      %v3814 = vadd.f32 %v3689, %v3779
      %v3815 = vadd.f32 %v3690, %v3782
      %v3816 = vadd.f32 %v3691, %v3784
      %v3817 = vld [vmem:[%s3529 + $0x3] sm:$0x1]
      %v3818 = vlaneseq
      %v3819 = vshrl.u32 %v3818, 7
      %v3820 = vsub.s32 0, %v3819
      %v3821 = vrot.slane %v3817, %v3820
      %v3822 = vmul.f32 %v3505, %v3821
      %v3823 = vmul.f32 %v3506, %v3821
      %v3824 = vmul.f32 %v3507, %v3821
      %v3825 = vmul.f32 %v3508, %v3821
      %v3826 = vmul.f32 %v3509, %v3821
      %v3827 = vmul.f32 %v3510, %v3821
      %v3828 = vmul.f32 %v3511, %v3821
      %v3829 = vmul.f32 %v3512, %v3821
      %v3830 = vmul.f32 %v3513, %v3821
      %v3831 = vmul.f32 %v3514, %v3821
      %v3832 = vmul.f32 %v3515, %v3821
      %v3833 = vmul.f32 %v3516, %v3821
      %v3834 = vmul.f32 %v3517, %v3821
      %v3835 = vmul.f32 %v3518, %v3821
      %v3836 = vmul.f32 %v3519, %v3821
      %v3837 = vmul.f32 %v3520, %v3821
      %v3838 = vmul.f32 %v3521, %v3821
      %v3839 = vmul.f32 %v3522, %v3821
      %v3840 = vmul.f32 %v3523, %v3821
      %v3841 = vmul.f32 %v3524, %v3821
      %v3842 = vmul.f32 %v3525, %v3821
      %v3843 = vmul.f32 %v3526, %v3821
      %v3844 = vmul.f32 %v3527, %v3821
      %v3845 = vmul.f32 %v3528, %v3821
      %v3870 = vrot.slane %v3822, 3
      %v3871 = vrot.slane %v3823, 3
      %v3872 = vsel %vm606, %v3870, %v3871
      %v3873 = vrot.slane %v3824, 3
      %v3874 = vsel %vm606, %v3871, %v3873
      %v3875 = vrot.slane %v3825, 3
      %v3876 = vrot.slane %v3826, 3
      %v3877 = vsel %vm606, %v3875, %v3876
      %v3878 = vrot.slane %v3827, 3
      %v3879 = vsel %vm606, %v3876, %v3878
      %v3880 = vrot.slane %v3828, 3
      %v3881 = vrot.slane %v3829, 3
      %v3882 = vsel %vm606, %v3880, %v3881
      %v3883 = vrot.slane %v3830, 3
      %v3884 = vsel %vm606, %v3881, %v3883
      %v3885 = vrot.slane %v3831, 3
      %v3886 = vrot.slane %v3832, 3
      %v3887 = vsel %vm606, %v3885, %v3886
      %v3888 = vrot.slane %v3833, 3
      %v3889 = vsel %vm606, %v3886, %v3888
      %v3890 = vrot.slane %v3834, 3
      %v3891 = vrot.slane %v3835, 3
      %v3892 = vsel %vm606, %v3890, %v3891
      %v3893 = vrot.slane %v3836, 3
      %v3894 = vsel %vm606, %v3891, %v3893
      %v3895 = vrot.slane %v3837, 3
      %v3896 = vrot.slane %v3838, 3
      %v3897 = vsel %vm606, %v3895, %v3896
      %v3898 = vrot.slane %v3839, 3
      %v3899 = vsel %vm606, %v3896, %v3898
      %v3900 = vrot.slane %v3840, 3
      %v3901 = vrot.slane %v3841, 3
      %v3902 = vsel %vm606, %v3900, %v3901
      %v3903 = vrot.slane %v3842, 3
      %v3904 = vsel %vm606, %v3901, %v3903
      %v3905 = vrot.slane %v3843, 3
      %v3906 = vrot.slane %v3844, 3
      %v3907 = vsel %vm606, %v3905, %v3906
      %v3908 = vrot.slane %v3845, 3
      %v3909 = vsel %vm606, %v3906, %v3908
      %v3926 = vadd.f32 %v3801, %v3872
      %v3927 = vadd.f32 %v3802, %v3874
      %v3928 = vadd.f32 %v3803, %v3877
      %v3929 = vadd.f32 %v3804, %v3879
      %v3930 = vadd.f32 %v3805, %v3882
      %v3931 = vadd.f32 %v3806, %v3884
      %v3932 = vadd.f32 %v3807, %v3887
      %v3933 = vadd.f32 %v3808, %v3889
      %v3934 = vadd.f32 %v3809, %v3892
      %v3935 = vadd.f32 %v3810, %v3894
      %v3936 = vadd.f32 %v3811, %v3897
      %v3937 = vadd.f32 %v3812, %v3899
      %v3938 = vadd.f32 %v3813, %v3902
      %v3939 = vadd.f32 %v3814, %v3904
      %v3940 = vadd.f32 %v3815, %v3907
      %v3941 = vadd.f32 %v3816, %v3909
      %v3942 = vld [vmem:[%s3529 + $0x4] sm:$0x1]
      %v3943 = vlaneseq
      %v3944 = vshrl.u32 %v3943, 7
      %v3945 = vsub.s32 0, %v3944
      %v3946 = vrot.slane %v3942, %v3945
      %v3947 = vmul.f32 %v3505, %v3946
      %v3948 = vmul.f32 %v3506, %v3946
      %v3949 = vmul.f32 %v3507, %v3946
      %v3950 = vmul.f32 %v3508, %v3946
      %v3951 = vmul.f32 %v3509, %v3946
      %v3952 = vmul.f32 %v3510, %v3946
      %v3953 = vmul.f32 %v3511, %v3946
      %v3954 = vmul.f32 %v3512, %v3946
      %v3955 = vmul.f32 %v3513, %v3946
      %v3956 = vmul.f32 %v3514, %v3946
      %v3957 = vmul.f32 %v3515, %v3946
      %v3958 = vmul.f32 %v3516, %v3946
      %v3959 = vmul.f32 %v3517, %v3946
      %v3960 = vmul.f32 %v3518, %v3946
      %v3961 = vmul.f32 %v3519, %v3946
      %v3962 = vmul.f32 %v3520, %v3946
      %v3963 = vmul.f32 %v3521, %v3946
      %v3964 = vmul.f32 %v3522, %v3946
      %v3965 = vmul.f32 %v3523, %v3946
      %v3966 = vmul.f32 %v3524, %v3946
      %v3967 = vmul.f32 %v3525, %v3946
      %v3968 = vmul.f32 %v3526, %v3946
      %v3969 = vmul.f32 %v3527, %v3946
      %v3970 = vmul.f32 %v3528, %v3946
      %v3995 = vrot.slane %v3947, 4
      %v3996 = vrot.slane %v3948, 4
      %v3997 = vsel %vm732, %v3995, %v3996
      %v3998 = vrot.slane %v3949, 4
      %v3999 = vsel %vm732, %v3996, %v3998
      %v4000 = vrot.slane %v3950, 4
      %v4001 = vrot.slane %v3951, 4
      %v4002 = vsel %vm732, %v4000, %v4001
      %v4003 = vrot.slane %v3952, 4
      %v4004 = vsel %vm732, %v4001, %v4003
      %v4005 = vrot.slane %v3953, 4
      %v4006 = vrot.slane %v3954, 4
      %v4007 = vsel %vm732, %v4005, %v4006
      %v4008 = vrot.slane %v3955, 4
      %v4009 = vsel %vm732, %v4006, %v4008
      %v4010 = vrot.slane %v3956, 4
      %v4011 = vrot.slane %v3957, 4
      %v4012 = vsel %vm732, %v4010, %v4011
      %v4013 = vrot.slane %v3958, 4
      %v4014 = vsel %vm732, %v4011, %v4013
      %v4015 = vrot.slane %v3959, 4
      %v4016 = vrot.slane %v3960, 4
      %v4017 = vsel %vm732, %v4015, %v4016
      %v4018 = vrot.slane %v3961, 4
      %v4019 = vsel %vm732, %v4016, %v4018
      %v4020 = vrot.slane %v3962, 4
      %v4021 = vrot.slane %v3963, 4
      %v4022 = vsel %vm732, %v4020, %v4021
      %v4023 = vrot.slane %v3964, 4
      %v4024 = vsel %vm732, %v4021, %v4023
      %v4025 = vrot.slane %v3965, 4
      %v4026 = vrot.slane %v3966, 4
      %v4027 = vsel %vm732, %v4025, %v4026
      %v4028 = vrot.slane %v3967, 4
      %v4029 = vsel %vm732, %v4026, %v4028
      %v4030 = vrot.slane %v3968, 4
      %v4031 = vrot.slane %v3969, 4
      %v4032 = vsel %vm732, %v4030, %v4031
      %v4033 = vrot.slane %v3970, 4
      %v4034 = vsel %vm732, %v4031, %v4033
      %v4051 = vadd.f32 %v3926, %v3997
      %v4052 = vadd.f32 %v3927, %v3999
      %v4053 = vadd.f32 %v3928, %v4002
      %v4054 = vadd.f32 %v3929, %v4004
      %v4055 = vadd.f32 %v3930, %v4007
      %v4056 = vadd.f32 %v3931, %v4009
      %v4057 = vadd.f32 %v3932, %v4012
      %v4058 = vadd.f32 %v3933, %v4014
      %v4059 = vadd.f32 %v3934, %v4017
      %v4060 = vadd.f32 %v3935, %v4019
      %v4061 = vadd.f32 %v3936, %v4022
      %v4062 = vadd.f32 %v3937, %v4024
      %v4063 = vadd.f32 %v3938, %v4027
      %v4064 = vadd.f32 %v3939, %v4029
      %v4065 = vadd.f32 %v3940, %v4032
      %v4066 = vadd.f32 %v3941, %v4034
      %v4067 = vld [vmem:[%s3529 + $0x5] sm:$0x1]
      %v4068 = vlaneseq
      %v4069 = vshrl.u32 %v4068, 7
      %v4070 = vsub.s32 0, %v4069
      %v4071 = vrot.slane %v4067, %v4070
      %v4072 = vmul.f32 %v3505, %v4071
      %v4073 = vmul.f32 %v3506, %v4071
      %v4074 = vmul.f32 %v3507, %v4071
      %v4075 = vmul.f32 %v3508, %v4071
      %v4076 = vmul.f32 %v3509, %v4071
      %v4077 = vmul.f32 %v3510, %v4071
      %v4078 = vmul.f32 %v3511, %v4071
      %v4079 = vmul.f32 %v3512, %v4071
      %v4080 = vmul.f32 %v3513, %v4071
      %v4081 = vmul.f32 %v3514, %v4071
      %v4082 = vmul.f32 %v3515, %v4071
      %v4083 = vmul.f32 %v3516, %v4071
      %v4084 = vmul.f32 %v3517, %v4071
      %v4085 = vmul.f32 %v3518, %v4071
      %v4086 = vmul.f32 %v3519, %v4071
      %v4087 = vmul.f32 %v3520, %v4071
      %v4088 = vmul.f32 %v3521, %v4071
      %v4089 = vmul.f32 %v3522, %v4071
      %v4090 = vmul.f32 %v3523, %v4071
      %v4091 = vmul.f32 %v3524, %v4071
      %v4092 = vmul.f32 %v3525, %v4071
      %v4093 = vmul.f32 %v3526, %v4071
      %v4094 = vmul.f32 %v3527, %v4071
      %v4095 = vmul.f32 %v3528, %v4071
      %v4120 = vrot.slane %v4072, 5
      %v4121 = vrot.slane %v4073, 5
      %v4122 = vsel %vm858, %v4120, %v4121
      %v4123 = vrot.slane %v4074, 5
      %v4124 = vsel %vm858, %v4121, %v4123
      %v4125 = vrot.slane %v4075, 5
      %v4126 = vrot.slane %v4076, 5
      %v4127 = vsel %vm858, %v4125, %v4126
      %v4128 = vrot.slane %v4077, 5
      %v4129 = vsel %vm858, %v4126, %v4128
      %v4130 = vrot.slane %v4078, 5
      %v4131 = vrot.slane %v4079, 5
      %v4132 = vsel %vm858, %v4130, %v4131
      %v4133 = vrot.slane %v4080, 5
      %v4134 = vsel %vm858, %v4131, %v4133
      %v4135 = vrot.slane %v4081, 5
      %v4136 = vrot.slane %v4082, 5
      %v4137 = vsel %vm858, %v4135, %v4136
      %v4138 = vrot.slane %v4083, 5
      %v4139 = vsel %vm858, %v4136, %v4138
      %v4140 = vrot.slane %v4084, 5
      %v4141 = vrot.slane %v4085, 5
      %v4142 = vsel %vm858, %v4140, %v4141
      %v4143 = vrot.slane %v4086, 5
      %v4144 = vsel %vm858, %v4141, %v4143
      %v4145 = vrot.slane %v4087, 5
      %v4146 = vrot.slane %v4088, 5
      %v4147 = vsel %vm858, %v4145, %v4146
      %v4148 = vrot.slane %v4089, 5
      %v4149 = vsel %vm858, %v4146, %v4148
      %v4150 = vrot.slane %v4090, 5
      %v4151 = vrot.slane %v4091, 5
      %v4152 = vsel %vm858, %v4150, %v4151
      %v4153 = vrot.slane %v4092, 5
      %v4154 = vsel %vm858, %v4151, %v4153
      %v4155 = vrot.slane %v4093, 5
      %v4156 = vrot.slane %v4094, 5
      %v4157 = vsel %vm858, %v4155, %v4156
      %v4158 = vrot.slane %v4095, 5
      %v4159 = vsel %vm858, %v4156, %v4158
      %v4176 = vadd.f32 %v4051, %v4122
      %v4177 = vadd.f32 %v4052, %v4124
      %v4178 = vadd.f32 %v4053, %v4127
      %v4179 = vadd.f32 %v4054, %v4129
      %v4180 = vadd.f32 %v4055, %v4132
      %v4181 = vadd.f32 %v4056, %v4134
      %v4182 = vadd.f32 %v4057, %v4137
      %v4183 = vadd.f32 %v4058, %v4139
      %v4184 = vadd.f32 %v4059, %v4142
      %v4185 = vadd.f32 %v4060, %v4144
      %v4186 = vadd.f32 %v4061, %v4147
      %v4187 = vadd.f32 %v4062, %v4149
      %v4188 = vadd.f32 %v4063, %v4152
      %v4189 = vadd.f32 %v4064, %v4154
      %v4190 = vadd.f32 %v4065, %v4157
      %v4191 = vadd.f32 %v4066, %v4159
      %v4192 = vld [vmem:[%s3529 + $0x6] sm:$0x1]
      %v4193 = vlaneseq
      %v4194 = vshrl.u32 %v4193, 7
      %v4195 = vsub.s32 0, %v4194
      %v4196 = vrot.slane %v4192, %v4195
      %v4197 = vmul.f32 %v3505, %v4196
      %v4198 = vmul.f32 %v3506, %v4196
      %v4199 = vmul.f32 %v3507, %v4196
      %v4200 = vmul.f32 %v3508, %v4196
      %v4201 = vmul.f32 %v3509, %v4196
      %v4202 = vmul.f32 %v3510, %v4196
      %v4203 = vmul.f32 %v3511, %v4196
      %v4204 = vmul.f32 %v3512, %v4196
      %v4205 = vmul.f32 %v3513, %v4196
      %v4206 = vmul.f32 %v3514, %v4196
      %v4207 = vmul.f32 %v3515, %v4196
      %v4208 = vmul.f32 %v3516, %v4196
      %v4209 = vmul.f32 %v3517, %v4196
      %v4210 = vmul.f32 %v3518, %v4196
      %v4211 = vmul.f32 %v3519, %v4196
      %v4212 = vmul.f32 %v3520, %v4196
      %v4213 = vmul.f32 %v3521, %v4196
      %v4214 = vmul.f32 %v3522, %v4196
      %v4215 = vmul.f32 %v3523, %v4196
      %v4216 = vmul.f32 %v3524, %v4196
      %v4217 = vmul.f32 %v3525, %v4196
      %v4218 = vmul.f32 %v3526, %v4196
      %v4219 = vmul.f32 %v3527, %v4196
      %v4220 = vmul.f32 %v3528, %v4196
      %v4245 = vrot.slane %v4197, 6
      %v4246 = vrot.slane %v4198, 6
      %v4247 = vsel %vm984, %v4245, %v4246
      %v4248 = vrot.slane %v4199, 6
      %v4249 = vsel %vm984, %v4246, %v4248
      %v4250 = vrot.slane %v4200, 6
      %v4251 = vrot.slane %v4201, 6
      %v4252 = vsel %vm984, %v4250, %v4251
      %v4253 = vrot.slane %v4202, 6
      %v4254 = vsel %vm984, %v4251, %v4253
      %v4255 = vrot.slane %v4203, 6
      %v4256 = vrot.slane %v4204, 6
      %v4257 = vsel %vm984, %v4255, %v4256
      %v4258 = vrot.slane %v4205, 6
      %v4259 = vsel %vm984, %v4256, %v4258
      %v4260 = vrot.slane %v4206, 6
      %v4261 = vrot.slane %v4207, 6
      %v4262 = vsel %vm984, %v4260, %v4261
      %v4263 = vrot.slane %v4208, 6
      %v4264 = vsel %vm984, %v4261, %v4263
      %v4265 = vrot.slane %v4209, 6
      %v4266 = vrot.slane %v4210, 6
      %v4267 = vsel %vm984, %v4265, %v4266
      %v4268 = vrot.slane %v4211, 6
      %v4269 = vsel %vm984, %v4266, %v4268
      %v4270 = vrot.slane %v4212, 6
      %v4271 = vrot.slane %v4213, 6
      %v4272 = vsel %vm984, %v4270, %v4271
      %v4273 = vrot.slane %v4214, 6
      %v4274 = vsel %vm984, %v4271, %v4273
      %v4275 = vrot.slane %v4215, 6
      %v4276 = vrot.slane %v4216, 6
      %v4277 = vsel %vm984, %v4275, %v4276
      %v4278 = vrot.slane %v4217, 6
      %v4279 = vsel %vm984, %v4276, %v4278
      %v4280 = vrot.slane %v4218, 6
      %v4281 = vrot.slane %v4219, 6
      %v4282 = vsel %vm984, %v4280, %v4281
      %v4283 = vrot.slane %v4220, 6
      %v4284 = vsel %vm984, %v4281, %v4283
      %v4301 = vadd.f32 %v4176, %v4247
      %v4302 = vadd.f32 %v4177, %v4249
      %v4303 = vadd.f32 %v4178, %v4252
      %v4304 = vadd.f32 %v4179, %v4254
      %v4305 = vadd.f32 %v4180, %v4257
      %v4306 = vadd.f32 %v4181, %v4259
      %v4307 = vadd.f32 %v4182, %v4262
      %v4308 = vadd.f32 %v4183, %v4264
      %v4309 = vadd.f32 %v4184, %v4267
      %v4310 = vadd.f32 %v4185, %v4269
      %v4311 = vadd.f32 %v4186, %v4272
      %v4312 = vadd.f32 %v4187, %v4274
      %v4313 = vadd.f32 %v4188, %v4277
      %v4314 = vadd.f32 %v4189, %v4279
      %v4315 = vadd.f32 %v4190, %v4282
      %v4316 = vadd.f32 %v4191, %v4284
      %s4317 = sadd.s32 %s253, 5
      %s4318 = smul.u32 %s4317, 24
      %s4319 = scalar_lea.vmem %s231, %s4318
      %v4320 = vld [vmem:[%s4319] sm:$0xff]
      %v4321 = vld [vmem:[%s4319 + $0x8] sm:$0xff]
      %v4322 = vld [vmem:[%s4319 + $0x10] sm:$0x3f]
      %v4323 = vld [vmem:[%s4319 + $0x18] sm:$0xff]
      %v4324 = vld [vmem:[%s4319 + $0x20] sm:$0xff]
      %v4325 = vld [vmem:[%s4319 + $0x28] sm:$0x3f]
      %v4326 = vld [vmem:[%s4319 + $0x30] sm:$0xff]
      %v4327 = vld [vmem:[%s4319 + $0x38] sm:$0xff]
      %v4328 = vld [vmem:[%s4319 + $0x40] sm:$0x3f]
      %v4329 = vld [vmem:[%s4319 + $0x48] sm:$0xff]
      %v4330 = vld [vmem:[%s4319 + $0x50] sm:$0xff]
      %v4331 = vld [vmem:[%s4319 + $0x58] sm:$0x3f]
      %v4332 = vld [vmem:[%s4319 + $0x60] sm:$0xff]
      %v4333 = vld [vmem:[%s4319 + $0x68] sm:$0xff]
      %v4334 = vld [vmem:[%s4319 + $0x70] sm:$0x3f]
      %v4335 = vld [vmem:[%s4319 + $0x78] sm:$0xff]
      %v4336 = vld [vmem:[%s4319 + $0x80] sm:$0xff]
      %v4337 = vld [vmem:[%s4319 + $0x88] sm:$0x3f]
      %v4338 = vld [vmem:[%s4319 + $0x90] sm:$0xff]
      %v4339 = vld [vmem:[%s4319 + $0x98] sm:$0xff]
      %v4340 = vld [vmem:[%s4319 + $0xa0] sm:$0x3f]
      %v4341 = vld [vmem:[%s4319 + $0xa8] sm:$0xff]
      %v4342 = vld [vmem:[%s4319 + $0xb0] sm:$0xff]
      %v4343 = vld [vmem:[%s4319 + $0xb8] sm:$0x3f]
      %s4344 = scalar_lea.vmem %s235, 40
      %v4345 = vld [vmem:[%s4344] sm:$0x1]
      %v4346 = vlaneseq
      %v4347 = vshrl.u32 %v4346, 7
      %v4348 = vsub.s32 0, %v4347
      %v4349 = vrot.slane %v4345, %v4348
      %v4350 = vmul.f32 %v4320, %v4349
      %v4351 = vmul.f32 %v4321, %v4349
      %v4352 = vmul.f32 %v4323, %v4349
      %v4353 = vmul.f32 %v4324, %v4349
      %v4354 = vmul.f32 %v4326, %v4349
      %v4355 = vmul.f32 %v4327, %v4349
      %v4356 = vmul.f32 %v4329, %v4349
      %v4357 = vmul.f32 %v4330, %v4349
      %v4358 = vmul.f32 %v4332, %v4349
      %v4359 = vmul.f32 %v4333, %v4349
      %v4360 = vmul.f32 %v4335, %v4349
      %v4361 = vmul.f32 %v4336, %v4349
      %v4362 = vmul.f32 %v4338, %v4349
      %v4363 = vmul.f32 %v4339, %v4349
      %v4364 = vmul.f32 %v4341, %v4349
      %v4365 = vmul.f32 %v4342, %v4349
      %v4366 = vadd.f32 %v4301, %v4350
      %v4367 = vadd.f32 %v4302, %v4351
      %v4368 = vadd.f32 %v4303, %v4352
      %v4369 = vadd.f32 %v4304, %v4353
      %v4370 = vadd.f32 %v4305, %v4354
      %v4371 = vadd.f32 %v4306, %v4355
      %v4372 = vadd.f32 %v4307, %v4356
      %v4373 = vadd.f32 %v4308, %v4357
      %v4374 = vadd.f32 %v4309, %v4358
      %v4375 = vadd.f32 %v4310, %v4359
      %v4376 = vadd.f32 %v4311, %v4360
      %v4377 = vadd.f32 %v4312, %v4361
      %v4378 = vadd.f32 %v4313, %v4362
      %v4379 = vadd.f32 %v4314, %v4363
      %v4380 = vadd.f32 %v4315, %v4364
      %v4381 = vadd.f32 %v4316, %v4365
      %v4382 = vld [vmem:[%s4344 + $0x1] sm:$0x1]
      %v4383 = vlaneseq
      %v4384 = vshrl.u32 %v4383, 7
      %v4385 = vsub.s32 0, %v4384
      %v4386 = vrot.slane %v4382, %v4385
      %v4387 = vmul.f32 %v4320, %v4386
      %v4388 = vmul.f32 %v4321, %v4386
      %v4389 = vmul.f32 %v4322, %v4386
      %v4390 = vmul.f32 %v4323, %v4386
      %v4391 = vmul.f32 %v4324, %v4386
      %v4392 = vmul.f32 %v4325, %v4386
      %v4393 = vmul.f32 %v4326, %v4386
      %v4394 = vmul.f32 %v4327, %v4386
      %v4395 = vmul.f32 %v4328, %v4386
      %v4396 = vmul.f32 %v4329, %v4386
      %v4397 = vmul.f32 %v4330, %v4386
      %v4398 = vmul.f32 %v4331, %v4386
      %v4399 = vmul.f32 %v4332, %v4386
      %v4400 = vmul.f32 %v4333, %v4386
      %v4401 = vmul.f32 %v4334, %v4386
      %v4402 = vmul.f32 %v4335, %v4386
      %v4403 = vmul.f32 %v4336, %v4386
      %v4404 = vmul.f32 %v4337, %v4386
      %v4405 = vmul.f32 %v4338, %v4386
      %v4406 = vmul.f32 %v4339, %v4386
      %v4407 = vmul.f32 %v4340, %v4386
      %v4408 = vmul.f32 %v4341, %v4386
      %v4409 = vmul.f32 %v4342, %v4386
      %v4410 = vmul.f32 %v4343, %v4386
      %v4435 = vrot.slane %v4387, 1
      %v4436 = vrot.slane %v4388, 1
      %v4437 = vsel %vm354, %v4435, %v4436
      %v4438 = vrot.slane %v4389, 1
      %v4439 = vsel %vm354, %v4436, %v4438
      %v4440 = vrot.slane %v4390, 1
      %v4441 = vrot.slane %v4391, 1
      %v4442 = vsel %vm354, %v4440, %v4441
      %v4443 = vrot.slane %v4392, 1
      %v4444 = vsel %vm354, %v4441, %v4443
      %v4445 = vrot.slane %v4393, 1
      %v4446 = vrot.slane %v4394, 1
      %v4447 = vsel %vm354, %v4445, %v4446
      %v4448 = vrot.slane %v4395, 1
      %v4449 = vsel %vm354, %v4446, %v4448
      %v4450 = vrot.slane %v4396, 1
      %v4451 = vrot.slane %v4397, 1
      %v4452 = vsel %vm354, %v4450, %v4451
      %v4453 = vrot.slane %v4398, 1
      %v4454 = vsel %vm354, %v4451, %v4453
      %v4455 = vrot.slane %v4399, 1
      %v4456 = vrot.slane %v4400, 1
      %v4457 = vsel %vm354, %v4455, %v4456
      %v4458 = vrot.slane %v4401, 1
      %v4459 = vsel %vm354, %v4456, %v4458
      %v4460 = vrot.slane %v4402, 1
      %v4461 = vrot.slane %v4403, 1
      %v4462 = vsel %vm354, %v4460, %v4461
      %v4463 = vrot.slane %v4404, 1
      %v4464 = vsel %vm354, %v4461, %v4463
      %v4465 = vrot.slane %v4405, 1
      %v4466 = vrot.slane %v4406, 1
      %v4467 = vsel %vm354, %v4465, %v4466
      %v4468 = vrot.slane %v4407, 1
      %v4469 = vsel %vm354, %v4466, %v4468
      %v4470 = vrot.slane %v4408, 1
      %v4471 = vrot.slane %v4409, 1
      %v4472 = vsel %vm354, %v4470, %v4471
      %v4473 = vrot.slane %v4410, 1
      %v4474 = vsel %vm354, %v4471, %v4473
      %v4491 = vadd.f32 %v4366, %v4437
      %v4492 = vadd.f32 %v4367, %v4439
      %v4493 = vadd.f32 %v4368, %v4442
      %v4494 = vadd.f32 %v4369, %v4444
      %v4495 = vadd.f32 %v4370, %v4447
      %v4496 = vadd.f32 %v4371, %v4449
      %v4497 = vadd.f32 %v4372, %v4452
      %v4498 = vadd.f32 %v4373, %v4454
      %v4499 = vadd.f32 %v4374, %v4457
      %v4500 = vadd.f32 %v4375, %v4459
      %v4501 = vadd.f32 %v4376, %v4462
      %v4502 = vadd.f32 %v4377, %v4464
      %v4503 = vadd.f32 %v4378, %v4467
      %v4504 = vadd.f32 %v4379, %v4469
      %v4505 = vadd.f32 %v4380, %v4472
      %v4506 = vadd.f32 %v4381, %v4474
      %v4507 = vld [vmem:[%s4344 + $0x2] sm:$0x1]
      %v4508 = vlaneseq
      %v4509 = vshrl.u32 %v4508, 7
      %v4510 = vsub.s32 0, %v4509
      %v4511 = vrot.slane %v4507, %v4510
      %v4512 = vmul.f32 %v4320, %v4511
      %v4513 = vmul.f32 %v4321, %v4511
      %v4514 = vmul.f32 %v4322, %v4511
      %v4515 = vmul.f32 %v4323, %v4511
      %v4516 = vmul.f32 %v4324, %v4511
      %v4517 = vmul.f32 %v4325, %v4511
      %v4518 = vmul.f32 %v4326, %v4511
      %v4519 = vmul.f32 %v4327, %v4511
      %v4520 = vmul.f32 %v4328, %v4511
      %v4521 = vmul.f32 %v4329, %v4511
      %v4522 = vmul.f32 %v4330, %v4511
      %v4523 = vmul.f32 %v4331, %v4511
      %v4524 = vmul.f32 %v4332, %v4511
      %v4525 = vmul.f32 %v4333, %v4511
      %v4526 = vmul.f32 %v4334, %v4511
      %v4527 = vmul.f32 %v4335, %v4511
      %v4528 = vmul.f32 %v4336, %v4511
      %v4529 = vmul.f32 %v4337, %v4511
      %v4530 = vmul.f32 %v4338, %v4511
      %v4531 = vmul.f32 %v4339, %v4511
      %v4532 = vmul.f32 %v4340, %v4511
      %v4533 = vmul.f32 %v4341, %v4511
      %v4534 = vmul.f32 %v4342, %v4511
      %v4535 = vmul.f32 %v4343, %v4511
      %v4560 = vrot.slane %v4512, 2
      %v4561 = vrot.slane %v4513, 2
      %v4562 = vsel %vm480, %v4560, %v4561
      %v4563 = vrot.slane %v4514, 2
      %v4564 = vsel %vm480, %v4561, %v4563
      %v4565 = vrot.slane %v4515, 2
      %v4566 = vrot.slane %v4516, 2
      %v4567 = vsel %vm480, %v4565, %v4566
      %v4568 = vrot.slane %v4517, 2
      %v4569 = vsel %vm480, %v4566, %v4568
      %v4570 = vrot.slane %v4518, 2
      %v4571 = vrot.slane %v4519, 2
      %v4572 = vsel %vm480, %v4570, %v4571
      %v4573 = vrot.slane %v4520, 2
      %v4574 = vsel %vm480, %v4571, %v4573
      %v4575 = vrot.slane %v4521, 2
      %v4576 = vrot.slane %v4522, 2
      %v4577 = vsel %vm480, %v4575, %v4576
      %v4578 = vrot.slane %v4523, 2
      %v4579 = vsel %vm480, %v4576, %v4578
      %v4580 = vrot.slane %v4524, 2
      %v4581 = vrot.slane %v4525, 2
      %v4582 = vsel %vm480, %v4580, %v4581
      %v4583 = vrot.slane %v4526, 2
      %v4584 = vsel %vm480, %v4581, %v4583
      %v4585 = vrot.slane %v4527, 2
      %v4586 = vrot.slane %v4528, 2
      %v4587 = vsel %vm480, %v4585, %v4586
      %v4588 = vrot.slane %v4529, 2
      %v4589 = vsel %vm480, %v4586, %v4588
      %v4590 = vrot.slane %v4530, 2
      %v4591 = vrot.slane %v4531, 2
      %v4592 = vsel %vm480, %v4590, %v4591
      %v4593 = vrot.slane %v4532, 2
      %v4594 = vsel %vm480, %v4591, %v4593
      %v4595 = vrot.slane %v4533, 2
      %v4596 = vrot.slane %v4534, 2
      %v4597 = vsel %vm480, %v4595, %v4596
      %v4598 = vrot.slane %v4535, 2
      %v4599 = vsel %vm480, %v4596, %v4598
      %v4616 = vadd.f32 %v4491, %v4562
      %v4617 = vadd.f32 %v4492, %v4564
      %v4618 = vadd.f32 %v4493, %v4567
      %v4619 = vadd.f32 %v4494, %v4569
      %v4620 = vadd.f32 %v4495, %v4572
      %v4621 = vadd.f32 %v4496, %v4574
      %v4622 = vadd.f32 %v4497, %v4577
      %v4623 = vadd.f32 %v4498, %v4579
      %v4624 = vadd.f32 %v4499, %v4582
      %v4625 = vadd.f32 %v4500, %v4584
      %v4626 = vadd.f32 %v4501, %v4587
      %v4627 = vadd.f32 %v4502, %v4589
      %v4628 = vadd.f32 %v4503, %v4592
      %v4629 = vadd.f32 %v4504, %v4594
      %v4630 = vadd.f32 %v4505, %v4597
      %v4631 = vadd.f32 %v4506, %v4599
      %v4632 = vld [vmem:[%s4344 + $0x3] sm:$0x1]
      %v4633 = vlaneseq
      %v4634 = vshrl.u32 %v4633, 7
      %v4635 = vsub.s32 0, %v4634
      %v4636 = vrot.slane %v4632, %v4635
      %v4637 = vmul.f32 %v4320, %v4636
      %v4638 = vmul.f32 %v4321, %v4636
      %v4639 = vmul.f32 %v4322, %v4636
      %v4640 = vmul.f32 %v4323, %v4636
      %v4641 = vmul.f32 %v4324, %v4636
      %v4642 = vmul.f32 %v4325, %v4636
      %v4643 = vmul.f32 %v4326, %v4636
      %v4644 = vmul.f32 %v4327, %v4636
      %v4645 = vmul.f32 %v4328, %v4636
      %v4646 = vmul.f32 %v4329, %v4636
      %v4647 = vmul.f32 %v4330, %v4636
      %v4648 = vmul.f32 %v4331, %v4636
      %v4649 = vmul.f32 %v4332, %v4636
      %v4650 = vmul.f32 %v4333, %v4636
      %v4651 = vmul.f32 %v4334, %v4636
      %v4652 = vmul.f32 %v4335, %v4636
      %v4653 = vmul.f32 %v4336, %v4636
      %v4654 = vmul.f32 %v4337, %v4636
      %v4655 = vmul.f32 %v4338, %v4636
      %v4656 = vmul.f32 %v4339, %v4636
      %v4657 = vmul.f32 %v4340, %v4636
      %v4658 = vmul.f32 %v4341, %v4636
      %v4659 = vmul.f32 %v4342, %v4636
      %v4660 = vmul.f32 %v4343, %v4636
      %v4685 = vrot.slane %v4637, 3
      %v4686 = vrot.slane %v4638, 3
      %v4687 = vsel %vm606, %v4685, %v4686
      %v4688 = vrot.slane %v4639, 3
      %v4689 = vsel %vm606, %v4686, %v4688
      %v4690 = vrot.slane %v4640, 3
      %v4691 = vrot.slane %v4641, 3
      %v4692 = vsel %vm606, %v4690, %v4691
      %v4693 = vrot.slane %v4642, 3
      %v4694 = vsel %vm606, %v4691, %v4693
      %v4695 = vrot.slane %v4643, 3
      %v4696 = vrot.slane %v4644, 3
      %v4697 = vsel %vm606, %v4695, %v4696
      %v4698 = vrot.slane %v4645, 3
      %v4699 = vsel %vm606, %v4696, %v4698
      %v4700 = vrot.slane %v4646, 3
      %v4701 = vrot.slane %v4647, 3
      %v4702 = vsel %vm606, %v4700, %v4701
      %v4703 = vrot.slane %v4648, 3
      %v4704 = vsel %vm606, %v4701, %v4703
      %v4705 = vrot.slane %v4649, 3
      %v4706 = vrot.slane %v4650, 3
      %v4707 = vsel %vm606, %v4705, %v4706
      %v4708 = vrot.slane %v4651, 3
      %v4709 = vsel %vm606, %v4706, %v4708
      %v4710 = vrot.slane %v4652, 3
      %v4711 = vrot.slane %v4653, 3
      %v4712 = vsel %vm606, %v4710, %v4711
      %v4713 = vrot.slane %v4654, 3
      %v4714 = vsel %vm606, %v4711, %v4713
      %v4715 = vrot.slane %v4655, 3
      %v4716 = vrot.slane %v4656, 3
      %v4717 = vsel %vm606, %v4715, %v4716
      %v4718 = vrot.slane %v4657, 3
      %v4719 = vsel %vm606, %v4716, %v4718
      %v4720 = vrot.slane %v4658, 3
      %v4721 = vrot.slane %v4659, 3
      %v4722 = vsel %vm606, %v4720, %v4721
      %v4723 = vrot.slane %v4660, 3
      %v4724 = vsel %vm606, %v4721, %v4723
      %v4741 = vadd.f32 %v4616, %v4687
      %v4742 = vadd.f32 %v4617, %v4689
      %v4743 = vadd.f32 %v4618, %v4692
      %v4744 = vadd.f32 %v4619, %v4694
      %v4745 = vadd.f32 %v4620, %v4697
      %v4746 = vadd.f32 %v4621, %v4699
      %v4747 = vadd.f32 %v4622, %v4702
      %v4748 = vadd.f32 %v4623, %v4704
      %v4749 = vadd.f32 %v4624, %v4707
      %v4750 = vadd.f32 %v4625, %v4709
      %v4751 = vadd.f32 %v4626, %v4712
      %v4752 = vadd.f32 %v4627, %v4714
      %v4753 = vadd.f32 %v4628, %v4717
      %v4754 = vadd.f32 %v4629, %v4719
      %v4755 = vadd.f32 %v4630, %v4722
      %v4756 = vadd.f32 %v4631, %v4724
      %v4757 = vld [vmem:[%s4344 + $0x4] sm:$0x1]
      %v4758 = vlaneseq
      %v4759 = vshrl.u32 %v4758, 7
      %v4760 = vsub.s32 0, %v4759
      %v4761 = vrot.slane %v4757, %v4760
      %v4762 = vmul.f32 %v4320, %v4761
      %v4763 = vmul.f32 %v4321, %v4761
      %v4764 = vmul.f32 %v4322, %v4761
      %v4765 = vmul.f32 %v4323, %v4761
      %v4766 = vmul.f32 %v4324, %v4761
      %v4767 = vmul.f32 %v4325, %v4761
      %v4768 = vmul.f32 %v4326, %v4761
      %v4769 = vmul.f32 %v4327, %v4761
      %v4770 = vmul.f32 %v4328, %v4761
      %v4771 = vmul.f32 %v4329, %v4761
      %v4772 = vmul.f32 %v4330, %v4761
      %v4773 = vmul.f32 %v4331, %v4761
      %v4774 = vmul.f32 %v4332, %v4761
      %v4775 = vmul.f32 %v4333, %v4761
      %v4776 = vmul.f32 %v4334, %v4761
      %v4777 = vmul.f32 %v4335, %v4761
      %v4778 = vmul.f32 %v4336, %v4761
      %v4779 = vmul.f32 %v4337, %v4761
      %v4780 = vmul.f32 %v4338, %v4761
      %v4781 = vmul.f32 %v4339, %v4761
      %v4782 = vmul.f32 %v4340, %v4761
      %v4783 = vmul.f32 %v4341, %v4761
      %v4784 = vmul.f32 %v4342, %v4761
      %v4785 = vmul.f32 %v4343, %v4761
      %v4810 = vrot.slane %v4762, 4
      %v4811 = vrot.slane %v4763, 4
      %v4812 = vsel %vm732, %v4810, %v4811
      %v4813 = vrot.slane %v4764, 4
      %v4814 = vsel %vm732, %v4811, %v4813
      %v4815 = vrot.slane %v4765, 4
      %v4816 = vrot.slane %v4766, 4
      %v4817 = vsel %vm732, %v4815, %v4816
      %v4818 = vrot.slane %v4767, 4
      %v4819 = vsel %vm732, %v4816, %v4818
      %v4820 = vrot.slane %v4768, 4
      %v4821 = vrot.slane %v4769, 4
      %v4822 = vsel %vm732, %v4820, %v4821
      %v4823 = vrot.slane %v4770, 4
      %v4824 = vsel %vm732, %v4821, %v4823
      %v4825 = vrot.slane %v4771, 4
      %v4826 = vrot.slane %v4772, 4
      %v4827 = vsel %vm732, %v4825, %v4826
      %v4828 = vrot.slane %v4773, 4
      %v4829 = vsel %vm732, %v4826, %v4828
      %v4830 = vrot.slane %v4774, 4
      %v4831 = vrot.slane %v4775, 4
      %v4832 = vsel %vm732, %v4830, %v4831
      %v4833 = vrot.slane %v4776, 4
      %v4834 = vsel %vm732, %v4831, %v4833
      %v4835 = vrot.slane %v4777, 4
      %v4836 = vrot.slane %v4778, 4
      %v4837 = vsel %vm732, %v4835, %v4836
      %v4838 = vrot.slane %v4779, 4
      %v4839 = vsel %vm732, %v4836, %v4838
      %v4840 = vrot.slane %v4780, 4
      %v4841 = vrot.slane %v4781, 4
      %v4842 = vsel %vm732, %v4840, %v4841
      %v4843 = vrot.slane %v4782, 4
      %v4844 = vsel %vm732, %v4841, %v4843
      %v4845 = vrot.slane %v4783, 4
      %v4846 = vrot.slane %v4784, 4
      %v4847 = vsel %vm732, %v4845, %v4846
      %v4848 = vrot.slane %v4785, 4
      %v4849 = vsel %vm732, %v4846, %v4848
      %v4866 = vadd.f32 %v4741, %v4812
      %v4867 = vadd.f32 %v4742, %v4814
      %v4868 = vadd.f32 %v4743, %v4817
      %v4869 = vadd.f32 %v4744, %v4819
      %v4870 = vadd.f32 %v4745, %v4822
      %v4871 = vadd.f32 %v4746, %v4824
      %v4872 = vadd.f32 %v4747, %v4827
      %v4873 = vadd.f32 %v4748, %v4829
      %v4874 = vadd.f32 %v4749, %v4832
      %v4875 = vadd.f32 %v4750, %v4834
      %v4876 = vadd.f32 %v4751, %v4837
      %v4877 = vadd.f32 %v4752, %v4839
      %v4878 = vadd.f32 %v4753, %v4842
      %v4879 = vadd.f32 %v4754, %v4844
      %v4880 = vadd.f32 %v4755, %v4847
      %v4881 = vadd.f32 %v4756, %v4849
      %v4882 = vld [vmem:[%s4344 + $0x5] sm:$0x1]
      %v4883 = vlaneseq
      %v4884 = vshrl.u32 %v4883, 7
      %v4885 = vsub.s32 0, %v4884
      %v4886 = vrot.slane %v4882, %v4885
      %v4887 = vmul.f32 %v4320, %v4886
      %v4888 = vmul.f32 %v4321, %v4886
      %v4889 = vmul.f32 %v4322, %v4886
      %v4890 = vmul.f32 %v4323, %v4886
      %v4891 = vmul.f32 %v4324, %v4886
      %v4892 = vmul.f32 %v4325, %v4886
      %v4893 = vmul.f32 %v4326, %v4886
      %v4894 = vmul.f32 %v4327, %v4886
      %v4895 = vmul.f32 %v4328, %v4886
      %v4896 = vmul.f32 %v4329, %v4886
      %v4897 = vmul.f32 %v4330, %v4886
      %v4898 = vmul.f32 %v4331, %v4886
      %v4899 = vmul.f32 %v4332, %v4886
      %v4900 = vmul.f32 %v4333, %v4886
      %v4901 = vmul.f32 %v4334, %v4886
      %v4902 = vmul.f32 %v4335, %v4886
      %v4903 = vmul.f32 %v4336, %v4886
      %v4904 = vmul.f32 %v4337, %v4886
      %v4905 = vmul.f32 %v4338, %v4886
      %v4906 = vmul.f32 %v4339, %v4886
      %v4907 = vmul.f32 %v4340, %v4886
      %v4908 = vmul.f32 %v4341, %v4886
      %v4909 = vmul.f32 %v4342, %v4886
      %v4910 = vmul.f32 %v4343, %v4886
      %v4935 = vrot.slane %v4887, 5
      %v4936 = vrot.slane %v4888, 5
      %v4937 = vsel %vm858, %v4935, %v4936
      %v4938 = vrot.slane %v4889, 5
      %v4939 = vsel %vm858, %v4936, %v4938
      %v4940 = vrot.slane %v4890, 5
      %v4941 = vrot.slane %v4891, 5
      %v4942 = vsel %vm858, %v4940, %v4941
      %v4943 = vrot.slane %v4892, 5
      %v4944 = vsel %vm858, %v4941, %v4943
      %v4945 = vrot.slane %v4893, 5
      %v4946 = vrot.slane %v4894, 5
      %v4947 = vsel %vm858, %v4945, %v4946
      %v4948 = vrot.slane %v4895, 5
      %v4949 = vsel %vm858, %v4946, %v4948
      %v4950 = vrot.slane %v4896, 5
      %v4951 = vrot.slane %v4897, 5
      %v4952 = vsel %vm858, %v4950, %v4951
      %v4953 = vrot.slane %v4898, 5
      %v4954 = vsel %vm858, %v4951, %v4953
      %v4955 = vrot.slane %v4899, 5
      %v4956 = vrot.slane %v4900, 5
      %v4957 = vsel %vm858, %v4955, %v4956
      %v4958 = vrot.slane %v4901, 5
      %v4959 = vsel %vm858, %v4956, %v4958
      %v4960 = vrot.slane %v4902, 5
      %v4961 = vrot.slane %v4903, 5
      %v4962 = vsel %vm858, %v4960, %v4961
      %v4963 = vrot.slane %v4904, 5
      %v4964 = vsel %vm858, %v4961, %v4963
      %v4965 = vrot.slane %v4905, 5
      %v4966 = vrot.slane %v4906, 5
      %v4967 = vsel %vm858, %v4965, %v4966
      %v4968 = vrot.slane %v4907, 5
      %v4969 = vsel %vm858, %v4966, %v4968
      %v4970 = vrot.slane %v4908, 5
      %v4971 = vrot.slane %v4909, 5
      %v4972 = vsel %vm858, %v4970, %v4971
      %v4973 = vrot.slane %v4910, 5
      %v4974 = vsel %vm858, %v4971, %v4973
      %v4991 = vadd.f32 %v4866, %v4937
      %v4992 = vadd.f32 %v4867, %v4939
      %v4993 = vadd.f32 %v4868, %v4942
      %v4994 = vadd.f32 %v4869, %v4944
      %v4995 = vadd.f32 %v4870, %v4947
      %v4996 = vadd.f32 %v4871, %v4949
      %v4997 = vadd.f32 %v4872, %v4952
      %v4998 = vadd.f32 %v4873, %v4954
      %v4999 = vadd.f32 %v4874, %v4957
      %v5000 = vadd.f32 %v4875, %v4959
      %v5001 = vadd.f32 %v4876, %v4962
      %v5002 = vadd.f32 %v4877, %v4964
      %v5003 = vadd.f32 %v4878, %v4967
      %v5004 = vadd.f32 %v4879, %v4969
      %v5005 = vadd.f32 %v4880, %v4972
      %v5006 = vadd.f32 %v4881, %v4974
      %v5007 = vld [vmem:[%s4344 + $0x6] sm:$0x1]
      %v5008 = vlaneseq
      %v5009 = vshrl.u32 %v5008, 7
      %v5010 = vsub.s32 0, %v5009
      %v5011 = vrot.slane %v5007, %v5010
      %v5012 = vmul.f32 %v4320, %v5011
      %v5013 = vmul.f32 %v4321, %v5011
      %v5014 = vmul.f32 %v4322, %v5011
      %v5015 = vmul.f32 %v4323, %v5011
      %v5016 = vmul.f32 %v4324, %v5011
      %v5017 = vmul.f32 %v4325, %v5011
      %v5018 = vmul.f32 %v4326, %v5011
      %v5019 = vmul.f32 %v4327, %v5011
      %v5020 = vmul.f32 %v4328, %v5011
      %v5021 = vmul.f32 %v4329, %v5011
      %v5022 = vmul.f32 %v4330, %v5011
      %v5023 = vmul.f32 %v4331, %v5011
      %v5024 = vmul.f32 %v4332, %v5011
      %v5025 = vmul.f32 %v4333, %v5011
      %v5026 = vmul.f32 %v4334, %v5011
      %v5027 = vmul.f32 %v4335, %v5011
      %v5028 = vmul.f32 %v4336, %v5011
      %v5029 = vmul.f32 %v4337, %v5011
      %v5030 = vmul.f32 %v4338, %v5011
      %v5031 = vmul.f32 %v4339, %v5011
      %v5032 = vmul.f32 %v4340, %v5011
      %v5033 = vmul.f32 %v4341, %v5011
      %v5034 = vmul.f32 %v4342, %v5011
      %v5035 = vmul.f32 %v4343, %v5011
      %v5060 = vrot.slane %v5012, 6
      %v5061 = vrot.slane %v5013, 6
      %v5062 = vsel %vm984, %v5060, %v5061
      %v5063 = vrot.slane %v5014, 6
      %v5064 = vsel %vm984, %v5061, %v5063
      %v5065 = vrot.slane %v5015, 6
      %v5066 = vrot.slane %v5016, 6
      %v5067 = vsel %vm984, %v5065, %v5066
      %v5068 = vrot.slane %v5017, 6
      %v5069 = vsel %vm984, %v5066, %v5068
      %v5070 = vrot.slane %v5018, 6
      %v5071 = vrot.slane %v5019, 6
      %v5072 = vsel %vm984, %v5070, %v5071
      %v5073 = vrot.slane %v5020, 6
      %v5074 = vsel %vm984, %v5071, %v5073
      %v5075 = vrot.slane %v5021, 6
      %v5076 = vrot.slane %v5022, 6
      %v5077 = vsel %vm984, %v5075, %v5076
      %v5078 = vrot.slane %v5023, 6
      %v5079 = vsel %vm984, %v5076, %v5078
      %v5080 = vrot.slane %v5024, 6
      %v5081 = vrot.slane %v5025, 6
      %v5082 = vsel %vm984, %v5080, %v5081
      %v5083 = vrot.slane %v5026, 6
      %v5084 = vsel %vm984, %v5081, %v5083
      %v5085 = vrot.slane %v5027, 6
      %v5086 = vrot.slane %v5028, 6
      %v5087 = vsel %vm984, %v5085, %v5086
      %v5088 = vrot.slane %v5029, 6
      %v5089 = vsel %vm984, %v5086, %v5088
      %v5090 = vrot.slane %v5030, 6
      %v5091 = vrot.slane %v5031, 6
      %v5092 = vsel %vm984, %v5090, %v5091
      %v5093 = vrot.slane %v5032, 6
      %v5094 = vsel %vm984, %v5091, %v5093
      %v5095 = vrot.slane %v5033, 6
      %v5096 = vrot.slane %v5034, 6
      %v5097 = vsel %vm984, %v5095, %v5096
      %v5098 = vrot.slane %v5035, 6
      %v5099 = vsel %vm984, %v5096, %v5098
      %v5116 = vadd.f32 %v4991, %v5062
      %v5117 = vadd.f32 %v4992, %v5064
      %v5118 = vadd.f32 %v4993, %v5067
      %v5119 = vadd.f32 %v4994, %v5069
      %v5120 = vadd.f32 %v4995, %v5072
      %v5121 = vadd.f32 %v4996, %v5074
      %v5122 = vadd.f32 %v4997, %v5077
      %v5123 = vadd.f32 %v4998, %v5079
      %v5124 = vadd.f32 %v4999, %v5082
      %v5125 = vadd.f32 %v5000, %v5084
      %v5126 = vadd.f32 %v5001, %v5087
      %v5127 = vadd.f32 %v5002, %v5089
      %v5128 = vadd.f32 %v5003, %v5092
      %v5129 = vadd.f32 %v5004, %v5094
      %v5130 = vadd.f32 %v5005, %v5097
      %v5131 = vadd.f32 %v5006, %v5099
      %s5132 = sadd.s32 %s253, 6
      %s5133 = smul.u32 %s5132, 24
      %s5134 = scalar_lea.vmem %s231, %s5133
      %v5135 = vld [vmem:[%s5134] sm:$0xff]
      %v5136 = vld [vmem:[%s5134 + $0x8] sm:$0xff]
      %v5137 = vld [vmem:[%s5134 + $0x10] sm:$0x3f]
      %v5138 = vld [vmem:[%s5134 + $0x18] sm:$0xff]
      %v5139 = vld [vmem:[%s5134 + $0x20] sm:$0xff]
      %v5140 = vld [vmem:[%s5134 + $0x28] sm:$0x3f]
      %v5141 = vld [vmem:[%s5134 + $0x30] sm:$0xff]
      %v5142 = vld [vmem:[%s5134 + $0x38] sm:$0xff]
      %v5143 = vld [vmem:[%s5134 + $0x40] sm:$0x3f]
      %v5144 = vld [vmem:[%s5134 + $0x48] sm:$0xff]
      %v5145 = vld [vmem:[%s5134 + $0x50] sm:$0xff]
      %v5146 = vld [vmem:[%s5134 + $0x58] sm:$0x3f]
      %v5147 = vld [vmem:[%s5134 + $0x60] sm:$0xff]
      %v5148 = vld [vmem:[%s5134 + $0x68] sm:$0xff]
      %v5149 = vld [vmem:[%s5134 + $0x70] sm:$0x3f]
      %v5150 = vld [vmem:[%s5134 + $0x78] sm:$0xff]
      %v5151 = vld [vmem:[%s5134 + $0x80] sm:$0xff]
      %v5152 = vld [vmem:[%s5134 + $0x88] sm:$0x3f]
      %v5153 = vld [vmem:[%s5134 + $0x90] sm:$0xff]
      %v5154 = vld [vmem:[%s5134 + $0x98] sm:$0xff]
      %v5155 = vld [vmem:[%s5134 + $0xa0] sm:$0x3f]
      %v5156 = vld [vmem:[%s5134 + $0xa8] sm:$0xff]
      %v5157 = vld [vmem:[%s5134 + $0xb0] sm:$0xff]
      %v5158 = vld [vmem:[%s5134 + $0xb8] sm:$0x3f]
      %s5159 = scalar_lea.vmem %s235, 48
      %v5160 = vld [vmem:[%s5159] sm:$0x1]
      %v5161 = vlaneseq
      %v5162 = vshrl.u32 %v5161, 7
      %v5163 = vsub.s32 0, %v5162
      %v5164 = vrot.slane %v5160, %v5163
      %v5165 = vmul.f32 %v5135, %v5164
      %v5166 = vmul.f32 %v5136, %v5164
      %v5167 = vmul.f32 %v5138, %v5164
      %v5168 = vmul.f32 %v5139, %v5164
      %v5169 = vmul.f32 %v5141, %v5164
      %v5170 = vmul.f32 %v5142, %v5164
      %v5171 = vmul.f32 %v5144, %v5164
      %v5172 = vmul.f32 %v5145, %v5164
      %v5173 = vmul.f32 %v5147, %v5164
      %v5174 = vmul.f32 %v5148, %v5164
      %v5175 = vmul.f32 %v5150, %v5164
      %v5176 = vmul.f32 %v5151, %v5164
      %v5177 = vmul.f32 %v5153, %v5164
      %v5178 = vmul.f32 %v5154, %v5164
      %v5179 = vmul.f32 %v5156, %v5164
      %v5180 = vmul.f32 %v5157, %v5164
      %v5181 = vadd.f32 %v5116, %v5165
      %v5182 = vadd.f32 %v5117, %v5166
      %v5183 = vadd.f32 %v5118, %v5167
      %v5184 = vadd.f32 %v5119, %v5168
      %v5185 = vadd.f32 %v5120, %v5169
      %v5186 = vadd.f32 %v5121, %v5170
      %v5187 = vadd.f32 %v5122, %v5171
      %v5188 = vadd.f32 %v5123, %v5172
      %v5189 = vadd.f32 %v5124, %v5173
      %v5190 = vadd.f32 %v5125, %v5174
      %v5191 = vadd.f32 %v5126, %v5175
      %v5192 = vadd.f32 %v5127, %v5176
      %v5193 = vadd.f32 %v5128, %v5177
      %v5194 = vadd.f32 %v5129, %v5178
      %v5195 = vadd.f32 %v5130, %v5179
      %v5196 = vadd.f32 %v5131, %v5180
      %v5197 = vld [vmem:[%s5159 + $0x1] sm:$0x1]
      %v5198 = vlaneseq
      %v5199 = vshrl.u32 %v5198, 7
      %v5200 = vsub.s32 0, %v5199
      %v5201 = vrot.slane %v5197, %v5200
      %v5202 = vmul.f32 %v5135, %v5201
      %v5203 = vmul.f32 %v5136, %v5201
      %v5204 = vmul.f32 %v5137, %v5201
      %v5205 = vmul.f32 %v5138, %v5201
      %v5206 = vmul.f32 %v5139, %v5201
      %v5207 = vmul.f32 %v5140, %v5201
      %v5208 = vmul.f32 %v5141, %v5201
      %v5209 = vmul.f32 %v5142, %v5201
      %v5210 = vmul.f32 %v5143, %v5201
      %v5211 = vmul.f32 %v5144, %v5201
      %v5212 = vmul.f32 %v5145, %v5201
      %v5213 = vmul.f32 %v5146, %v5201
      %v5214 = vmul.f32 %v5147, %v5201
      %v5215 = vmul.f32 %v5148, %v5201
      %v5216 = vmul.f32 %v5149, %v5201
      %v5217 = vmul.f32 %v5150, %v5201
      %v5218 = vmul.f32 %v5151, %v5201
      %v5219 = vmul.f32 %v5152, %v5201
      %v5220 = vmul.f32 %v5153, %v5201
      %v5221 = vmul.f32 %v5154, %v5201
      %v5222 = vmul.f32 %v5155, %v5201
      %v5223 = vmul.f32 %v5156, %v5201
      %v5224 = vmul.f32 %v5157, %v5201
      %v5225 = vmul.f32 %v5158, %v5201
      %v5250 = vrot.slane %v5202, 1
      %v5251 = vrot.slane %v5203, 1
      %v5252 = vsel %vm354, %v5250, %v5251
      %v5253 = vrot.slane %v5204, 1
      %v5254 = vsel %vm354, %v5251, %v5253
      %v5255 = vrot.slane %v5205, 1
      %v5256 = vrot.slane %v5206, 1
      %v5257 = vsel %vm354, %v5255, %v5256
      %v5258 = vrot.slane %v5207, 1
      %v5259 = vsel %vm354, %v5256, %v5258
      %v5260 = vrot.slane %v5208, 1
      %v5261 = vrot.slane %v5209, 1
      %v5262 = vsel %vm354, %v5260, %v5261
      %v5263 = vrot.slane %v5210, 1
      %v5264 = vsel %vm354, %v5261, %v5263
      %v5265 = vrot.slane %v5211, 1
      %v5266 = vrot.slane %v5212, 1
      %v5267 = vsel %vm354, %v5265, %v5266
      %v5268 = vrot.slane %v5213, 1
      %v5269 = vsel %vm354, %v5266, %v5268
      %v5270 = vrot.slane %v5214, 1
      %v5271 = vrot.slane %v5215, 1
      %v5272 = vsel %vm354, %v5270, %v5271
      %v5273 = vrot.slane %v5216, 1
      %v5274 = vsel %vm354, %v5271, %v5273
      %v5275 = vrot.slane %v5217, 1
      %v5276 = vrot.slane %v5218, 1
      %v5277 = vsel %vm354, %v5275, %v5276
      %v5278 = vrot.slane %v5219, 1
      %v5279 = vsel %vm354, %v5276, %v5278
      %v5280 = vrot.slane %v5220, 1
      %v5281 = vrot.slane %v5221, 1
      %v5282 = vsel %vm354, %v5280, %v5281
      %v5283 = vrot.slane %v5222, 1
      %v5284 = vsel %vm354, %v5281, %v5283
      %v5285 = vrot.slane %v5223, 1
      %v5286 = vrot.slane %v5224, 1
      %v5287 = vsel %vm354, %v5285, %v5286
      %v5288 = vrot.slane %v5225, 1
      %v5289 = vsel %vm354, %v5286, %v5288
      %v5306 = vadd.f32 %v5181, %v5252
      %v5307 = vadd.f32 %v5182, %v5254
      %v5308 = vadd.f32 %v5183, %v5257
      %v5309 = vadd.f32 %v5184, %v5259
      %v5310 = vadd.f32 %v5185, %v5262
      %v5311 = vadd.f32 %v5186, %v5264
      %v5312 = vadd.f32 %v5187, %v5267
      %v5313 = vadd.f32 %v5188, %v5269
      %v5314 = vadd.f32 %v5189, %v5272
      %v5315 = vadd.f32 %v5190, %v5274
      %v5316 = vadd.f32 %v5191, %v5277
      %v5317 = vadd.f32 %v5192, %v5279
      %v5318 = vadd.f32 %v5193, %v5282
      %v5319 = vadd.f32 %v5194, %v5284
      %v5320 = vadd.f32 %v5195, %v5287
      %v5321 = vadd.f32 %v5196, %v5289
      %v5322 = vld [vmem:[%s5159 + $0x2] sm:$0x1]
      %v5323 = vlaneseq
      %v5324 = vshrl.u32 %v5323, 7
      %v5325 = vsub.s32 0, %v5324
      %v5326 = vrot.slane %v5322, %v5325
      %v5327 = vmul.f32 %v5135, %v5326
      %v5328 = vmul.f32 %v5136, %v5326
      %v5329 = vmul.f32 %v5137, %v5326
      %v5330 = vmul.f32 %v5138, %v5326
      %v5331 = vmul.f32 %v5139, %v5326
      %v5332 = vmul.f32 %v5140, %v5326
      %v5333 = vmul.f32 %v5141, %v5326
      %v5334 = vmul.f32 %v5142, %v5326
      %v5335 = vmul.f32 %v5143, %v5326
      %v5336 = vmul.f32 %v5144, %v5326
      %v5337 = vmul.f32 %v5145, %v5326
      %v5338 = vmul.f32 %v5146, %v5326
      %v5339 = vmul.f32 %v5147, %v5326
      %v5340 = vmul.f32 %v5148, %v5326
      %v5341 = vmul.f32 %v5149, %v5326
      %v5342 = vmul.f32 %v5150, %v5326
      %v5343 = vmul.f32 %v5151, %v5326
      %v5344 = vmul.f32 %v5152, %v5326
      %v5345 = vmul.f32 %v5153, %v5326
      %v5346 = vmul.f32 %v5154, %v5326
      %v5347 = vmul.f32 %v5155, %v5326
      %v5348 = vmul.f32 %v5156, %v5326
      %v5349 = vmul.f32 %v5157, %v5326
      %v5350 = vmul.f32 %v5158, %v5326
      %v5375 = vrot.slane %v5327, 2
      %v5376 = vrot.slane %v5328, 2
      %v5377 = vsel %vm480, %v5375, %v5376
      %v5378 = vrot.slane %v5329, 2
      %v5379 = vsel %vm480, %v5376, %v5378
      %v5380 = vrot.slane %v5330, 2
      %v5381 = vrot.slane %v5331, 2
      %v5382 = vsel %vm480, %v5380, %v5381
      %v5383 = vrot.slane %v5332, 2
      %v5384 = vsel %vm480, %v5381, %v5383
      %v5385 = vrot.slane %v5333, 2
      %v5386 = vrot.slane %v5334, 2
      %v5387 = vsel %vm480, %v5385, %v5386
      %v5388 = vrot.slane %v5335, 2
      %v5389 = vsel %vm480, %v5386, %v5388
      %v5390 = vrot.slane %v5336, 2
      %v5391 = vrot.slane %v5337, 2
      %v5392 = vsel %vm480, %v5390, %v5391
      %v5393 = vrot.slane %v5338, 2
      %v5394 = vsel %vm480, %v5391, %v5393
      %v5395 = vrot.slane %v5339, 2
      %v5396 = vrot.slane %v5340, 2
      %v5397 = vsel %vm480, %v5395, %v5396
      %v5398 = vrot.slane %v5341, 2
      %v5399 = vsel %vm480, %v5396, %v5398
      %v5400 = vrot.slane %v5342, 2
      %v5401 = vrot.slane %v5343, 2
      %v5402 = vsel %vm480, %v5400, %v5401
      %v5403 = vrot.slane %v5344, 2
      %v5404 = vsel %vm480, %v5401, %v5403
      %v5405 = vrot.slane %v5345, 2
      %v5406 = vrot.slane %v5346, 2
      %v5407 = vsel %vm480, %v5405, %v5406
      %v5408 = vrot.slane %v5347, 2
      %v5409 = vsel %vm480, %v5406, %v5408
      %v5410 = vrot.slane %v5348, 2
      %v5411 = vrot.slane %v5349, 2
      %v5412 = vsel %vm480, %v5410, %v5411
      %v5413 = vrot.slane %v5350, 2
      %v5414 = vsel %vm480, %v5411, %v5413
      %v5431 = vadd.f32 %v5306, %v5377
      %v5432 = vadd.f32 %v5307, %v5379
      %v5433 = vadd.f32 %v5308, %v5382
      %v5434 = vadd.f32 %v5309, %v5384
      %v5435 = vadd.f32 %v5310, %v5387
      %v5436 = vadd.f32 %v5311, %v5389
      %v5437 = vadd.f32 %v5312, %v5392
      %v5438 = vadd.f32 %v5313, %v5394
      %v5439 = vadd.f32 %v5314, %v5397
      %v5440 = vadd.f32 %v5315, %v5399
      %v5441 = vadd.f32 %v5316, %v5402
      %v5442 = vadd.f32 %v5317, %v5404
      %v5443 = vadd.f32 %v5318, %v5407
      %v5444 = vadd.f32 %v5319, %v5409
      %v5445 = vadd.f32 %v5320, %v5412
      %v5446 = vadd.f32 %v5321, %v5414
      %v5447 = vld [vmem:[%s5159 + $0x3] sm:$0x1]
      %v5448 = vlaneseq
      %v5449 = vshrl.u32 %v5448, 7
      %v5450 = vsub.s32 0, %v5449
      %v5451 = vrot.slane %v5447, %v5450
      %v5452 = vmul.f32 %v5135, %v5451
      %v5453 = vmul.f32 %v5136, %v5451
      %v5454 = vmul.f32 %v5137, %v5451
      %v5455 = vmul.f32 %v5138, %v5451
      %v5456 = vmul.f32 %v5139, %v5451
      %v5457 = vmul.f32 %v5140, %v5451
      %v5458 = vmul.f32 %v5141, %v5451
      %v5459 = vmul.f32 %v5142, %v5451
      %v5460 = vmul.f32 %v5143, %v5451
      %v5461 = vmul.f32 %v5144, %v5451
      %v5462 = vmul.f32 %v5145, %v5451
      %v5463 = vmul.f32 %v5146, %v5451
      %v5464 = vmul.f32 %v5147, %v5451
      %v5465 = vmul.f32 %v5148, %v5451
      %v5466 = vmul.f32 %v5149, %v5451
      %v5467 = vmul.f32 %v5150, %v5451
      %v5468 = vmul.f32 %v5151, %v5451
      %v5469 = vmul.f32 %v5152, %v5451
      %v5470 = vmul.f32 %v5153, %v5451
      %v5471 = vmul.f32 %v5154, %v5451
      %v5472 = vmul.f32 %v5155, %v5451
      %v5473 = vmul.f32 %v5156, %v5451
      %v5474 = vmul.f32 %v5157, %v5451
      %v5475 = vmul.f32 %v5158, %v5451
      %v5500 = vrot.slane %v5452, 3
      %v5501 = vrot.slane %v5453, 3
      %v5502 = vsel %vm606, %v5500, %v5501
      %v5503 = vrot.slane %v5454, 3
      %v5504 = vsel %vm606, %v5501, %v5503
      %v5505 = vrot.slane %v5455, 3
      %v5506 = vrot.slane %v5456, 3
      %v5507 = vsel %vm606, %v5505, %v5506
      %v5508 = vrot.slane %v5457, 3
      %v5509 = vsel %vm606, %v5506, %v5508
      %v5510 = vrot.slane %v5458, 3
      %v5511 = vrot.slane %v5459, 3
      %v5512 = vsel %vm606, %v5510, %v5511
      %v5513 = vrot.slane %v5460, 3
      %v5514 = vsel %vm606, %v5511, %v5513
      %v5515 = vrot.slane %v5461, 3
      %v5516 = vrot.slane %v5462, 3
      %v5517 = vsel %vm606, %v5515, %v5516
      %v5518 = vrot.slane %v5463, 3
      %v5519 = vsel %vm606, %v5516, %v5518
      %v5520 = vrot.slane %v5464, 3
      %v5521 = vrot.slane %v5465, 3
      %v5522 = vsel %vm606, %v5520, %v5521
      %v5523 = vrot.slane %v5466, 3
      %v5524 = vsel %vm606, %v5521, %v5523
      %v5525 = vrot.slane %v5467, 3
      %v5526 = vrot.slane %v5468, 3
      %v5527 = vsel %vm606, %v5525, %v5526
      %v5528 = vrot.slane %v5469, 3
      %v5529 = vsel %vm606, %v5526, %v5528
      %v5530 = vrot.slane %v5470, 3
      %v5531 = vrot.slane %v5471, 3
      %v5532 = vsel %vm606, %v5530, %v5531
      %v5533 = vrot.slane %v5472, 3
      %v5534 = vsel %vm606, %v5531, %v5533
      %v5535 = vrot.slane %v5473, 3
      %v5536 = vrot.slane %v5474, 3
      %v5537 = vsel %vm606, %v5535, %v5536
      %v5538 = vrot.slane %v5475, 3
      %v5539 = vsel %vm606, %v5536, %v5538
      %v5556 = vadd.f32 %v5431, %v5502
      %v5557 = vadd.f32 %v5432, %v5504
      %v5558 = vadd.f32 %v5433, %v5507
      %v5559 = vadd.f32 %v5434, %v5509
      %v5560 = vadd.f32 %v5435, %v5512
      %v5561 = vadd.f32 %v5436, %v5514
      %v5562 = vadd.f32 %v5437, %v5517
      %v5563 = vadd.f32 %v5438, %v5519
      %v5564 = vadd.f32 %v5439, %v5522
      %v5565 = vadd.f32 %v5440, %v5524
      %v5566 = vadd.f32 %v5441, %v5527
      %v5567 = vadd.f32 %v5442, %v5529
      %v5568 = vadd.f32 %v5443, %v5532
      %v5569 = vadd.f32 %v5444, %v5534
      %v5570 = vadd.f32 %v5445, %v5537
      %v5571 = vadd.f32 %v5446, %v5539
      %v5572 = vld [vmem:[%s5159 + $0x4] sm:$0x1]
      %v5573 = vlaneseq
      %v5574 = vshrl.u32 %v5573, 7
      %v5575 = vsub.s32 0, %v5574
      %v5576 = vrot.slane %v5572, %v5575
      %v5577 = vmul.f32 %v5135, %v5576
      %v5578 = vmul.f32 %v5136, %v5576
      %v5579 = vmul.f32 %v5137, %v5576
      %v5580 = vmul.f32 %v5138, %v5576
      %v5581 = vmul.f32 %v5139, %v5576
      %v5582 = vmul.f32 %v5140, %v5576
      %v5583 = vmul.f32 %v5141, %v5576
      %v5584 = vmul.f32 %v5142, %v5576
      %v5585 = vmul.f32 %v5143, %v5576
      %v5586 = vmul.f32 %v5144, %v5576
      %v5587 = vmul.f32 %v5145, %v5576
      %v5588 = vmul.f32 %v5146, %v5576
      %v5589 = vmul.f32 %v5147, %v5576
      %v5590 = vmul.f32 %v5148, %v5576
      %v5591 = vmul.f32 %v5149, %v5576
      %v5592 = vmul.f32 %v5150, %v5576
      %v5593 = vmul.f32 %v5151, %v5576
      %v5594 = vmul.f32 %v5152, %v5576
      %v5595 = vmul.f32 %v5153, %v5576
      %v5596 = vmul.f32 %v5154, %v5576
      %v5597 = vmul.f32 %v5155, %v5576
      %v5598 = vmul.f32 %v5156, %v5576
      %v5599 = vmul.f32 %v5157, %v5576
      %v5600 = vmul.f32 %v5158, %v5576
      %v5625 = vrot.slane %v5577, 4
      %v5626 = vrot.slane %v5578, 4
      %v5627 = vsel %vm732, %v5625, %v5626
      %v5628 = vrot.slane %v5579, 4
      %v5629 = vsel %vm732, %v5626, %v5628
      %v5630 = vrot.slane %v5580, 4
      %v5631 = vrot.slane %v5581, 4
      %v5632 = vsel %vm732, %v5630, %v5631
      %v5633 = vrot.slane %v5582, 4
      %v5634 = vsel %vm732, %v5631, %v5633
      %v5635 = vrot.slane %v5583, 4
      %v5636 = vrot.slane %v5584, 4
      %v5637 = vsel %vm732, %v5635, %v5636
      %v5638 = vrot.slane %v5585, 4
      %v5639 = vsel %vm732, %v5636, %v5638
      %v5640 = vrot.slane %v5586, 4
      %v5641 = vrot.slane %v5587, 4
      %v5642 = vsel %vm732, %v5640, %v5641
      %v5643 = vrot.slane %v5588, 4
      %v5644 = vsel %vm732, %v5641, %v5643
      %v5645 = vrot.slane %v5589, 4
      %v5646 = vrot.slane %v5590, 4
      %v5647 = vsel %vm732, %v5645, %v5646
      %v5648 = vrot.slane %v5591, 4
      %v5649 = vsel %vm732, %v5646, %v5648
      %v5650 = vrot.slane %v5592, 4
      %v5651 = vrot.slane %v5593, 4
      %v5652 = vsel %vm732, %v5650, %v5651
      %v5653 = vrot.slane %v5594, 4
      %v5654 = vsel %vm732, %v5651, %v5653
      %v5655 = vrot.slane %v5595, 4
      %v5656 = vrot.slane %v5596, 4
      %v5657 = vsel %vm732, %v5655, %v5656
      %v5658 = vrot.slane %v5597, 4
      %v5659 = vsel %vm732, %v5656, %v5658
      %v5660 = vrot.slane %v5598, 4
      %v5661 = vrot.slane %v5599, 4
      %v5662 = vsel %vm732, %v5660, %v5661
      %v5663 = vrot.slane %v5600, 4
      %v5664 = vsel %vm732, %v5661, %v5663
      %v5681 = vadd.f32 %v5556, %v5627
      %v5682 = vadd.f32 %v5557, %v5629
      %v5683 = vadd.f32 %v5558, %v5632
      %v5684 = vadd.f32 %v5559, %v5634
      %v5685 = vadd.f32 %v5560, %v5637
      %v5686 = vadd.f32 %v5561, %v5639
      %v5687 = vadd.f32 %v5562, %v5642
      %v5688 = vadd.f32 %v5563, %v5644
      %v5689 = vadd.f32 %v5564, %v5647
      %v5690 = vadd.f32 %v5565, %v5649
      %v5691 = vadd.f32 %v5566, %v5652
      %v5692 = vadd.f32 %v5567, %v5654
      %v5693 = vadd.f32 %v5568, %v5657
      %v5694 = vadd.f32 %v5569, %v5659
      %v5695 = vadd.f32 %v5570, %v5662
      %v5696 = vadd.f32 %v5571, %v5664
      %v5697 = vld [vmem:[%s5159 + $0x5] sm:$0x1]
      %v5698 = vlaneseq
      %v5699 = vshrl.u32 %v5698, 7
      %v5700 = vsub.s32 0, %v5699
      %v5701 = vrot.slane %v5697, %v5700
      %v5702 = vmul.f32 %v5135, %v5701
      %v5703 = vmul.f32 %v5136, %v5701
      %v5704 = vmul.f32 %v5137, %v5701
      %v5705 = vmul.f32 %v5138, %v5701
      %v5706 = vmul.f32 %v5139, %v5701
      %v5707 = vmul.f32 %v5140, %v5701
      %v5708 = vmul.f32 %v5141, %v5701
      %v5709 = vmul.f32 %v5142, %v5701
      %v5710 = vmul.f32 %v5143, %v5701
      %v5711 = vmul.f32 %v5144, %v5701
      %v5712 = vmul.f32 %v5145, %v5701
      %v5713 = vmul.f32 %v5146, %v5701
      %v5714 = vmul.f32 %v5147, %v5701
      %v5715 = vmul.f32 %v5148, %v5701
      %v5716 = vmul.f32 %v5149, %v5701
      %v5717 = vmul.f32 %v5150, %v5701
      %v5718 = vmul.f32 %v5151, %v5701
      %v5719 = vmul.f32 %v5152, %v5701
      %v5720 = vmul.f32 %v5153, %v5701
      %v5721 = vmul.f32 %v5154, %v5701
      %v5722 = vmul.f32 %v5155, %v5701
      %v5723 = vmul.f32 %v5156, %v5701
      %v5724 = vmul.f32 %v5157, %v5701
      %v5725 = vmul.f32 %v5158, %v5701
      %v5750 = vrot.slane %v5702, 5
      %v5751 = vrot.slane %v5703, 5
      %v5752 = vsel %vm858, %v5750, %v5751
      %v5753 = vrot.slane %v5704, 5
      %v5754 = vsel %vm858, %v5751, %v5753
      %v5755 = vrot.slane %v5705, 5
      %v5756 = vrot.slane %v5706, 5
      %v5757 = vsel %vm858, %v5755, %v5756
      %v5758 = vrot.slane %v5707, 5
      %v5759 = vsel %vm858, %v5756, %v5758
      %v5760 = vrot.slane %v5708, 5
      %v5761 = vrot.slane %v5709, 5
      %v5762 = vsel %vm858, %v5760, %v5761
      %v5763 = vrot.slane %v5710, 5
      %v5764 = vsel %vm858, %v5761, %v5763
      %v5765 = vrot.slane %v5711, 5
      %v5766 = vrot.slane %v5712, 5
      %v5767 = vsel %vm858, %v5765, %v5766
      %v5768 = vrot.slane %v5713, 5
      %v5769 = vsel %vm858, %v5766, %v5768
      %v5770 = vrot.slane %v5714, 5
      %v5771 = vrot.slane %v5715, 5
      %v5772 = vsel %vm858, %v5770, %v5771
      %v5773 = vrot.slane %v5716, 5
      %v5774 = vsel %vm858, %v5771, %v5773
      %v5775 = vrot.slane %v5717, 5
      %v5776 = vrot.slane %v5718, 5
      %v5777 = vsel %vm858, %v5775, %v5776
      %v5778 = vrot.slane %v5719, 5
      %v5779 = vsel %vm858, %v5776, %v5778
      %v5780 = vrot.slane %v5720, 5
      %v5781 = vrot.slane %v5721, 5
      %v5782 = vsel %vm858, %v5780, %v5781
      %v5783 = vrot.slane %v5722, 5
      %v5784 = vsel %vm858, %v5781, %v5783
      %v5785 = vrot.slane %v5723, 5
      %v5786 = vrot.slane %v5724, 5
      %v5787 = vsel %vm858, %v5785, %v5786
      %v5788 = vrot.slane %v5725, 5
      %v5789 = vsel %vm858, %v5786, %v5788
      %v5806 = vadd.f32 %v5681, %v5752
      %v5807 = vadd.f32 %v5682, %v5754
      %v5808 = vadd.f32 %v5683, %v5757
      %v5809 = vadd.f32 %v5684, %v5759
      %v5810 = vadd.f32 %v5685, %v5762
      %v5811 = vadd.f32 %v5686, %v5764
      %v5812 = vadd.f32 %v5687, %v5767
      %v5813 = vadd.f32 %v5688, %v5769
      %v5814 = vadd.f32 %v5689, %v5772
      %v5815 = vadd.f32 %v5690, %v5774
      %v5816 = vadd.f32 %v5691, %v5777
      %v5817 = vadd.f32 %v5692, %v5779
      %v5818 = vadd.f32 %v5693, %v5782
      %v5819 = vadd.f32 %v5694, %v5784
      %v5820 = vadd.f32 %v5695, %v5787
      %v5821 = vadd.f32 %v5696, %v5789
      %v5822 = vld [vmem:[%s5159 + $0x6] sm:$0x1]
      %v5823 = vlaneseq
      %v5824 = vshrl.u32 %v5823, 7
      %v5825 = vsub.s32 0, %v5824
      %v5826 = vrot.slane %v5822, %v5825
      %v5827 = vmul.f32 %v5135, %v5826
      %v5828 = vmul.f32 %v5136, %v5826
      %v5829 = vmul.f32 %v5137, %v5826
      %v5830 = vmul.f32 %v5138, %v5826
      %v5831 = vmul.f32 %v5139, %v5826
      %v5832 = vmul.f32 %v5140, %v5826
      %v5833 = vmul.f32 %v5141, %v5826
      %v5834 = vmul.f32 %v5142, %v5826
      %v5835 = vmul.f32 %v5143, %v5826
      %v5836 = vmul.f32 %v5144, %v5826
      %v5837 = vmul.f32 %v5145, %v5826
      %v5838 = vmul.f32 %v5146, %v5826
      %v5839 = vmul.f32 %v5147, %v5826
      %v5840 = vmul.f32 %v5148, %v5826
      %v5841 = vmul.f32 %v5149, %v5826
      %v5842 = vmul.f32 %v5150, %v5826
      %v5843 = vmul.f32 %v5151, %v5826
      %v5844 = vmul.f32 %v5152, %v5826
      %v5845 = vmul.f32 %v5153, %v5826
      %v5846 = vmul.f32 %v5154, %v5826
      %v5847 = vmul.f32 %v5155, %v5826
      %v5848 = vmul.f32 %v5156, %v5826
      %v5849 = vmul.f32 %v5157, %v5826
      %v5850 = vmul.f32 %v5158, %v5826
      %v5875 = vrot.slane %v5827, 6
      %v5876 = vrot.slane %v5828, 6
      %v5877 = vsel %vm984, %v5875, %v5876
      %v5878 = vrot.slane %v5829, 6
      %v5879 = vsel %vm984, %v5876, %v5878
      %v5880 = vrot.slane %v5830, 6
      %v5881 = vrot.slane %v5831, 6
      %v5882 = vsel %vm984, %v5880, %v5881
      %v5883 = vrot.slane %v5832, 6
      %v5884 = vsel %vm984, %v5881, %v5883
      %v5885 = vrot.slane %v5833, 6
      %v5886 = vrot.slane %v5834, 6
      %v5887 = vsel %vm984, %v5885, %v5886
      %v5888 = vrot.slane %v5835, 6
      %v5889 = vsel %vm984, %v5886, %v5888
      %v5890 = vrot.slane %v5836, 6
      %v5891 = vrot.slane %v5837, 6
      %v5892 = vsel %vm984, %v5890, %v5891
      %v5893 = vrot.slane %v5838, 6
      %v5894 = vsel %vm984, %v5891, %v5893
      %v5895 = vrot.slane %v5839, 6
      %v5896 = vrot.slane %v5840, 6
      %v5897 = vsel %vm984, %v5895, %v5896
      %v5898 = vrot.slane %v5841, 6
      %v5899 = vsel %vm984, %v5896, %v5898
      %v5900 = vrot.slane %v5842, 6
      %v5901 = vrot.slane %v5843, 6
      %v5902 = vsel %vm984, %v5900, %v5901
      %v5903 = vrot.slane %v5844, 6
      %v5904 = vsel %vm984, %v5901, %v5903
      %v5905 = vrot.slane %v5845, 6
      %v5906 = vrot.slane %v5846, 6
      %v5907 = vsel %vm984, %v5905, %v5906
      %v5908 = vrot.slane %v5847, 6
      %v5909 = vsel %vm984, %v5906, %v5908
      %v5910 = vrot.slane %v5848, 6
      %v5911 = vrot.slane %v5849, 6
      %v5912 = vsel %vm984, %v5910, %v5911
      %v5913 = vrot.slane %v5850, 6
      %v5914 = vsel %vm984, %v5911, %v5913
      %v5931 = vadd.f32 %v5806, %v5877
      %v5932 = vadd.f32 %v5807, %v5879
      %v5933 = vadd.f32 %v5808, %v5882
      %v5934 = vadd.f32 %v5809, %v5884
      %v5935 = vadd.f32 %v5810, %v5887
      %v5936 = vadd.f32 %v5811, %v5889
      %v5937 = vadd.f32 %v5812, %v5892
      %v5938 = vadd.f32 %v5813, %v5894
      %v5939 = vadd.f32 %v5814, %v5897
      %v5940 = vadd.f32 %v5815, %v5899
      %v5941 = vadd.f32 %v5816, %v5902
      %v5942 = vadd.f32 %v5817, %v5904
      %v5943 = vadd.f32 %v5818, %v5907
      %v5944 = vadd.f32 %v5819, %v5909
      %v5945 = vadd.f32 %v5820, %v5912
      %v5946 = vadd.f32 %v5821, %v5914
      %v5947 = vld [vmem:[%s238] sm:$0x1]
      %v5949 = vlaneseq
      %v5950 = vshrl.u32 %v5949, 7
      %v5951 = vsub.s32 0, %v5950
      %v5952 = vrot.slane %v5947, %v5951
      %v5954 = vadd.f32 %v5931, %v5952
      %v5955 = vadd.f32 %v5932, %v5952
      %v5956 = vadd.f32 %v5933, %v5952
      %v5957 = vadd.f32 %v5934, %v5952
      %v5958 = vadd.f32 %v5935, %v5952
      %v5959 = vadd.f32 %v5936, %v5952
      %v5960 = vadd.f32 %v5937, %v5952
      %v5961 = vadd.f32 %v5938, %v5952
      %v5962 = vadd.f32 %v5939, %v5952
      %v5963 = vadd.f32 %v5940, %v5952
      %v5964 = vadd.f32 %v5941, %v5952
      %v5965 = vadd.f32 %v5942, %v5952
      %v5966 = vadd.f32 %v5943, %v5952
      %v5967 = vadd.f32 %v5944, %v5952
      %v5968 = vadd.f32 %v5945, %v5952
      %v5969 = vadd.f32 %v5946, %v5952
      %v5970 = vsub.f32 0.0, %v5954
      %v5971 = vsub.f32 0.0, %v5955
      %v5972 = vsub.f32 0.0, %v5956
      %v5973 = vsub.f32 0.0, %v5957
      %v5974 = vsub.f32 0.0, %v5958
      %v5975 = vsub.f32 0.0, %v5959
      %v5976 = vsub.f32 0.0, %v5960
      %v5977 = vsub.f32 0.0, %v5961
      %v5978 = vsub.f32 0.0, %v5962
      %v5979 = vsub.f32 0.0, %v5963
      %v5980 = vsub.f32 0.0, %v5964
      %v5981 = vsub.f32 0.0, %v5965
      %v5982 = vsub.f32 0.0, %v5966
      %v5983 = vsub.f32 0.0, %v5967
      %v5984 = vsub.f32 0.0, %v5968
      %v5985 = vsub.f32 0.0, %v5969
      %v5986 = vmul.f32 %v5970, 1.442695
      %v5987 = vpow.pop %v5986
      %v5988 = vmul.f32 %v5971, 1.442695
      %v5989 = vpow.pop %v5988
      %v5990 = vmul.f32 %v5972, 1.442695
      %v5991 = vpow.pop %v5990
      %v5992 = vmul.f32 %v5973, 1.442695
      %v5993 = vpow.pop %v5992
      %v5994 = vmul.f32 %v5974, 1.442695
      %v5995 = vpow.pop %v5994
      %v5996 = vmul.f32 %v5975, 1.442695
      %v5997 = vpow.pop %v5996
      %v5998 = vmul.f32 %v5976, 1.442695
      %v5999 = vpow.pop %v5998
      %v6000 = vmul.f32 %v5977, 1.442695
      %v6001 = vpow.pop %v6000
      %v6002 = vmul.f32 %v5978, 1.442695
      %v6003 = vpow.pop %v6002
      %v6004 = vmul.f32 %v5979, 1.442695
      %v6005 = vpow.pop %v6004
      %v6006 = vmul.f32 %v5980, 1.442695
      %v6007 = vpow.pop %v6006
      %v6008 = vmul.f32 %v5981, 1.442695
      %v6009 = vpow.pop %v6008
      %v6010 = vmul.f32 %v5982, 1.442695
      %v6011 = vpow.pop %v6010
      %v6012 = vmul.f32 %v5983, 1.442695
      %v6013 = vpow.pop %v6012
      %v6014 = vmul.f32 %v5984, 1.442695
      %v6015 = vpow.pop %v6014
      %v6016 = vmul.f32 %v5985, 1.442695
      %v6017 = vpow.pop %v6016
      %v6018 = vadd.f32 %v5987, 1.0
      %v6019 = vadd.f32 %v5989, 1.0
      %v6020 = vadd.f32 %v5991, 1.0
      %v6021 = vadd.f32 %v5993, 1.0
      %v6022 = vadd.f32 %v5995, 1.0
      %v6023 = vadd.f32 %v5997, 1.0
      %v6024 = vadd.f32 %v5999, 1.0
      %v6025 = vadd.f32 %v6001, 1.0
      %v6026 = vadd.f32 %v6003, 1.0
      %v6027 = vadd.f32 %v6005, 1.0
      %v6028 = vadd.f32 %v6007, 1.0
      %v6029 = vadd.f32 %v6009, 1.0
      %v6030 = vadd.f32 %v6011, 1.0
      %v6031 = vadd.f32 %v6013, 1.0
      %v6032 = vadd.f32 %v6015, 1.0
      %v6033 = vadd.f32 %v6017, 1.0
      %v6034 = vrcp.pop %v6018
      %v6035 = vmul.f32 1.0, %v6034
      %v6036 = vrcp.pop %v6019
      %v6037 = vmul.f32 1.0, %v6036
      %v6038 = vrcp.pop %v6020
      %v6039 = vmul.f32 1.0, %v6038
      %v6040 = vrcp.pop %v6021
      %v6041 = vmul.f32 1.0, %v6040
      %v6042 = vrcp.pop %v6022
      %v6043 = vmul.f32 1.0, %v6042
      %v6044 = vrcp.pop %v6023
      %v6045 = vmul.f32 1.0, %v6044
      %v6046 = vrcp.pop %v6024
      %v6047 = vmul.f32 1.0, %v6046
      %v6048 = vrcp.pop %v6025
      %v6049 = vmul.f32 1.0, %v6048
      %v6050 = vrcp.pop %v6026
      %v6051 = vmul.f32 1.0, %v6050
      %v6052 = vrcp.pop %v6027
      %v6053 = vmul.f32 1.0, %v6052
      %v6054 = vrcp.pop %v6028
      %v6055 = vmul.f32 1.0, %v6054
      %v6056 = vrcp.pop %v6029
      %v6057 = vmul.f32 1.0, %v6056
      %v6058 = vrcp.pop %v6030
      %v6059 = vmul.f32 1.0, %v6058
      %v6060 = vrcp.pop %v6031
      %v6061 = vmul.f32 1.0, %v6060
      %v6062 = vrcp.pop %v6032
      %v6063 = vmul.f32 1.0, %v6062
      %v6064 = vrcp.pop %v6033
      %v6065 = vmul.f32 1.0, %v6064
      %v6066 = vmul.f32 %v5954, %v6035
      %v6067 = vmul.f32 %v5955, %v6037
      %v6068 = vmul.f32 %v5956, %v6039
      %v6069 = vmul.f32 %v5957, %v6041
      %v6070 = vmul.f32 %v5958, %v6043
      %v6071 = vmul.f32 %v5959, %v6045
      %v6072 = vmul.f32 %v5960, %v6047
      %v6073 = vmul.f32 %v5961, %v6049
      %v6074 = vmul.f32 %v5962, %v6051
      %v6075 = vmul.f32 %v5963, %v6053
      %v6076 = vmul.f32 %v5964, %v6055
      %v6077 = vmul.f32 %v5965, %v6057
      %v6078 = vmul.f32 %v5966, %v6059
      %v6079 = vmul.f32 %v5967, %v6061
      %v6080 = vmul.f32 %v5968, %v6063
      %v6081 = vmul.f32 %v5969, %v6065
      %6082 = vst [vmem:[%s251] sm:$0xff] %v6066
      %6083 = vst [vmem:[%s251 + $0x8] sm:$0xff] %v6067
      %6084 = vst [vmem:[%s251 + $0x10] sm:$0xff] %v6068
      %6085 = vst [vmem:[%s251 + $0x18] sm:$0xff] %v6069
      %6086 = vst [vmem:[%s251 + $0x20] sm:$0xff] %v6070
      %6087 = vst [vmem:[%s251 + $0x28] sm:$0xff] %v6071
      %6088 = vst [vmem:[%s251 + $0x30] sm:$0xff] %v6072
      %6089 = vst [vmem:[%s251 + $0x38] sm:$0xff] %v6073
      %6090 = vst [vmem:[%s251 + $0x40] sm:$0xff] %v6074
      %6091 = vst [vmem:[%s251 + $0x48] sm:$0xff] %v6075
      %6092 = vst [vmem:[%s251 + $0x50] sm:$0xff] %v6076
      %6093 = vst [vmem:[%s251 + $0x58] sm:$0xff] %v6077
      %6094 = vst [vmem:[%s251 + $0x60] sm:$0xff] %v6078
      %6095 = vst [vmem:[%s251 + $0x68] sm:$0xff] %v6079
      %6096 = vst [vmem:[%s251 + $0x70] sm:$0xff] %v6080
      %6097 = vst [vmem:[%s251 + $0x78] sm:$0xff] %v6081
      %s6098 = smul.u32 8, %s21
      %p6099 = scmp.lt.s32.totalorder %s19, 1
      %s6100 = scalar_select %p6099, %s19, 1
      %p6101 = scmp.lt.s32.totalorder %s6098, 15
      %s6102 = scalar_select %p6101, %s6098, 15
      %p6103 = scmp.lt.s32.totalorder %s20, 0
      %s6104 = scalar_select %p6103, %s20, 0
      %s6105 = smul.addr %s6102, 2
      %s6106 = sadd.s32 %s6104, %s6105
      %s6107 = smul.addr %s6100, 32
      %s6108 = sadd.s32 %s6106, %s6107
      %s6109 = smul.addr %s6108, 8
      %s6110 = scalar_lea.vmem %s3, %s6109
      // Predicated region
      $region33: #{repvggdw_forward.1} parent=31 // pred_check
        %p6111 = pneg %p135
      $region34: #{repvggdw_forward.1} parent=31 // pred_check_branch
        %6113 = sbr.rel (%p6111) target = $region36
      $region35: #{repvggdw_forward.1} parent=31 // pred_region
        %s6114 = smul.u32 8, %s21
      $region36: #{repvggdw_forward.1} parent=31 // pred_fallthru
        _
    $region32: #{repvggdw_forward.1} parent=5 // pred_fallthru
      _
    %p6115 = scmp.le.s32.totalorder 2, %s9
    // Predicated region
    $region37: #{repvggdw_forward.1} parent=5 // pred_check
      %p6116 = pneg %p6115
    $region38: #{repvggdw_forward.1} parent=5 // pred_check_branch
      %6118 = sbr.rel (%p6116) target = $region40
    $region39: #{repvggdw_forward.1} parent=5 // pred_region
      %s6119 = ssub.s32 %s9, 2
      // Predicated region
      $region41: #{repvggdw_forward.1} parent=39 // pred_check
        %p6120 = pneg %p141
      $region42: #{repvggdw_forward.1} parent=39 // pred_check_branch
        %6122 = sbr.rel (%p6120) target = $region44
      $region43: #{repvggdw_forward.1} parent=39 // pred_region
        %s6123 = smul.u32 8, %s24
        %p6124 = scmp.lt.s32.totalorder %s22, 1
        %s6125 = scalar_select %p6124, %s22, 1
        %p6126 = scmp.lt.s32.totalorder %s6123, 15
        %s6127 = scalar_select %p6126, %s6123, 15
        %p6128 = scmp.lt.s32.totalorder %s23, 0
        %s6129 = scalar_select %p6128, %s23, 0
        %s6130 = smul.addr %s6127, 2
        %s6131 = sadd.s32 %s6129, %s6130
        %s6132 = smul.addr %s6125, 32
        %s6133 = sadd.s32 %s6131, %s6132
        %s6134 = smul.addr %s6133, 8
        %s6135 = scalar_lea.vmem %s3, %s6134
      $region44: #{repvggdw_forward.1} parent=39 // pred_fallthru
        _
    $region40: #{repvggdw_forward.1} parent=5 // pred_fallthru
      _
  $region6: #{repvggdw_forward.1} parent=0 // loop_footer
    %s13 = sadd.s32 1, %s9
  $region7: #{repvggdw_forward.1} parent=0 // loop_footer_branch
    %8 = sbr.rel target = $region3
  $region8: #{repvggdw_forward.1} parent=0 // loop_exit
    _

</llo_original>
